<compile_context>
chip_gen: v6e
topology: v6e:2x2x1
jax: 0.10.0
libtpu: 0.0.40
codegen_flags: <defaults>
</compile_context>

<pallas_src>
import functools
import math

import jax
import jax.numpy as jnp
from jax.experimental import pallas as pl
from jax.experimental.pallas import tpu as pltpu

# ESM alphabet special tokens
CLS_IDX, PAD_IDX, EOS_IDX, MASK_IDX = 0, 1, 2, 32
VOCAB = 33
NUM_CHAIN_IDS = 4
LN_EPS = 1e-5


# ----------------------------- kernel helpers -------------------------------

def _layer_norm(v, w, b):
    mu = jnp.mean(v, axis=-1, keepdims=True)
    var = jnp.mean(jnp.square(v - mu), axis=-1, keepdims=True)
    return (v - mu) * jax.lax.rsqrt(var + LN_EPS) * w + b


def _swap_halves(t):
    # Full-width rotate_half (sign folded into the signed-sin table).  When the
    # half width is lane aligned this is a single XLU roll; otherwise (toy
    # widths) fall back to the lowering-safe concat.
    d = t.shape[-1]
    h = d // 2
    if h % 128 == 0:
        return pltpu.roll(t, shift=h, axis=-1)
    return jnp.concatenate([t[:, h:], t[:, :h]], axis=-1)


def _pick_vmem_limit():
    # Raise the scoped-VMEM limit (defaults: 16 MiB v5e / 32 MiB v6e,v7x) so the
    # double-buffered per-layer weight stream + activation carry can allocate;
    # stay well under physical VMEM (128 MiB v5e/v6e, 64 MiB v7x).
    try:
        cap = int(pltpu.get_tpu_info().vmem_capacity_bytes)
    except Exception:
        cap = 64 * 1024 * 1024
    if cap <= 0:
        cap = 64 * 1024 * 1024
    return min((cap * 3) // 4, 112 * 1024 * 1024)


# -------------------- fused all-layers transformer + pooling kernel ----------

def _fused_stack_kernel(x_ref, bias_ref, mask_ref, cos_ref, sin_ref,
                        lnfw_ref, lnfb_ref,
                        ln1w_ref, ln1b_ref, wqkv_ref, bqkv_ref, wo_ref, bo_ref,
                        ln2w_ref, ln2b_ref, w1_ref, b1_ref, w2_ref, b2_ref,
                        o_ref, carry_ref, attn_ref, *, num_heads):
    layer = pl.program_id(1)
    n_layers = pl.num_programs(1)

    # load this batch block into the resident VMEM carry at layer 0
    @pl.when(layer == 0)
    def _():
        carry_ref[...] = x_ref[...]

    Bblk, L, D = carry_ref.shape
    H = num_heads
    hd = D // H
    hd2 = hd // 2
    half = D // 2

    # hoisted, layer-resident loads (shared across the batch block)
    cos = cos_ref[...]                       # (L, D) rotary cos, permuted layout
    sin = sin_ref[...]                       # (L, D) signed sin, permuted layout
    ln1w, ln1b = ln1w_ref[0], ln1b_ref[0]
    ln2w, ln2b = ln2w_ref[0], ln2b_ref[0]
    wqkv, bqkv = wqkv_ref[0], bqkv_ref[0]
    wo, bo = wo_ref[0], bo_ref[0]
    w1, b1 = w1_ref[0], b1_ref[0]
    w2, b2 = w2_ref[0], b2_ref[0]

    for b in range(Bblk):                    # weights amortized across the batch block
        x = carry_ref[b]                     # (L, D) f32 resident activations
        bias_row = bias_ref[b]               # (1, L) key-padding bias (broadcasts over rows)

        # ---- self-attention: pre-LN, fused QKV, full-width rotary ----
        xn = _layer_norm(x, ln1w, ln1b).astype(jnp.bfloat16)
        qkv = jnp.dot(xn, wqkv, preferred_element_type=jnp.float32) + bqkv  # (L, 3D) f32
        q = qkv[:, :D]                       # Q/K in permuted [first halves | second halves]
        k = qkv[:, D:2 * D]                  # layout; 1/sqrt(hd) already folded into Q columns
        v = qkv[:, 2 * D:]                   # V keeps the natural head layout
        q = q * cos + _swap_halves(q) * sin  # rotary at full (L, D) width
        k = k * cos + _swap_halves(k) * sin

        for h in range(H):                   # per-head scores (inherently rank-hd work)
            c1 = slice(h * hd2, (h + 1) * hd2)
            c2 = slice(half + h * hd2, half + (h + 1) * hd2)
            # head-h score = sum over its (split) columns in the permuted layout
            s = jax.lax.dot_general(q[:, c1].astype(jnp.bfloat16),
                                    k[:, c1].astype(jnp.bfloat16),
                                    (((1,), (1,)), ((), ())),
                                    preferred_element_type=jnp.float32)
            s = s + jax.lax.dot_general(q[:, c2].astype(jnp.bfloat16),
                                        k[:, c2].astype(jnp.bfloat16),
                                        (((1,), (1,)), ((), ())),
                                        preferred_element_type=jnp.float32)
            s = s + bias_row                                   # no (L, L) bias temp
            s = s - jnp.max(s, axis=-1, keepdims=True)
            p = jnp.exp(s)                                     # f32 softmax numerator
            inv = pl.reciprocal(jnp.sum(p, axis=-1, keepdims=True), approx=True)
            vh = v[:, h * hd:(h + 1) * hd].astype(jnp.bfloat16)
            # deferred normalization; per-head result stored straight to scratch
            attn_ref[:, h * hd:(h + 1) * hd] = jnp.dot(
                p.astype(jnp.bfloat16), vh, preferred_element_type=jnp.float32) * inv

        attn = attn_ref[...].astype(jnp.bfloat16)              # (L, D)
        x = x + jnp.dot(attn, wo, preferred_element_type=jnp.float32) + bo

        # ---- feed-forward (pre-LN) ----
        xn2 = _layer_norm(x, ln2w, ln2b).astype(jnp.bfloat16)
        h1 = jnp.dot(xn2, w1, preferred_element_type=jnp.float32) + b1
        # TODO(synk): ESM2 uses exact erf GELU; tanh approximation used here.
        g = jax.nn.gelu(h1, approximate=True).astype(jnp.bfloat16)
        x = x + jnp.dot(g, w2, preferred_element_type=jnp.float32) + b2

        carry_ref[b] = x                     # carry to the next layer

        # ---- last-layer epilogue: final LayerNorm + masked mean pooling ----
        @pl.when(layer == n_layers - 1)
        def _():
            xn_f = _layer_norm(x, lnfw_ref[...], lnfb_ref[...])        # emb_layer_norm_after
            m = mask_ref[b]                                            # (1, L) {0,1} f32
            summed = jnp.dot(m, xn_f, preferred_element_type=jnp.float32)  # (1, D)
            # NOTE: torch produces NaN for a row with zero valid tokens; guarded here.
            count = jnp.maximum(jnp.sum(m, axis=-1, keepdims=True), 1.0)
            o_ref[b] = summed / count                                  # exact divide


_WEIGHT_ORDER = ("ln1w", "ln1b", "wqkv", "bqkv", "wo", "bo",
                 "ln2w", "ln2b", "w1", "b1", "w2", "b2")


def encoder_pool_pallas(x, attn_bias, pool_mask, cos, sin_signed, lnf_w, lnf_b,
                        layers, num_heads, max_block_b=8):
    B, L, D = x.shape
    NL = layers["wqkv"].shape[0]
    F = layers["w1"].shape[2]
    weights = [layers[k] for k in _WEIGHT_ORDER]

    block_b = min(B, max_block_b)            # batch block: amortizes weight DMA
    while B % block_b:
        block_b -= 1
    nb = B // block_b

    def wspec(a):
        return pl.BlockSpec((1,) + tuple(a.shape[1:]), lambda b, l: (l, 0, 0))

    in_specs = [
        pl.BlockSpec((block_b, L, D), lambda b, l: (b, 0, 0)),   # x
        pl.BlockSpec((block_b, 1, L), lambda b, l: (b, 0, 0)),   # key-padding bias
        pl.BlockSpec((block_b, 1, L), lambda b, l: (b, 0, 0)),   # pooling mask
        pl.BlockSpec((L, D), lambda b, l: (0, 0)),               # rotary cos (permuted)
        pl.BlockSpec((L, D), lambda b, l: (0, 0)),               # rotary signed sin
        pl.BlockSpec((1, D), lambda b, l: (0, 0)),               # final LN weight
        pl.BlockSpec((1, D), lambda b, l: (0, 0)),               # final LN bias
    ] + [wspec(w) for w in weights]

    flops_per_seq_layer = (2 * L * D * 3 * D + 4 * L * L * D
                           + 2 * L * D * D + 4 * L * D * F)
    w_bytes = sum(int(w.size) * w.dtype.itemsize for w in weights)
    cost = pl.CostEstimate(
        flops=int(B * NL * flops_per_seq_layer),
        transcendentals=int(B * NL * L * (num_heads * L + F)),
        bytes_accessed=int(nb * w_bytes + x.size * 4 + B * (2 * L + D) * 4),
    )

    out = pl.pallas_call(
        functools.partial(_fused_stack_kernel, num_heads=num_heads),
        out_shape=jax.ShapeDtypeStruct((B, 1, D), jnp.float32),
        grid=(nb, NL),
        in_specs=in_specs,
        out_specs=pl.BlockSpec((block_b, 1, D), lambda b, l: (b, 0, 0)),
        scratch_shapes=[pltpu.VMEM((block_b, L, D), jnp.float32),  # activation carry
                        pltpu.VMEM((L, D), jnp.float32)],          # per-head output scratch
        compiler_params=pltpu.CompilerParams(
            dimension_semantics=("parallel", "arbitrary"),
            vmem_limit_bytes=_pick_vmem_limit()),
        cost_estimate=cost,
    )(x, attn_bias, pool_mask, cos, sin_signed, lnf_w, lnf_b, *weights)
    return out[:, 0, :]


# --------------------- offline weight preprocessing --------------------------

def _preprocess_layers(layers, num_heads):
    """Fold the 1/sqrt(hd) attention scale into the Q projection, and permute the
    Q/K output columns into [per-head first halves | per-head second halves] so
    rotary runs at full (L, D) width with a single half-swap.
    (With a real checkpoint this would run once at load time.)"""
    wqkv = layers["wqkv"].astype(jnp.float32)
    bqkv = layers["bqkv"].astype(jnp.float32)
    D = wqkv.shape[1]
    hd = D // num_heads
    hd2 = hd // 2
    scale = 1.0 / math.sqrt(hd)

    base = jnp.arange(num_heads, dtype=jnp.int32)[:, None] * hd
    first = (base + jnp.arange(hd2, dtype=jnp.int32)[None, :]).reshape(-1)
    perm = jnp.concatenate([first, first + hd2])

    def fix(w):
        q = jnp.take(w[..., :D], perm, axis=-1) * scale
        k = jnp.take(w[..., D:2 * D], perm, axis=-1)
        return jnp.concatenate([q, k, w[..., 2 * D:]], axis=-1)

    out = dict(layers)
    out["wqkv"] = fix(wqkv).astype(layers["wqkv"].dtype)
    out["bqkv"] = fix(bqkv).astype(layers["bqkv"].dtype)
    return out


# ------------------------------ model forward --------------------------------

def flab_forward(tokens, chain_ids, params, num_heads):
    B, L = tokens.shape
    D = params["embed_tokens"].shape[1]
    hd = D // num_heads

    pad = tokens == PAD_IDX
    is_mask = tokens == MASK_IDX

    # embeddings (gather kept in plain JAX glue)
    x = params["embed_tokens"][tokens] + params["chain_embed"][chain_ids]

    # ESM2 token-dropout rescaling (guarded against all-PAD / all-MASK rows)
    mask_ratio_train = 0.15 * 0.8
    x = jnp.where(is_mask[..., None], 0.0, x)
    src_lengths = jnp.maximum(jnp.sum(~pad, axis=-1).astype(jnp.float32), 1.0)
    mask_ratio_obs = jnp.sum(is_mask, axis=-1).astype(jnp.float32) / src_lengths
    rescale = (1.0 - mask_ratio_train) / jnp.maximum(1.0 - mask_ratio_obs, 1e-6)
    x = x * rescale[:, None, None]
    x = (x * (1.0 - pad[..., None].astype(jnp.float32))).astype(jnp.float32)

    # key-padding bias, (B, 1, L) f32; broadcast over query rows inside the kernel
    attn_bias = jnp.where(pad, -1e9, 0.0).astype(jnp.float32)[:, None, :]

    # rotary tables at full (L, D) width in the permuted layout; rotate_half's
    # sign is folded into the sin table.
    inv_freq = 1.0 / (10000.0 ** (jnp.arange(0, hd, 2, dtype=jnp.float32) / hd))
    freqs = jnp.outer(jnp.arange(L, dtype=jnp.float32), inv_freq)       # (L, hd/2)
    cos_full = jnp.tile(jnp.cos(freqs), (1, 2 * num_heads))             # (L, D)
    sin_half = jnp.sin(freqs)
    sin_full = jnp.concatenate([-jnp.tile(sin_half, (1, num_heads)),
                                jnp.tile(sin_half, (1, num_heads))], axis=-1)

    # FlabWrapper pooling mask: not CLS, not EOS, not PAD
    tok_mask = (~(tokens == CLS_IDX) & ~(tokens == EOS_IDX) & ~pad).astype(jnp.float32)

    layers = _preprocess_layers(params["layers"], num_heads)

    return encoder_pool_pallas(x, attn_bias, tok_mask[:, None, :], cos_full, sin_full,
                               params["ln_f_w"], params["ln_f_b"], layers, num_heads)


# ------------------------------ parameter init --------------------------------

def init_params(key, num_layers, D, ffn):
    # TODO(synk): checkpoint loading / parameter freezing from FlabWrapper.__init__
    # is training-time machinery; weights are synthetic + deterministic here.
    keys = jax.random.split(key, 2 + num_layers)

    def nrm(k, shape, s=0.05):
        return (s * jax.random.normal(k, shape)).astype(jnp.float32)

    params = {
        "embed_tokens": nrm(keys[0], (VOCAB, D), 0.1),
        "chain_embed": nrm(keys[1], (NUM_CHAIN_IDS, D), 0.1),
        "ln_f_w": jnp.ones((1, D), jnp.float32),
        "ln_f_b": jnp.zeros((1, D), jnp.float32),
    }

    per = {k: [] for k in _WEIGHT_ORDER}
    for i in range(num_layers):
        lk = jax.random.split(keys[2 + i], 9)
        wq, wk, wv = nrm(lk[0], (D, D)), nrm(lk[2], (D, D)), nrm(lk[4], (D, D))
        bq, bk, bv = nrm(lk[1], (1, D), 0.01), nrm(lk[3], (1, D), 0.01), nrm(lk[5], (1, D), 0.01)
        per["ln1w"].append(jnp.ones((1, D), jnp.float32))
        per["ln1b"].append(jnp.zeros((1, D), jnp.float32))
        per["wqkv"].append(jnp.concatenate([wq, wk, wv], axis=-1))     # (D, 3D) fused QKV
        per["bqkv"].append(jnp.concatenate([bq, bk, bv], axis=-1))
        per["wo"].append(nrm(lk[6], (D, D)))
        per["bo"].append(jnp.zeros((1, D), jnp.float32))
        per["ln2w"].append(jnp.ones((1, D), jnp.float32))
        per["ln2b"].append(jnp.zeros((1, D), jnp.float32))
        per["w1"].append(nrm(lk[7], (D, ffn)))
        per["b1"].append(jnp.zeros((1, ffn), jnp.float32))
        per["w2"].append(nrm(lk[8], (ffn, D)))
        per["b2"].append(jnp.zeros((1, D), jnp.float32))

    bf16_keys = {"wqkv", "wo", "w1", "w2"}          # matmul weights in bf16
    params["layers"] = {
        k: jnp.stack(v).astype(jnp.bfloat16 if k in bf16_keys else jnp.float32)
        for k, v in per.items()
    }
    return params


# ----------------------------------- main -------------------------------------

if __name__ == "__main__":
    D, H, LAYERS, FFN = 32, 4, 2, 128     # small synthetic ESM2 config
    B, L = 2, 8

    key = jax.random.PRNGKey(0)
    k_tok, k_chain, k_par = jax.random.split(key, 3)

    tokens = jax.random.randint(k_tok, (B, L), 4, 24, dtype=jnp.int32)
    tokens = tokens.at[:, 0].set(CLS_IDX)          # CLS
    tokens = tokens.at[0, L - 1].set(EOS_IDX)      # EOS
    tokens = tokens.at[1, 5].set(EOS_IDX)
    tokens = tokens.at[1, 6:].set(PAD_IDX)         # padding on second sequence
    chain_ids = jax.random.randint(k_chain, (B, L), 0, 2, dtype=jnp.int32)

    params = init_params(k_par, LAYERS, D, FFN)

    out = flab_forward(tokens, chain_ids, params, H)
    out = jax.block_until_ready(out)

    assert out.shape == (B, D), out.shape
    assert bool(jnp.all(jnp.isfinite(out)))
    print("KERNEL_OK")
</pallas_src>

<mosaic_0001>
module attributes {stable_mosaic.version = 11 : i64} {
  func.func @_fused_stack_kernel(%arg0: i32, %arg1: i32, %arg2: memref<2x8x32xf32, #tpu.memory_space<vmem>>, %arg3: memref<2x1x8xf32, #tpu.memory_space<vmem>>, %arg4: memref<2x1x8xf32, #tpu.memory_space<vmem>>, %arg5: memref<8x32xf32, #tpu.memory_space<vmem>>, %arg6: memref<8x32xf32, #tpu.memory_space<vmem>>, %arg7: memref<1x32xf32, #tpu.memory_space<vmem>>, %arg8: memref<1x32xf32, #tpu.memory_space<vmem>>, %arg9: memref<1x1x32xf32, #tpu.memory_space<vmem>>, %arg10: memref<1x1x32xf32, #tpu.memory_space<vmem>>, %arg11: memref<1x32x96xbf16, #tpu.memory_space<vmem>>, %arg12: memref<1x1x96xf32, #tpu.memory_space<vmem>>, %arg13: memref<1x32x32xbf16, #tpu.memory_space<vmem>>, %arg14: memref<1x1x32xf32, #tpu.memory_space<vmem>>, %arg15: memref<1x1x32xf32, #tpu.memory_space<vmem>>, %arg16: memref<1x1x32xf32, #tpu.memory_space<vmem>>, %arg17: memref<1x32x128xbf16, #tpu.memory_space<vmem>>, %arg18: memref<1x1x128xf32, #tpu.memory_space<vmem>>, %arg19: memref<1x128x32xbf16, #tpu.memory_space<vmem>>, %arg20: memref<1x1x32xf32, #tpu.memory_space<vmem>>, %arg21: memref<2x1x32xf32, #tpu.memory_space<vmem>>, %arg22: memref<2x8x32xf32, #tpu.memory_space<vmem>>, %arg23: memref<8x32xf32, #tpu.memory_space<vmem>>) attributes {dimension_semantics = [#tpu.dimension_semantics<parallel>, #tpu.dimension_semantics<arbitrary>], iteration_bounds = array<i64: 1, 2>, scalar_prefetch = 0 : i64, scratch_operands = 2 : i64, tpu.core_type = #tpu.core_type<tc>, window_params = [{transform_indices = @transform_0, window_bounds = array<i64: 2, 8, 32>}, {transform_indices = @transform_1, window_bounds = array<i64: 2, 1, 8>}, {transform_indices = @transform_2, window_bounds = array<i64: 2, 1, 8>}, {pipeline_mode = #tpu.pipeline_mode<synchronous>, transform_indices = @transform_3, window_bounds = array<i64: 8, 32>}, {pipeline_mode = #tpu.pipeline_mode<synchronous>, transform_indices = @transform_4, window_bounds = array<i64: 8, 32>}, {pipeline_mode = #tpu.pipeline_mode<synchronous>, transform_indices = @transform_5, window_bounds = array<i64: 1, 32>}, {pipeline_mode = #tpu.pipeline_mode<synchronous>, transform_indices = @transform_6, window_bounds = array<i64: 1, 32>}, {transform_indices = @transform_7, window_bounds = array<i64: 1, 1, 32>}, {transform_indices = @transform_8, window_bounds = array<i64: 1, 1, 32>}, {transform_indices = @transform_9, window_bounds = array<i64: 1, 32, 96>}, {transform_indices = @transform_10, window_bounds = array<i64: 1, 1, 96>}, {transform_indices = @transform_11, window_bounds = array<i64: 1, 32, 32>}, {transform_indices = @transform_12, window_bounds = array<i64: 1, 1, 32>}, {transform_indices = @transform_13, window_bounds = array<i64: 1, 1, 32>}, {transform_indices = @transform_14, window_bounds = array<i64: 1, 1, 32>}, {transform_indices = @transform_15, window_bounds = array<i64: 1, 32, 128>}, {transform_indices = @transform_16, window_bounds = array<i64: 1, 1, 128>}, {transform_indices = @transform_17, window_bounds = array<i64: 1, 128, 32>}, {transform_indices = @transform_18, window_bounds = array<i64: 1, 1, 32>}, {transform_indices = @transform_19, window_bounds = array<i64: 2, 1, 32>}]} {
    %c0_i32 = arith.constant 0 : i32
    %0 = arith.cmpi eq, %arg1, %c0_i32 : i32
    %1 = arith.extui %0 : i1 to i32
    %c0_i32_0 = arith.constant 0 : i32
    %2 = arith.cmpi ne, %1, %c0_i32_0 : i32
    scf.if %2 {
      %c0_152 = arith.constant 0 : index
      %c0_153 = arith.constant 0 : index
      %c0_154 = arith.constant 0 : index
      %455 = vector.load %arg2[%c0_152, %c0_153, %c0_154] : memref<2x8x32xf32, #tpu.memory_space<vmem>>, vector<2x8x32xf32>
      %c0_155 = arith.constant 0 : index
      %c0_156 = arith.constant 0 : index
      %c0_157 = arith.constant 0 : index
      %456 = vector.load %arg22[%c0_155, %c0_156, %c0_157] : memref<2x8x32xf32, #tpu.memory_space<vmem>>, vector<2x8x32xf32>
      tpu.vector_store %arg22[%c0_155, %c0_156, %c0_157], %455 {strides = array<i32>} : memref<2x8x32xf32, #tpu.memory_space<vmem>>, vector<2x8x32xf32>,
    } else {
    }
    %c0 = arith.constant 0 : index
    %c0_1 = arith.constant 0 : index
    %3 = vector.load %arg5[%c0, %c0_1] : memref<8x32xf32, #tpu.memory_space<vmem>>, vector<8x32xf32>
    %c0_2 = arith.constant 0 : index
    %c0_3 = arith.constant 0 : index
    %4 = vector.load %arg6[%c0_2, %c0_3] : memref<8x32xf32, #tpu.memory_space<vmem>>, vector<8x32xf32>
    %c0_4 = arith.constant 0 : index
    %c0_5 = arith.constant 0 : index
    %c0_6 = arith.constant 0 : index
    %5 = vector.load %arg9[%c0_4, %c0_5, %c0_6] : memref<1x1x32xf32, #tpu.memory_space<vmem>>, vector<1x1x32xf32>
    %6 = vector.shape_cast %5 : vector<1x1x32xf32> to vector<1x32xf32>
    %c0_7 = arith.constant 0 : index
    %c0_8 = arith.constant 0 : index
    %c0_9 = arith.constant 0 : index
    %7 = vector.load %arg10[%c0_7, %c0_8, %c0_9] : memref<1x1x32xf32, #tpu.memory_space<vmem>>, vector<1x1x32xf32>
    %8 = vector.shape_cast %7 : vector<1x1x32xf32> to vector<1x32xf32>
    %c0_10 = arith.constant 0 : index
    %c0_11 = arith.constant 0 : index
    %c0_12 = arith.constant 0 : index
    %9 = vector.load %arg15[%c0_10, %c0_11, %c0_12] : memref<1x1x32xf32, #tpu.memory_space<vmem>>, vector<1x1x32xf32>
    %10 = vector.shape_cast %9 : vector<1x1x32xf32> to vector<1x32xf32>
    %c0_13 = arith.constant 0 : index
    %c0_14 = arith.constant 0 : index
    %c0_15 = arith.constant 0 : index
    %11 = vector.load %arg16[%c0_13, %c0_14, %c0_15] : memref<1x1x32xf32, #tpu.memory_space<vmem>>, vector<1x1x32xf32>
    %12 = vector.shape_cast %11 : vector<1x1x32xf32> to vector<1x32xf32>
    %c0_16 = arith.constant 0 : index
    %c0_17 = arith.constant 0 : index
    %c0_18 = arith.constant 0 : index
    %13 = vector.load %arg11[%c0_16, %c0_17, %c0_18] : memref<1x32x96xbf16, #tpu.memory_space<vmem>>, vector<1x32x96xbf16>
    %14 = vector.shape_cast %13 : vector<1x32x96xbf16> to vector<32x96xbf16>
    %c0_19 = arith.constant 0 : index
    %c0_20 = arith.constant 0 : index
    %c0_21 = arith.constant 0 : index
    %15 = vector.load %arg12[%c0_19, %c0_20, %c0_21] : memref<1x1x96xf32, #tpu.memory_space<vmem>>, vector<1x1x96xf32>
    %16 = vector.shape_cast %15 : vector<1x1x96xf32> to vector<1x96xf32>
    %c0_22 = arith.constant 0 : index
    %c0_23 = arith.constant 0 : index
    %c0_24 = arith.constant 0 : index
    %17 = vector.load %arg13[%c0_22, %c0_23, %c0_24] : memref<1x32x32xbf16, #tpu.memory_space<vmem>>, vector<1x32x32xbf16>
    %18 = vector.shape_cast %17 : vector<1x32x32xbf16> to vector<32x32xbf16>
    %c0_25 = arith.constant 0 : index
    %c0_26 = arith.constant 0 : index
    %c0_27 = arith.constant 0 : index
    %19 = vector.load %arg14[%c0_25, %c0_26, %c0_27] : memref<1x1x32xf32, #tpu.memory_space<vmem>>, vector<1x1x32xf32>
    %20 = vector.shape_cast %19 : vector<1x1x32xf32> to vector<1x32xf32>
    %c0_28 = arith.constant 0 : index
    %c0_29 = arith.constant 0 : index
    %c0_30 = arith.constant 0 : index
    %21 = vector.load %arg17[%c0_28, %c0_29, %c0_30] : memref<1x32x128xbf16, #tpu.memory_space<vmem>>, vector<1x32x128xbf16>
    %22 = vector.shape_cast %21 : vector<1x32x128xbf16> to vector<32x128xbf16>
    %c0_31 = arith.constant 0 : index
    %c0_32 = arith.constant 0 : index
    %c0_33 = arith.constant 0 : index
    %23 = vector.load %arg18[%c0_31, %c0_32, %c0_33] : memref<1x1x128xf32, #tpu.memory_space<vmem>>, vector<1x1x128xf32>
    %24 = vector.shape_cast %23 : vector<1x1x128xf32> to vector<1x128xf32>
    %c0_34 = arith.constant 0 : index
    %c0_35 = arith.constant 0 : index
    %c0_36 = arith.constant 0 : index
    %25 = vector.load %arg19[%c0_34, %c0_35, %c0_36] : memref<1x128x32xbf16, #tpu.memory_space<vmem>>, vector<1x128x32xbf16>
    %26 = vector.shape_cast %25 : vector<1x128x32xbf16> to vector<128x32xbf16>
    %c0_37 = arith.constant 0 : index
    %c0_38 = arith.constant 0 : index
    %c0_39 = arith.constant 0 : index
    %27 = vector.load %arg20[%c0_37, %c0_38, %c0_39] : memref<1x1x32xf32, #tpu.memory_space<vmem>>, vector<1x1x32xf32>
    %28 = vector.shape_cast %27 : vector<1x1x32xf32> to vector<1x32xf32>
    %c0_40 = arith.constant 0 : index
    %c0_41 = arith.constant 0 : index
    %c0_42 = arith.constant 0 : index
    %29 = vector.load %arg22[%c0_40, %c0_41, %c0_42] : memref<2x8x32xf32, #tpu.memory_space<vmem>>, vector<1x8x32xf32>
    %30 = vector.shape_cast %29 : vector<1x8x32xf32> to vector<8x32xf32>
    %c0_43 = arith.constant 0 : index
    %c0_44 = arith.constant 0 : index
    %c0_45 = arith.constant 0 : index
    %31 = vector.load %arg3[%c0_43, %c0_44, %c0_45] : memref<2x1x8xf32, #tpu.memory_space<vmem>>, vector<1x1x8xf32>
    %32 = vector.shape_cast %31 : vector<1x1x8xf32> to vector<1x8xf32>
    %cst = arith.constant dense<0.000000e+00> : vector<8xf32>
    %33 = vector.multi_reduction <add>, %30, %cst [1] : vector<8x32xf32> to vector<8xf32>
    %34 = vector.shape_cast %33 : vector<8xf32> to vector<8x1xf32>
    %cst_46 = arith.constant 3.200000e+01 : f32
    %35 = vector.broadcast %cst_46 : f32 to vector<8x1xf32>
    %36 = arith.divf %34, %35 : vector<8x1xf32>
    %37 = vector.broadcast %36 : vector<8x1xf32> to vector<8x32xf32>
    %38 = arith.subf %30, %37 : vector<8x32xf32>
    %39 = arith.mulf %38, %38 : vector<8x32xf32>
    %cst_47 = arith.constant dense<0.000000e+00> : vector<8xf32>
    %40 = vector.multi_reduction <add>, %39, %cst_47 [1] : vector<8x32xf32> to vector<8xf32>
    %41 = vector.shape_cast %40 : vector<8xf32> to vector<8x1xf32>
    %cst_48 = arith.constant 3.200000e+01 : f32
    %42 = vector.broadcast %cst_48 : f32 to vector<8x1xf32>
    %43 = arith.divf %41, %42 : vector<8x1xf32>
    %44 = vector.broadcast %36 : vector<8x1xf32> to vector<8x32xf32>
    %45 = arith.subf %30, %44 : vector<8x32xf32>
    %cst_49 = arith.constant 9.99999974E-6 : f32
    %46 = vector.broadcast %cst_49 : f32 to vector<8x1xf32>
    %47 = arith.addf %43, %46 : vector<8x1xf32>
    %48 = math.rsqrt %47 : vector<8x1xf32>
    %49 = vector.broadcast %48 : vector<8x1xf32> to vector<8x32xf32>
    %50 = arith.mulf %45, %49 : vector<8x32xf32>
    %51 = vector.broadcast %6 : vector<1x32xf32> to vector<8x32xf32>
    %52 = arith.mulf %50, %51 : vector<8x32xf32>
    %53 = vector.broadcast %8 : vector<1x32xf32> to vector<8x32xf32>
    %54 = arith.addf %52, %53 : vector<8x32xf32>
    %55 = arith.truncf %54 : vector<8x32xf32> to vector<8x32xbf16>
    %cst_50 = arith.constant dense<0.000000e+00> : vector<8x96xf32>
    %56 = tpu.matmul %55, %14, %cst_50 {dimension_numbers = #tpu.dot_dimension_numbers<[1], [0], [0], [1], [0, 0, 1, 1], [], []>} : vector<8x32xbf16>, vector<32x96xbf16>, vector<8x96xf32> -> vector<8x96xf32>
    %57 = vector.broadcast %16 : vector<1x96xf32> to vector<8x96xf32>
    %58 = arith.addf %56, %57 : vector<8x96xf32>
    %59 = vector.extract_strided_slice %58 {offsets = [0, 0], sizes = [8, 32], strides = [1, 1]} : vector<8x96xf32> to vector<8x32xf32>
    %60 = vector.extract_strided_slice %58 {offsets = [0, 32], sizes = [8, 32], strides = [1, 1]} : vector<8x96xf32> to vector<8x32xf32>
    %61 = vector.extract_strided_slice %58 {offsets = [0, 64], sizes = [8, 32], strides = [1, 1]} : vector<8x96xf32> to vector<8x32xf32>
    %62 = arith.mulf %59, %3 : vector<8x32xf32>
    %63 = vector.extract_strided_slice %59 {offsets = [0, 16], sizes = [8, 16], strides = [1, 1]} : vector<8x32xf32> to vector<8x16xf32>
    %64 = vector.extract_strided_slice %59 {offsets = [0, 0], sizes = [8, 16], strides = [1, 1]} : vector<8x32xf32> to vector<8x16xf32>
    %65 = tpu.concatenate %63, %64 in 1 : vector<8x16xf32>, vector<8x16xf32> -> vector<8x32xf32>
    %66 = arith.mulf %65, %4 : vector<8x32xf32>
    %67 = arith.addf %62, %66 : vector<8x32xf32>
    %68 = arith.mulf %60, %3 : vector<8x32xf32>
    %69 = vector.extract_strided_slice %60 {offsets = [0, 16], sizes = [8, 16], strides = [1, 1]} : vector<8x32xf32> to vector<8x16xf32>
    %70 = vector.extract_strided_slice %60 {offsets = [0, 0], sizes = [8, 16], strides = [1, 1]} : vector<8x32xf32> to vector<8x16xf32>
    %71 = tpu.concatenate %69, %70 in 1 : vector<8x16xf32>, vector<8x16xf32> -> vector<8x32xf32>
    %72 = arith.mulf %71, %4 : vector<8x32xf32>
    %73 = arith.addf %68, %72 : vector<8x32xf32>
    %74 = vector.extract_strided_slice %67 {offsets = [0, 0], sizes = [8, 4], strides = [1, 1]} : vector<8x32xf32> to vector<8x4xf32>
    %75 = arith.truncf %74 : vector<8x4xf32> to vector<8x4xbf16>
    %76 = vector.extract_strided_slice %73 {offsets = [0, 0], sizes = [8, 4], strides = [1, 1]} : vector<8x32xf32> to vector<8x4xf32>
    %77 = arith.truncf %76 : vector<8x4xf32> to vector<8x4xbf16>
    %cst_51 = arith.constant dense<0.000000e+00> : vector<8x8xf32>
    %78 = tpu.matmul %75, %77, %cst_51 {dimension_numbers = #tpu.dot_dimension_numbers<[1], [1], [0], [0], [0, 0, 1, 0], [], []>} : vector<8x4xbf16>, vector<8x4xbf16>, vector<8x8xf32> -> vector<8x8xf32>
    %79 = vector.extract_strided_slice %67 {offsets = [0, 16], sizes = [8, 4], strides = [1, 1]} : vector<8x32xf32> to vector<8x4xf32>
    %80 = arith.truncf %79 : vector<8x4xf32> to vector<8x4xbf16>
    %81 = vector.extract_strided_slice %73 {offsets = [0, 16], sizes = [8, 4], strides = [1, 1]} : vector<8x32xf32> to vector<8x4xf32>
    %82 = arith.truncf %81 : vector<8x4xf32> to vector<8x4xbf16>
    %cst_52 = arith.constant dense<0.000000e+00> : vector<8x8xf32>
    %83 = tpu.matmul %80, %82, %cst_52 {dimension_numbers = #tpu.dot_dimension_numbers<[1], [1], [0], [0], [0, 0, 1, 0], [], []>} : vector<8x4xbf16>, vector<8x4xbf16>, vector<8x8xf32> -> vector<8x8xf32>
    %84 = arith.addf %78, %83 : vector<8x8xf32>
    %85 = vector.broadcast %32 : vector<1x8xf32> to vector<8x8xf32>
    %86 = arith.addf %84, %85 : vector<8x8xf32>
    %cst_53 = arith.constant dense<0xFF800000> : vector<8xf32>
    %87 = vector.multi_reduction <maximumf>, %86, %cst_53 [1] : vector<8x8xf32> to vector<8xf32>
    %88 = vector.shape_cast %87 : vector<8xf32> to vector<8x1xf32>
    %89 = vector.broadcast %88 : vector<8x1xf32> to vector<8x8xf32>
    %90 = arith.subf %86, %89 : vector<8x8xf32>
    %91 = math.exp %90 : vector<8x8xf32>
    %cst_54 = arith.constant dense<0.000000e+00> : vector<8xf32>
    %92 = vector.multi_reduction <add>, %91, %cst_54 [1] : vector<8x8xf32> to vector<8xf32>
    %93 = vector.shape_cast %92 : vector<8xf32> to vector<8x1xf32>
    %94 = tpu.reciprocal %93 {approx = true} : vector<8x1xf32> -> vector<8x1xf32>
    %95 = vector.extract_strided_slice %61 {offsets = [0, 0], sizes = [8, 8], strides = [1, 1]} : vector<8x32xf32> to vector<8x8xf32>
    %96 = arith.truncf %95 : vector<8x8xf32> to vector<8x8xbf16>
    %97 = arith.truncf %91 : vector<8x8xf32> to vector<8x8xbf16>
    %cst_55 = arith.constant dense<0.000000e+00> : vector<8x8xf32>
    %98 = tpu.matmul %97, %96, %cst_55 {dimension_numbers = #tpu.dot_dimension_numbers<[1], [0], [0], [1], [0, 0, 1, 1], [], []>} : vector<8x8xbf16>, vector<8x8xbf16>, vector<8x8xf32> -> vector<8x8xf32>
    %99 = vector.broadcast %94 : vector<8x1xf32> to vector<8x8xf32>
    %100 = arith.mulf %98, %99 : vector<8x8xf32>
    %c0_56 = arith.constant 0 : index
    %c0_57 = arith.constant 0 : index
    %101 = vector.load %arg23[%c0_56, %c0_57] : memref<8x32xf32, #tpu.memory_space<vmem>>, vector<8x8xf32>
    tpu.vector_store %arg23[%c0_56, %c0_57], %100 {strides = array<i32>} : memref<8x32xf32, #tpu.memory_space<vmem>>, vector<8x8xf32>,
    %102 = vector.extract_strided_slice %67 {offsets = [0, 4], sizes = [8, 4], strides = [1, 1]} : vector<8x32xf32> to vector<8x4xf32>
    %103 = arith.truncf %102 : vector<8x4xf32> to vector<8x4xbf16>
    %104 = vector.extract_strided_slice %73 {offsets = [0, 4], sizes = [8, 4], strides = [1, 1]} : vector<8x32xf32> to vector<8x4xf32>
    %105 = arith.truncf %104 : vector<8x4xf32> to vector<8x4xbf16>
    %cst_58 = arith.constant dense<0.000000e+00> : vector<8x8xf32>
    %106 = tpu.matmul %103, %105, %cst_58 {dimension_numbers = #tpu.dot_dimension_numbers<[1], [1], [0], [0], [0, 0, 1, 0], [], []>} : vector<8x4xbf16>, vector<8x4xbf16>, vector<8x8xf32> -> vector<8x8xf32>
    %107 = vector.extract_strided_slice %67 {offsets = [0, 20], sizes = [8, 4], strides = [1, 1]} : vector<8x32xf32> to vector<8x4xf32>
    %108 = arith.truncf %107 : vector<8x4xf32> to vector<8x4xbf16>
    %109 = vector.extract_strided_slice %73 {offsets = [0, 20], sizes = [8, 4], strides = [1, 1]} : vector<8x32xf32> to vector<8x4xf32>
    %110 = arith.truncf %109 : vector<8x4xf32> to vector<8x4xbf16>
    %cst_59 = arith.constant dense<0.000000e+00> : vector<8x8xf32>
    %111 = tpu.matmul %108, %110, %cst_59 {dimension_numbers = #tpu.dot_dimension_numbers<[1], [1], [0], [0], [0, 0, 1, 0], [], []>} : vector<8x4xbf16>, vector<8x4xbf16>, vector<8x8xf32> -> vector<8x8xf32>
    %112 = arith.addf %106, %111 : vector<8x8xf32>
    %113 = vector.broadcast %32 : vector<1x8xf32> to vector<8x8xf32>
    %114 = arith.addf %112, %113 : vector<8x8xf32>
    %cst_60 = arith.constant dense<0xFF800000> : vector<8xf32>
    %115 = vector.multi_reduction <maximumf>, %114, %cst_60 [1] : vector<8x8xf32> to vector<8xf32>
    %116 = vector.shape_cast %115 : vector<8xf32> to vector<8x1xf32>
    %117 = vector.broadcast %116 : vector<8x1xf32> to vector<8x8xf32>
    %118 = arith.subf %114, %117 : vector<8x8xf32>
    %119 = math.exp %118 : vector<8x8xf32>
    %cst_61 = arith.constant dense<0.000000e+00> : vector<8xf32>
    %120 = vector.multi_reduction <add>, %119, %cst_61 [1] : vector<8x8xf32> to vector<8xf32>
    %121 = vector.shape_cast %120 : vector<8xf32> to vector<8x1xf32>
    %122 = tpu.reciprocal %121 {approx = true} : vector<8x1xf32> -> vector<8x1xf32>
    %123 = vector.extract_strided_slice %61 {offsets = [0, 8], sizes = [8, 8], strides = [1, 1]} : vector<8x32xf32> to vector<8x8xf32>
    %124 = arith.truncf %123 : vector<8x8xf32> to vector<8x8xbf16>
    %125 = arith.truncf %119 : vector<8x8xf32> to vector<8x8xbf16>
    %cst_62 = arith.constant dense<0.000000e+00> : vector<8x8xf32>
    %126 = tpu.matmul %125, %124, %cst_62 {dimension_numbers = #tpu.dot_dimension_numbers<[1], [0], [0], [1], [0, 0, 1, 1], [], []>} : vector<8x8xbf16>, vector<8x8xbf16>, vector<8x8xf32> -> vector<8x8xf32>
    %127 = vector.broadcast %122 : vector<8x1xf32> to vector<8x8xf32>
    %128 = arith.mulf %126, %127 : vector<8x8xf32>
    %c0_63 = arith.constant 0 : index
    %c8 = arith.constant 8 : index
    %129 = vector.load %arg23[%c0_63, %c8] : memref<8x32xf32, #tpu.memory_space<vmem>>, vector<8x8xf32>
    tpu.vector_store %arg23[%c0_63, %c8], %128 {strides = array<i32>} : memref<8x32xf32, #tpu.memory_space<vmem>>, vector<8x8xf32>,
    %130 = vector.extract_strided_slice %67 {offsets = [0, 8], sizes = [8, 4], strides = [1, 1]} : vector<8x32xf32> to vector<8x4xf32>
    %131 = arith.truncf %130 : vector<8x4xf32> to vector<8x4xbf16>
    %132 = vector.extract_strided_slice %73 {offsets = [0, 8], sizes = [8, 4], strides = [1, 1]} : vector<8x32xf32> to vector<8x4xf32>
    %133 = arith.truncf %132 : vector<8x4xf32> to vector<8x4xbf16>
    %cst_64 = arith.constant dense<0.000000e+00> : vector<8x8xf32>
    %134 = tpu.matmul %131, %133, %cst_64 {dimension_numbers = #tpu.dot_dimension_numbers<[1], [1], [0], [0], [0, 0, 1, 0], [], []>} : vector<8x4xbf16>, vector<8x4xbf16>, vector<8x8xf32> -> vector<8x8xf32>
    %135 = vector.extract_strided_slice %67 {offsets = [0, 24], sizes = [8, 4], strides = [1, 1]} : vector<8x32xf32> to vector<8x4xf32>
    %136 = arith.truncf %135 : vector<8x4xf32> to vector<8x4xbf16>
    %137 = vector.extract_strided_slice %73 {offsets = [0, 24], sizes = [8, 4], strides = [1, 1]} : vector<8x32xf32> to vector<8x4xf32>
    %138 = arith.truncf %137 : vector<8x4xf32> to vector<8x4xbf16>
    %cst_65 = arith.constant dense<0.000000e+00> : vector<8x8xf32>
    %139 = tpu.matmul %136, %138, %cst_65 {dimension_numbers = #tpu.dot_dimension_numbers<[1], [1], [0], [0], [0, 0, 1, 0], [], []>} : vector<8x4xbf16>, vector<8x4xbf16>, vector<8x8xf32> -> vector<8x8xf32>
    %140 = arith.addf %134, %139 : vector<8x8xf32>
    %141 = vector.broadcast %32 : vector<1x8xf32> to vector<8x8xf32>
    %142 = arith.addf %140, %141 : vector<8x8xf32>
    %cst_66 = arith.constant dense<0xFF800000> : vector<8xf32>
    %143 = vector.multi_reduction <maximumf>, %142, %cst_66 [1] : vector<8x8xf32> to vector<8xf32>
    %144 = vector.shape_cast %143 : vector<8xf32> to vector<8x1xf32>
    %145 = vector.broadcast %144 : vector<8x1xf32> to vector<8x8xf32>
    %146 = arith.subf %142, %145 : vector<8x8xf32>
    %147 = math.exp %146 : vector<8x8xf32>
    %cst_67 = arith.constant dense<0.000000e+00> : vector<8xf32>
    %148 = vector.multi_reduction <add>, %147, %cst_67 [1] : vector<8x8xf32> to vector<8xf32>
    %149 = vector.shape_cast %148 : vector<8xf32> to vector<8x1xf32>
    %150 = tpu.reciprocal %149 {approx = true} : vector<8x1xf32> -> vector<8x1xf32>
    %151 = vector.extract_strided_slice %61 {offsets = [0, 16], sizes = [8, 8], strides = [1, 1]} : vector<8x32xf32> to vector<8x8xf32>
    %152 = arith.truncf %151 : vector<8x8xf32> to vector<8x8xbf16>
    %153 = arith.truncf %147 : vector<8x8xf32> to vector<8x8xbf16>
    %cst_68 = arith.constant dense<0.000000e+00> : vector<8x8xf32>
    %154 = tpu.matmul %153, %152, %cst_68 {dimension_numbers = #tpu.dot_dimension_numbers<[1], [0], [0], [1], [0, 0, 1, 1], [], []>} : vector<8x8xbf16>, vector<8x8xbf16>, vector<8x8xf32> -> vector<8x8xf32>
    %155 = vector.broadcast %150 : vector<8x1xf32> to vector<8x8xf32>
    %156 = arith.mulf %154, %155 : vector<8x8xf32>
    %c0_69 = arith.constant 0 : index
    %c16 = arith.constant 16 : index
    %157 = vector.load %arg23[%c0_69, %c16] : memref<8x32xf32, #tpu.memory_space<vmem>>, vector<8x8xf32>
    tpu.vector_store %arg23[%c0_69, %c16], %156 {strides = array<i32>} : memref<8x32xf32, #tpu.memory_space<vmem>>, vector<8x8xf32>,
    %158 = vector.extract_strided_slice %67 {offsets = [0, 12], sizes = [8, 4], strides = [1, 1]} : vector<8x32xf32> to vector<8x4xf32>
    %159 = arith.truncf %158 : vector<8x4xf32> to vector<8x4xbf16>
    %160 = vector.extract_strided_slice %73 {offsets = [0, 12], sizes = [8, 4], strides = [1, 1]} : vector<8x32xf32> to vector<8x4xf32>
    %161 = arith.truncf %160 : vector<8x4xf32> to vector<8x4xbf16>
    %cst_70 = arith.constant dense<0.000000e+00> : vector<8x8xf32>
    %162 = tpu.matmul %159, %161, %cst_70 {dimension_numbers = #tpu.dot_dimension_numbers<[1], [1], [0], [0], [0, 0, 1, 0], [], []>} : vector<8x4xbf16>, vector<8x4xbf16>, vector<8x8xf32> -> vector<8x8xf32>
    %163 = vector.extract_strided_slice %67 {offsets = [0, 28], sizes = [8, 4], strides = [1, 1]} : vector<8x32xf32> to vector<8x4xf32>
    %164 = arith.truncf %163 : vector<8x4xf32> to vector<8x4xbf16>
    %165 = vector.extract_strided_slice %73 {offsets = [0, 28], sizes = [8, 4], strides = [1, 1]} : vector<8x32xf32> to vector<8x4xf32>
    %166 = arith.truncf %165 : vector<8x4xf32> to vector<8x4xbf16>
    %cst_71 = arith.constant dense<0.000000e+00> : vector<8x8xf32>
    %167 = tpu.matmul %164, %166, %cst_71 {dimension_numbers = #tpu.dot_dimension_numbers<[1], [1], [0], [0], [0, 0, 1, 0], [], []>} : vector<8x4xbf16>, vector<8x4xbf16>, vector<8x8xf32> -> vector<8x8xf32>
    %168 = arith.addf %162, %167 : vector<8x8xf32>
    %169 = vector.broadcast %32 : vector<1x8xf32> to vector<8x8xf32>
    %170 = arith.addf %168, %169 : vector<8x8xf32>
    %cst_72 = arith.constant dense<0xFF800000> : vector<8xf32>
    %171 = vector.multi_reduction <maximumf>, %170, %cst_72 [1] : vector<8x8xf32> to vector<8xf32>
    %172 = vector.shape_cast %171 : vector<8xf32> to vector<8x1xf32>
    %173 = vector.broadcast %172 : vector<8x1xf32> to vector<8x8xf32>
    %174 = arith.subf %170, %173 : vector<8x8xf32>
    %175 = math.exp %174 : vector<8x8xf32>
    %cst_73 = arith.constant dense<0.000000e+00> : vector<8xf32>
    %176 = vector.multi_reduction <add>, %175, %cst_73 [1] : vector<8x8xf32> to vector<8xf32>
    %177 = vector.shape_cast %176 : vector<8xf32> to vector<8x1xf32>
    %178 = tpu.reciprocal %177 {approx = true} : vector<8x1xf32> -> vector<8x1xf32>
    %179 = vector.extract_strided_slice %61 {offsets = [0, 24], sizes = [8, 8], strides = [1, 1]} : vector<8x32xf32> to vector<8x8xf32>
    %180 = arith.truncf %179 : vector<8x8xf32> to vector<8x8xbf16>
    %181 = arith.truncf %175 : vector<8x8xf32> to vector<8x8xbf16>
    %cst_74 = arith.constant dense<0.000000e+00> : vector<8x8xf32>
    %182 = tpu.matmul %181, %180, %cst_74 {dimension_numbers = #tpu.dot_dimension_numbers<[1], [0], [0], [1], [0, 0, 1, 1], [], []>} : vector<8x8xbf16>, vector<8x8xbf16>, vector<8x8xf32> -> vector<8x8xf32>
    %183 = vector.broadcast %178 : vector<8x1xf32> to vector<8x8xf32>
    %184 = arith.mulf %182, %183 : vector<8x8xf32>
    %c0_75 = arith.constant 0 : index
    %c24 = arith.constant 24 : index
    %185 = vector.load %arg23[%c0_75, %c24] : memref<8x32xf32, #tpu.memory_space<vmem>>, vector<8x8xf32>
    tpu.vector_store %arg23[%c0_75, %c24], %184 {strides = array<i32>} : memref<8x32xf32, #tpu.memory_space<vmem>>, vector<8x8xf32>,
    %c0_76 = arith.constant 0 : index
    %c0_77 = arith.constant 0 : index
    %186 = vector.load %arg23[%c0_76, %c0_77] : memref<8x32xf32, #tpu.memory_space<vmem>>, vector<8x32xf32>
    %187 = arith.truncf %186 : vector<8x32xf32> to vector<8x32xbf16>
    %cst_78 = arith.constant dense<0.000000e+00> : vector<8x32xf32>
    %188 = tpu.matmul %187, %18, %cst_78 {dimension_numbers = #tpu.dot_dimension_numbers<[1], [0], [0], [1], [0, 0, 1, 1], [], []>} : vector<8x32xbf16>, vector<32x32xbf16>, vector<8x32xf32> -> vector<8x32xf32>
    %189 = arith.addf %30, %188 : vector<8x32xf32>
    %190 = vector.broadcast %20 : vector<1x32xf32> to vector<8x32xf32>
    %191 = arith.addf %189, %190 : vector<8x32xf32>
    %cst_79 = arith.constant dense<0.000000e+00> : vector<8xf32>
    %192 = vector.multi_reduction <add>, %191, %cst_79 [1] : vector<8x32xf32> to vector<8xf32>
    %193 = vector.shape_cast %192 : vector<8xf32> to vector<8x1xf32>
    %cst_80 = arith.constant 3.200000e+01 : f32
    %194 = vector.broadcast %cst_80 : f32 to vector<8x1xf32>
    %195 = arith.divf %193, %194 : vector<8x1xf32>
    %196 = vector.broadcast %195 : vector<8x1xf32> to vector<8x32xf32>
    %197 = arith.subf %191, %196 : vector<8x32xf32>
    %198 = arith.mulf %197, %197 : vector<8x32xf32>
    %cst_81 = arith.constant dense<0.000000e+00> : vector<8xf32>
    %199 = vector.multi_reduction <add>, %198, %cst_81 [1] : vector<8x32xf32> to vector<8xf32>
    %200 = vector.shape_cast %199 : vector<8xf32> to vector<8x1xf32>
    %cst_82 = arith.constant 3.200000e+01 : f32
    %201 = vector.broadcast %cst_82 : f32 to vector<8x1xf32>
    %202 = arith.divf %200, %201 : vector<8x1xf32>
    %203 = vector.broadcast %195 : vector<8x1xf32> to vector<8x32xf32>
    %204 = arith.subf %191, %203 : vector<8x32xf32>
    %cst_83 = arith.constant 9.99999974E-6 : f32
    %205 = vector.broadcast %cst_83 : f32 to vector<8x1xf32>
    %206 = arith.addf %202, %205 : vector<8x1xf32>
    %207 = math.rsqrt %206 : vector<8x1xf32>
    %208 = vector.broadcast %207 : vector<8x1xf32> to vector<8x32xf32>
    %209 = arith.mulf %204, %208 : vector<8x32xf32>
    %210 = vector.broadcast %10 : vector<1x32xf32> to vector<8x32xf32>
    %211 = arith.mulf %209, %210 : vector<8x32xf32>
    %212 = vector.broadcast %12 : vector<1x32xf32> to vector<8x32xf32>
    %213 = arith.addf %211, %212 : vector<8x32xf32>
    %214 = arith.truncf %213 : vector<8x32xf32> to vector<8x32xbf16>
    %cst_84 = arith.constant dense<0.000000e+00> : vector<8x128xf32>
    %215 = tpu.matmul %214, %22, %cst_84 {dimension_numbers = #tpu.dot_dimension_numbers<[1], [0], [0], [1], [0, 0, 1, 1], [], []>} : vector<8x32xbf16>, vector<32x128xbf16>, vector<8x128xf32> -> vector<8x128xf32>
    %216 = vector.broadcast %24 : vector<1x128xf32> to vector<8x128xf32>
    %217 = arith.addf %215, %216 : vector<8x128xf32>
    %218 = arith.mulf %217, %217 : vector<8x128xf32>
    %219 = arith.mulf %217, %218 : vector<8x128xf32>
    %cst_85 = arith.constant 4.471500e-02 : f32
    %220 = vector.broadcast %cst_85 : f32 to vector<8x128xf32>
    %221 = arith.mulf %220, %219 : vector<8x128xf32>
    %222 = arith.addf %217, %221 : vector<8x128xf32>
    %cst_86 = arith.constant 0.797884583 : f32
    %223 = vector.broadcast %cst_86 : f32 to vector<8x128xf32>
    %224 = arith.mulf %223, %222 : vector<8x128xf32>
    %225 = math.tanh %224 : vector<8x128xf32>
    %cst_87 = arith.constant 1.000000e+00 : f32
    %226 = vector.broadcast %cst_87 : f32 to vector<8x128xf32>
    %227 = arith.addf %226, %225 : vector<8x128xf32>
    %cst_88 = arith.constant 5.000000e-01 : f32
    %228 = vector.broadcast %cst_88 : f32 to vector<8x128xf32>
    %229 = arith.mulf %228, %227 : vector<8x128xf32>
    %230 = arith.mulf %217, %229 : vector<8x128xf32>
    %231 = arith.truncf %230 : vector<8x128xf32> to vector<8x128xbf16>
    %cst_89 = arith.constant dense<0.000000e+00> : vector<8x32xf32>
    %232 = tpu.matmul %231, %26, %cst_89 {dimension_numbers = #tpu.dot_dimension_numbers<[1], [0], [0], [1], [0, 0, 1, 1], [], []>} : vector<8x128xbf16>, vector<128x32xbf16>, vector<8x32xf32> -> vector<8x32xf32>
    %233 = arith.addf %191, %232 : vector<8x32xf32>
    %234 = vector.broadcast %28 : vector<1x32xf32> to vector<8x32xf32>
    %235 = arith.addf %233, %234 : vector<8x32xf32>
    %c0_90 = arith.constant 0 : index
    %c0_91 = arith.constant 0 : index
    %c0_92 = arith.constant 0 : index
    %236 = vector.load %arg22[%c0_90, %c0_91, %c0_92] : memref<2x8x32xf32, #tpu.memory_space<vmem>>, vector<1x8x32xf32>
    %237 = vector.shape_cast %236 : vector<1x8x32xf32> to vector<8x32xf32>
    %238 = vector.shape_cast %235 : vector<8x32xf32> to vector<1x8x32xf32>
    tpu.vector_store %arg22[%c0_90, %c0_91, %c0_92], %238 {strides = array<i32>} : memref<2x8x32xf32, #tpu.memory_space<vmem>>, vector<1x8x32xf32>,
    %c1_i32 = arith.constant 1 : i32
    %239 = arith.cmpi eq, %arg1, %c1_i32 : i32
    %240 = arith.extui %239 : i1 to i32
    %c0_i32_93 = arith.constant 0 : i32
    %241 = arith.cmpi ne, %240, %c0_i32_93 : i32
    scf.if %241 {
      %c0_152 = arith.constant 0 : index
      %c0_153 = arith.constant 0 : index
      %455 = vector.load %arg7[%c0_152, %c0_153] : memref<1x32xf32, #tpu.memory_space<vmem>>, vector<1x32xf32>
      %c0_154 = arith.constant 0 : index
      %c0_155 = arith.constant 0 : index
      %456 = vector.load %arg8[%c0_154, %c0_155] : memref<1x32xf32, #tpu.memory_space<vmem>>, vector<1x32xf32>
      %cst_156 = arith.constant dense<0.000000e+00> : vector<8xf32>
      %457 = vector.multi_reduction <add>, %235, %cst_156 [1] : vector<8x32xf32> to vector<8xf32>
      %458 = vector.shape_cast %457 : vector<8xf32> to vector<8x1xf32>
      %cst_157 = arith.constant 3.200000e+01 : f32
      %459 = vector.broadcast %cst_157 : f32 to vector<8x1xf32>
      %460 = arith.divf %458, %459 : vector<8x1xf32>
      %461 = vector.broadcast %460 : vector<8x1xf32> to vector<8x32xf32>
      %462 = arith.subf %235, %461 : vector<8x32xf32>
      %463 = arith.mulf %462, %462 : vector<8x32xf32>
      %cst_158 = arith.constant dense<0.000000e+00> : vector<8xf32>
      %464 = vector.multi_reduction <add>, %463, %cst_158 [1] : vector<8x32xf32> to vector<8xf32>
      %465 = vector.shape_cast %464 : vector<8xf32> to vector<8x1xf32>
      %cst_159 = arith.constant 3.200000e+01 : f32
      %466 = vector.broadcast %cst_159 : f32 to vector<8x1xf32>
      %467 = arith.divf %465, %466 : vector<8x1xf32>
      %468 = vector.broadcast %460 : vector<8x1xf32> to vector<8x32xf32>
      %469 = arith.subf %235, %468 : vector<8x32xf32>
      %cst_160 = arith.constant 9.99999974E-6 : f32
      %470 = vector.broadcast %cst_160 : f32 to vector<8x1xf32>
      %471 = arith.addf %467, %470 : vector<8x1xf32>
      %472 = math.rsqrt %471 : vector<8x1xf32>
      %473 = vector.broadcast %472 : vector<8x1xf32> to vector<8x32xf32>
      %474 = arith.mulf %469, %473 : vector<8x32xf32>
      %475 = vector.broadcast %455 : vector<1x32xf32> to vector<8x32xf32>
      %476 = arith.mulf %474, %475 : vector<8x32xf32>
      %477 = vector.broadcast %456 : vector<1x32xf32> to vector<8x32xf32>
      %478 = arith.addf %476, %477 : vector<8x32xf32>
      %c0_161 = arith.constant 0 : index
      %c0_162 = arith.constant 0 : index
      %c0_163 = arith.constant 0 : index
      %479 = vector.load %arg4[%c0_161, %c0_162, %c0_163] : memref<2x1x8xf32, #tpu.memory_space<vmem>>, vector<1x1x8xf32>
      %480 = vector.shape_cast %479 : vector<1x1x8xf32> to vector<1x8xf32>
      %cst_164 = arith.constant dense<0.000000e+00> : vector<1x32xf32>
      %481 = tpu.matmul %480, %478, %cst_164 {dimension_numbers = #tpu.dot_dimension_numbers<[1], [0], [0], [1], [0, 0, 1, 1], [], []>} : vector<1x8xf32>, vector<8x32xf32>, vector<1x32xf32> -> vector<1x32xf32>
      %cst_165 = arith.constant dense<0.000000e+00> : vector<1xf32>
      %482 = vector.multi_reduction <add>, %480, %cst_165 [1] : vector<1x8xf32> to vector<1xf32>
      %483 = vector.shape_cast %482 : vector<1xf32> to vector<1x1xf32>
      %cst_166 = arith.constant 1.000000e+00 : f32
      %484 = vector.broadcast %cst_166 : f32 to vector<1x1xf32>
      %485 = arith.maximumf %483, %484 : vector<1x1xf32>
      %486 = vector.broadcast %485 : vector<1x1xf32> to vector<1x32xf32>
      %487 = arith.divf %481, %486 : vector<1x32xf32>
      %c0_167 = arith.constant 0 : index
      %c0_168 = arith.constant 0 : index
      %c0_169 = arith.constant 0 : index
      %488 = vector.load %arg21[%c0_167, %c0_168, %c0_169] : memref<2x1x32xf32, #tpu.memory_space<vmem>>, vector<1x1x32xf32>
      %489 = vector.shape_cast %488 : vector<1x1x32xf32> to vector<1x32xf32>
      %490 = vector.shape_cast %487 : vector<1x32xf32> to vector<1x1x32xf32>
      tpu.vector_store %arg21[%c0_167, %c0_168, %c0_169], %490 {strides = array<i32>} : memref<2x1x32xf32, #tpu.memory_space<vmem>>, vector<1x1x32xf32>,
    } else {
    }
    %c1 = arith.constant 1 : index
    %c0_94 = arith.constant 0 : index
    %c0_95 = arith.constant 0 : index
    %242 = vector.load %arg22[%c1, %c0_94, %c0_95] : memref<2x8x32xf32, #tpu.memory_space<vmem>>, vector<1x8x32xf32>
    %243 = vector.shape_cast %242 : vector<1x8x32xf32> to vector<8x32xf32>
    %c1_96 = arith.constant 1 : index
    %c0_97 = arith.constant 0 : index
    %c0_98 = arith.constant 0 : index
    %244 = vector.load %arg3[%c1_96, %c0_97, %c0_98] : memref<2x1x8xf32, #tpu.memory_space<vmem>>, vector<1x1x8xf32>
    %245 = vector.shape_cast %244 : vector<1x1x8xf32> to vector<1x8xf32>
    %cst_99 = arith.constant dense<0.000000e+00> : vector<8xf32>
    %246 = vector.multi_reduction <add>, %243, %cst_99 [1] : vector<8x32xf32> to vector<8xf32>
    %247 = vector.shape_cast %246 : vector<8xf32> to vector<8x1xf32>
    %cst_100 = arith.constant 3.200000e+01 : f32
    %248 = vector.broadcast %cst_100 : f32 to vector<8x1xf32>
    %249 = arith.divf %247, %248 : vector<8x1xf32>
    %250 = vector.broadcast %249 : vector<8x1xf32> to vector<8x32xf32>
    %251 = arith.subf %243, %250 : vector<8x32xf32>
    %252 = arith.mulf %251, %251 : vector<8x32xf32>
    %cst_101 = arith.constant dense<0.000000e+00> : vector<8xf32>
    %253 = vector.multi_reduction <add>, %252, %cst_101 [1] : vector<8x32xf32> to vector<8xf32>
    %254 = vector.shape_cast %253 : vector<8xf32> to vector<8x1xf32>
    %cst_102 = arith.constant 3.200000e+01 : f32
    %255 = vector.broadcast %cst_102 : f32 to vector<8x1xf32>
    %256 = arith.divf %254, %255 : vector<8x1xf32>
    %257 = vector.broadcast %249 : vector<8x1xf32> to vector<8x32xf32>
    %258 = arith.subf %243, %257 : vector<8x32xf32>
    %cst_103 = arith.constant 9.99999974E-6 : f32
    %259 = vector.broadcast %cst_103 : f32 to vector<8x1xf32>
    %260 = arith.addf %256, %259 : vector<8x1xf32>
    %261 = math.rsqrt %260 : vector<8x1xf32>
    %262 = vector.broadcast %261 : vector<8x1xf32> to vector<8x32xf32>
    %263 = arith.mulf %258, %262 : vector<8x32xf32>
    %264 = vector.broadcast %6 : vector<1x32xf32> to vector<8x32xf32>
    %265 = arith.mulf %263, %264 : vector<8x32xf32>
    %266 = vector.broadcast %8 : vector<1x32xf32> to vector<8x32xf32>
    %267 = arith.addf %265, %266 : vector<8x32xf32>
    %268 = arith.truncf %267 : vector<8x32xf32> to vector<8x32xbf16>
    %cst_104 = arith.constant dense<0.000000e+00> : vector<8x96xf32>
    %269 = tpu.matmul %268, %14, %cst_104 {dimension_numbers = #tpu.dot_dimension_numbers<[1], [0], [0], [1], [0, 0, 1, 1], [], []>} : vector<8x32xbf16>, vector<32x96xbf16>, vector<8x96xf32> -> vector<8x96xf32>
    %270 = vector.broadcast %16 : vector<1x96xf32> to vector<8x96xf32>
    %271 = arith.addf %269, %270 : vector<8x96xf32>
    %272 = vector.extract_strided_slice %271 {offsets = [0, 0], sizes = [8, 32], strides = [1, 1]} : vector<8x96xf32> to vector<8x32xf32>
    %273 = vector.extract_strided_slice %271 {offsets = [0, 32], sizes = [8, 32], strides = [1, 1]} : vector<8x96xf32> to vector<8x32xf32>
    %274 = vector.extract_strided_slice %271 {offsets = [0, 64], sizes = [8, 32], strides = [1, 1]} : vector<8x96xf32> to vector<8x32xf32>
    %275 = arith.mulf %272, %3 : vector<8x32xf32>
    %276 = vector.extract_strided_slice %272 {offsets = [0, 16], sizes = [8, 16], strides = [1, 1]} : vector<8x32xf32> to vector<8x16xf32>
    %277 = vector.extract_strided_slice %272 {offsets = [0, 0], sizes = [8, 16], strides = [1, 1]} : vector<8x32xf32> to vector<8x16xf32>
    %278 = tpu.concatenate %276, %277 in 1 : vector<8x16xf32>, vector<8x16xf32> -> vector<8x32xf32>
    %279 = arith.mulf %278, %4 : vector<8x32xf32>
    %280 = arith.addf %275, %279 : vector<8x32xf32>
    %281 = arith.mulf %273, %3 : vector<8x32xf32>
    %282 = vector.extract_strided_slice %273 {offsets = [0, 16], sizes = [8, 16], strides = [1, 1]} : vector<8x32xf32> to vector<8x16xf32>
    %283 = vector.extract_strided_slice %273 {offsets = [0, 0], sizes = [8, 16], strides = [1, 1]} : vector<8x32xf32> to vector<8x16xf32>
    %284 = tpu.concatenate %282, %283 in 1 : vector<8x16xf32>, vector<8x16xf32> -> vector<8x32xf32>
    %285 = arith.mulf %284, %4 : vector<8x32xf32>
    %286 = arith.addf %281, %285 : vector<8x32xf32>
    %287 = vector.extract_strided_slice %280 {offsets = [0, 0], sizes = [8, 4], strides = [1, 1]} : vector<8x32xf32> to vector<8x4xf32>
    %288 = arith.truncf %287 : vector<8x4xf32> to vector<8x4xbf16>
    %289 = vector.extract_strided_slice %286 {offsets = [0, 0], sizes = [8, 4], strides = [1, 1]} : vector<8x32xf32> to vector<8x4xf32>
    %290 = arith.truncf %289 : vector<8x4xf32> to vector<8x4xbf16>
    %cst_105 = arith.constant dense<0.000000e+00> : vector<8x8xf32>
    %291 = tpu.matmul %288, %290, %cst_105 {dimension_numbers = #tpu.dot_dimension_numbers<[1], [1], [0], [0], [0, 0, 1, 0], [], []>} : vector<8x4xbf16>, vector<8x4xbf16>, vector<8x8xf32> -> vector<8x8xf32>
    %292 = vector.extract_strided_slice %280 {offsets = [0, 16], sizes = [8, 4], strides = [1, 1]} : vector<8x32xf32> to vector<8x4xf32>
    %293 = arith.truncf %292 : vector<8x4xf32> to vector<8x4xbf16>
    %294 = vector.extract_strided_slice %286 {offsets = [0, 16], sizes = [8, 4], strides = [1, 1]} : vector<8x32xf32> to vector<8x4xf32>
    %295 = arith.truncf %294 : vector<8x4xf32> to vector<8x4xbf16>
    %cst_106 = arith.constant dense<0.000000e+00> : vector<8x8xf32>
    %296 = tpu.matmul %293, %295, %cst_106 {dimension_numbers = #tpu.dot_dimension_numbers<[1], [1], [0], [0], [0, 0, 1, 0], [], []>} : vector<8x4xbf16>, vector<8x4xbf16>, vector<8x8xf32> -> vector<8x8xf32>
    %297 = arith.addf %291, %296 : vector<8x8xf32>
    %298 = vector.broadcast %245 : vector<1x8xf32> to vector<8x8xf32>
    %299 = arith.addf %297, %298 : vector<8x8xf32>
    %cst_107 = arith.constant dense<0xFF800000> : vector<8xf32>
    %300 = vector.multi_reduction <maximumf>, %299, %cst_107 [1] : vector<8x8xf32> to vector<8xf32>
    %301 = vector.shape_cast %300 : vector<8xf32> to vector<8x1xf32>
    %302 = vector.broadcast %301 : vector<8x1xf32> to vector<8x8xf32>
    %303 = arith.subf %299, %302 : vector<8x8xf32>
    %304 = math.exp %303 : vector<8x8xf32>
    %cst_108 = arith.constant dense<0.000000e+00> : vector<8xf32>
    %305 = vector.multi_reduction <add>, %304, %cst_108 [1] : vector<8x8xf32> to vector<8xf32>
    %306 = vector.shape_cast %305 : vector<8xf32> to vector<8x1xf32>
    %307 = tpu.reciprocal %306 {approx = true} : vector<8x1xf32> -> vector<8x1xf32>
    %308 = vector.extract_strided_slice %274 {offsets = [0, 0], sizes = [8, 8], strides = [1, 1]} : vector<8x32xf32> to vector<8x8xf32>
    %309 = arith.truncf %308 : vector<8x8xf32> to vector<8x8xbf16>
    %310 = arith.truncf %304 : vector<8x8xf32> to vector<8x8xbf16>
    %cst_109 = arith.constant dense<0.000000e+00> : vector<8x8xf32>
    %311 = tpu.matmul %310, %309, %cst_109 {dimension_numbers = #tpu.dot_dimension_numbers<[1], [0], [0], [1], [0, 0, 1, 1], [], []>} : vector<8x8xbf16>, vector<8x8xbf16>, vector<8x8xf32> -> vector<8x8xf32>
    %312 = vector.broadcast %307 : vector<8x1xf32> to vector<8x8xf32>
    %313 = arith.mulf %311, %312 : vector<8x8xf32>
    %c0_110 = arith.constant 0 : index
    %c0_111 = arith.constant 0 : index
    %314 = vector.load %arg23[%c0_110, %c0_111] : memref<8x32xf32, #tpu.memory_space<vmem>>, vector<8x8xf32>
    tpu.vector_store %arg23[%c0_110, %c0_111], %313 {strides = array<i32>} : memref<8x32xf32, #tpu.memory_space<vmem>>, vector<8x8xf32>,
    %315 = vector.extract_strided_slice %280 {offsets = [0, 4], sizes = [8, 4], strides = [1, 1]} : vector<8x32xf32> to vector<8x4xf32>
    %316 = arith.truncf %315 : vector<8x4xf32> to vector<8x4xbf16>
    %317 = vector.extract_strided_slice %286 {offsets = [0, 4], sizes = [8, 4], strides = [1, 1]} : vector<8x32xf32> to vector<8x4xf32>
    %318 = arith.truncf %317 : vector<8x4xf32> to vector<8x4xbf16>
    %cst_112 = arith.constant dense<0.000000e+00> : vector<8x8xf32>
    %319 = tpu.matmul %316, %318, %cst_112 {dimension_numbers = #tpu.dot_dimension_numbers<[1], [1], [0], [0], [0, 0, 1, 0], [], []>} : vector<8x4xbf16>, vector<8x4xbf16>, vector<8x8xf32> -> vector<8x8xf32>
    %320 = vector.extract_strided_slice %280 {offsets = [0, 20], sizes = [8, 4], strides = [1, 1]} : vector<8x32xf32> to vector<8x4xf32>
    %321 = arith.truncf %320 : vector<8x4xf32> to vector<8x4xbf16>
    %322 = vector.extract_strided_slice %286 {offsets = [0, 20], sizes = [8, 4], strides = [1, 1]} : vector<8x32xf32> to vector<8x4xf32>
    %323 = arith.truncf %322 : vector<8x4xf32> to vector<8x4xbf16>
    %cst_113 = arith.constant dense<0.000000e+00> : vector<8x8xf32>
    %324 = tpu.matmul %321, %323, %cst_113 {dimension_numbers = #tpu.dot_dimension_numbers<[1], [1], [0], [0], [0, 0, 1, 0], [], []>} : vector<8x4xbf16>, vector<8x4xbf16>, vector<8x8xf32> -> vector<8x8xf32>
    %325 = arith.addf %319, %324 : vector<8x8xf32>
    %326 = vector.broadcast %245 : vector<1x8xf32> to vector<8x8xf32>
    %327 = arith.addf %325, %326 : vector<8x8xf32>
    %cst_114 = arith.constant dense<0xFF800000> : vector<8xf32>
    %328 = vector.multi_reduction <maximumf>, %327, %cst_114 [1] : vector<8x8xf32> to vector<8xf32>
    %329 = vector.shape_cast %328 : vector<8xf32> to vector<8x1xf32>
    %330 = vector.broadcast %329 : vector<8x1xf32> to vector<8x8xf32>
    %331 = arith.subf %327, %330 : vector<8x8xf32>
    %332 = math.exp %331 : vector<8x8xf32>
    %cst_115 = arith.constant dense<0.000000e+00> : vector<8xf32>
    %333 = vector.multi_reduction <add>, %332, %cst_115 [1] : vector<8x8xf32> to vector<8xf32>
    %334 = vector.shape_cast %333 : vector<8xf32> to vector<8x1xf32>
    %335 = tpu.reciprocal %334 {approx = true} : vector<8x1xf32> -> vector<8x1xf32>
    %336 = vector.extract_strided_slice %274 {offsets = [0, 8], sizes = [8, 8], strides = [1, 1]} : vector<8x32xf32> to vector<8x8xf32>
    %337 = arith.truncf %336 : vector<8x8xf32> to vector<8x8xbf16>
    %338 = arith.truncf %332 : vector<8x8xf32> to vector<8x8xbf16>
    %cst_116 = arith.constant dense<0.000000e+00> : vector<8x8xf32>
    %339 = tpu.matmul %338, %337, %cst_116 {dimension_numbers = #tpu.dot_dimension_numbers<[1], [0], [0], [1], [0, 0, 1, 1], [], []>} : vector<8x8xbf16>, vector<8x8xbf16>, vector<8x8xf32> -> vector<8x8xf32>
    %340 = vector.broadcast %335 : vector<8x1xf32> to vector<8x8xf32>
    %341 = arith.mulf %339, %340 : vector<8x8xf32>
    %c0_117 = arith.constant 0 : index
    %c8_118 = arith.constant 8 : index
    %342 = vector.load %arg23[%c0_117, %c8_118] : memref<8x32xf32, #tpu.memory_space<vmem>>, vector<8x8xf32>
    tpu.vector_store %arg23[%c0_117, %c8_118], %341 {strides = array<i32>} : memref<8x32xf32, #tpu.memory_space<vmem>>, vector<8x8xf32>,
    %343 = vector.extract_strided_slice %280 {offsets = [0, 8], sizes = [8, 4], strides = [1, 1]} : vector<8x32xf32> to vector<8x4xf32>
    %344 = arith.truncf %343 : vector<8x4xf32> to vector<8x4xbf16>
    %345 = vector.extract_strided_slice %286 {offsets = [0, 8], sizes = [8, 4], strides = [1, 1]} : vector<8x32xf32> to vector<8x4xf32>
    %346 = arith.truncf %345 : vector<8x4xf32> to vector<8x4xbf16>
    %cst_119 = arith.constant dense<0.000000e+00> : vector<8x8xf32>
    %347 = tpu.matmul %344, %346, %cst_119 {dimension_numbers = #tpu.dot_dimension_numbers<[1], [1], [0], [0], [0, 0, 1, 0], [], []>} : vector<8x4xbf16>, vector<8x4xbf16>, vector<8x8xf32> -> vector<8x8xf32>
    %348 = vector.extract_strided_slice %280 {offsets = [0, 24], sizes = [8, 4], strides = [1, 1]} : vector<8x32xf32> to vector<8x4xf32>
    %349 = arith.truncf %348 : vector<8x4xf32> to vector<8x4xbf16>
    %350 = vector.extract_strided_slice %286 {offsets = [0, 24], sizes = [8, 4], strides = [1, 1]} : vector<8x32xf32> to vector<8x4xf32>
    %351 = arith.truncf %350 : vector<8x4xf32> to vector<8x4xbf16>
    %cst_120 = arith.constant dense<0.000000e+00> : vector<8x8xf32>
    %352 = tpu.matmul %349, %351, %cst_120 {dimension_numbers = #tpu.dot_dimension_numbers<[1], [1], [0], [0], [0, 0, 1, 0], [], []>} : vector<8x4xbf16>, vector<8x4xbf16>, vector<8x8xf32> -> vector<8x8xf32>
    %353 = arith.addf %347, %352 : vector<8x8xf32>
    %354 = vector.broadcast %245 : vector<1x8xf32> to vector<8x8xf32>
    %355 = arith.addf %353, %354 : vector<8x8xf32>
    %cst_121 = arith.constant dense<0xFF800000> : vector<8xf32>
    %356 = vector.multi_reduction <maximumf>, %355, %cst_121 [1] : vector<8x8xf32> to vector<8xf32>
    %357 = vector.shape_cast %356 : vector<8xf32> to vector<8x1xf32>
    %358 = vector.broadcast %357 : vector<8x1xf32> to vector<8x8xf32>
    %359 = arith.subf %355, %358 : vector<8x8xf32>
    %360 = math.exp %359 : vector<8x8xf32>
    %cst_122 = arith.constant dense<0.000000e+00> : vector<8xf32>
    %361 = vector.multi_reduction <add>, %360, %cst_122 [1] : vector<8x8xf32> to vector<8xf32>
    %362 = vector.shape_cast %361 : vector<8xf32> to vector<8x1xf32>
    %363 = tpu.reciprocal %362 {approx = true} : vector<8x1xf32> -> vector<8x1xf32>
    %364 = vector.extract_strided_slice %274 {offsets = [0, 16], sizes = [8, 8], strides = [1, 1]} : vector<8x32xf32> to vector<8x8xf32>
    %365 = arith.truncf %364 : vector<8x8xf32> to vector<8x8xbf16>
    %366 = arith.truncf %360 : vector<8x8xf32> to vector<8x8xbf16>
    %cst_123 = arith.constant dense<0.000000e+00> : vector<8x8xf32>
    %367 = tpu.matmul %366, %365, %cst_123 {dimension_numbers = #tpu.dot_dimension_numbers<[1], [0], [0], [1], [0, 0, 1, 1], [], []>} : vector<8x8xbf16>, vector<8x8xbf16>, vector<8x8xf32> -> vector<8x8xf32>
    %368 = vector.broadcast %363 : vector<8x1xf32> to vector<8x8xf32>
    %369 = arith.mulf %367, %368 : vector<8x8xf32>
    %c0_124 = arith.constant 0 : index
    %c16_125 = arith.constant 16 : index
    %370 = vector.load %arg23[%c0_124, %c16_125] : memref<8x32xf32, #tpu.memory_space<vmem>>, vector<8x8xf32>
    tpu.vector_store %arg23[%c0_124, %c16_125], %369 {strides = array<i32>} : memref<8x32xf32, #tpu.memory_space<vmem>>, vector<8x8xf32>,
    %371 = vector.extract_strided_slice %280 {offsets = [0, 12], sizes = [8, 4], strides = [1, 1]} : vector<8x32xf32> to vector<8x4xf32>
    %372 = arith.truncf %371 : vector<8x4xf32> to vector<8x4xbf16>
    %373 = vector.extract_strided_slice %286 {offsets = [0, 12], sizes = [8, 4], strides = [1, 1]} : vector<8x32xf32> to vector<8x4xf32>
    %374 = arith.truncf %373 : vector<8x4xf32> to vector<8x4xbf16>
    %cst_126 = arith.constant dense<0.000000e+00> : vector<8x8xf32>
    %375 = tpu.matmul %372, %374, %cst_126 {dimension_numbers = #tpu.dot_dimension_numbers<[1], [1], [0], [0], [0, 0, 1, 0], [], []>} : vector<8x4xbf16>, vector<8x4xbf16>, vector<8x8xf32> -> vector<8x8xf32>
    %376 = vector.extract_strided_slice %280 {offsets = [0, 28], sizes = [8, 4], strides = [1, 1]} : vector<8x32xf32> to vector<8x4xf32>
    %377 = arith.truncf %376 : vector<8x4xf32> to vector<8x4xbf16>
    %378 = vector.extract_strided_slice %286 {offsets = [0, 28], sizes = [8, 4], strides = [1, 1]} : vector<8x32xf32> to vector<8x4xf32>
    %379 = arith.truncf %378 : vector<8x4xf32> to vector<8x4xbf16>
    %cst_127 = arith.constant dense<0.000000e+00> : vector<8x8xf32>
    %380 = tpu.matmul %377, %379, %cst_127 {dimension_numbers = #tpu.dot_dimension_numbers<[1], [1], [0], [0], [0, 0, 1, 0], [], []>} : vector<8x4xbf16>, vector<8x4xbf16>, vector<8x8xf32> -> vector<8x8xf32>
    %381 = arith.addf %375, %380 : vector<8x8xf32>
    %382 = vector.broadcast %245 : vector<1x8xf32> to vector<8x8xf32>
    %383 = arith.addf %381, %382 : vector<8x8xf32>
    %cst_128 = arith.constant dense<0xFF800000> : vector<8xf32>
    %384 = vector.multi_reduction <maximumf>, %383, %cst_128 [1] : vector<8x8xf32> to vector<8xf32>
    %385 = vector.shape_cast %384 : vector<8xf32> to vector<8x1xf32>
    %386 = vector.broadcast %385 : vector<8x1xf32> to vector<8x8xf32>
    %387 = arith.subf %383, %386 : vector<8x8xf32>
    %388 = math.exp %387 : vector<8x8xf32>
    %cst_129 = arith.constant dense<0.000000e+00> : vector<8xf32>
    %389 = vector.multi_reduction <add>, %388, %cst_129 [1] : vector<8x8xf32> to vector<8xf32>
    %390 = vector.shape_cast %389 : vector<8xf32> to vector<8x1xf32>
    %391 = tpu.reciprocal %390 {approx = true} : vector<8x1xf32> -> vector<8x1xf32>
    %392 = vector.extract_strided_slice %274 {offsets = [0, 24], sizes = [8, 8], strides = [1, 1]} : vector<8x32xf32> to vector<8x8xf32>
    %393 = arith.truncf %392 : vector<8x8xf32> to vector<8x8xbf16>
    %394 = arith.truncf %388 : vector<8x8xf32> to vector<8x8xbf16>
    %cst_130 = arith.constant dense<0.000000e+00> : vector<8x8xf32>
    %395 = tpu.matmul %394, %393, %cst_130 {dimension_numbers = #tpu.dot_dimension_numbers<[1], [0], [0], [1], [0, 0, 1, 1], [], []>} : vector<8x8xbf16>, vector<8x8xbf16>, vector<8x8xf32> -> vector<8x8xf32>
    %396 = vector.broadcast %391 : vector<8x1xf32> to vector<8x8xf32>
    %397 = arith.mulf %395, %396 : vector<8x8xf32>
    %c0_131 = arith.constant 0 : index
    %c24_132 = arith.constant 24 : index
    %398 = vector.load %arg23[%c0_131, %c24_132] : memref<8x32xf32, #tpu.memory_space<vmem>>, vector<8x8xf32>
    tpu.vector_store %arg23[%c0_131, %c24_132], %397 {strides = array<i32>} : memref<8x32xf32, #tpu.memory_space<vmem>>, vector<8x8xf32>,
    %c0_133 = arith.constant 0 : index
    %c0_134 = arith.constant 0 : index
    %399 = vector.load %arg23[%c0_133, %c0_134] : memref<8x32xf32, #tpu.memory_space<vmem>>, vector<8x32xf32>
    %400 = arith.truncf %399 : vector<8x32xf32> to vector<8x32xbf16>
    %cst_135 = arith.constant dense<0.000000e+00> : vector<8x32xf32>
    %401 = tpu.matmul %400, %18, %cst_135 {dimension_numbers = #tpu.dot_dimension_numbers<[1], [0], [0], [1], [0, 0, 1, 1], [], []>} : vector<8x32xbf16>, vector<32x32xbf16>, vector<8x32xf32> -> vector<8x32xf32>
    %402 = arith.addf %243, %401 : vector<8x32xf32>
    %403 = vector.broadcast %20 : vector<1x32xf32> to vector<8x32xf32>
    %404 = arith.addf %402, %403 : vector<8x32xf32>
    %cst_136 = arith.constant dense<0.000000e+00> : vector<8xf32>
    %405 = vector.multi_reduction <add>, %404, %cst_136 [1] : vector<8x32xf32> to vector<8xf32>
    %406 = vector.shape_cast %405 : vector<8xf32> to vector<8x1xf32>
    %cst_137 = arith.constant 3.200000e+01 : f32
    %407 = vector.broadcast %cst_137 : f32 to vector<8x1xf32>
    %408 = arith.divf %406, %407 : vector<8x1xf32>
    %409 = vector.broadcast %408 : vector<8x1xf32> to vector<8x32xf32>
    %410 = arith.subf %404, %409 : vector<8x32xf32>
    %411 = arith.mulf %410, %410 : vector<8x32xf32>
    %cst_138 = arith.constant dense<0.000000e+00> : vector<8xf32>
    %412 = vector.multi_reduction <add>, %411, %cst_138 [1] : vector<8x32xf32> to vector<8xf32>
    %413 = vector.shape_cast %412 : vector<8xf32> to vector<8x1xf32>
    %cst_139 = arith.constant 3.200000e+01 : f32
    %414 = vector.broadcast %cst_139 : f32 to vector<8x1xf32>
    %415 = arith.divf %413, %414 : vector<8x1xf32>
    %416 = vector.broadcast %408 : vector<8x1xf32> to vector<8x32xf32>
    %417 = arith.subf %404, %416 : vector<8x32xf32>
    %cst_140 = arith.constant 9.99999974E-6 : f32
    %418 = vector.broadcast %cst_140 : f32 to vector<8x1xf32>
    %419 = arith.addf %415, %418 : vector<8x1xf32>
    %420 = math.rsqrt %419 : vector<8x1xf32>
    %421 = vector.broadcast %420 : vector<8x1xf32> to vector<8x32xf32>
    %422 = arith.mulf %417, %421 : vector<8x32xf32>
    %423 = vector.broadcast %10 : vector<1x32xf32> to vector<8x32xf32>
    %424 = arith.mulf %422, %423 : vector<8x32xf32>
    %425 = vector.broadcast %12 : vector<1x32xf32> to vector<8x32xf32>
    %426 = arith.addf %424, %425 : vector<8x32xf32>
    %427 = arith.truncf %426 : vector<8x32xf32> to vector<8x32xbf16>
    %cst_141 = arith.constant dense<0.000000e+00> : vector<8x128xf32>
    %428 = tpu.matmul %427, %22, %cst_141 {dimension_numbers = #tpu.dot_dimension_numbers<[1], [0], [0], [1], [0, 0, 1, 1], [], []>} : vector<8x32xbf16>, vector<32x128xbf16>, vector<8x128xf32> -> vector<8x128xf32>
    %429 = vector.broadcast %24 : vector<1x128xf32> to vector<8x128xf32>
    %430 = arith.addf %428, %429 : vector<8x128xf32>
    %431 = arith.mulf %430, %430 : vector<8x128xf32>
    %432 = arith.mulf %430, %431 : vector<8x128xf32>
    %cst_142 = arith.constant 4.471500e-02 : f32
    %433 = vector.broadcast %cst_142 : f32 to vector<8x128xf32>
    %434 = arith.mulf %433, %432 : vector<8x128xf32>
    %435 = arith.addf %430, %434 : vector<8x128xf32>
    %cst_143 = arith.constant 0.797884583 : f32
    %436 = vector.broadcast %cst_143 : f32 to vector<8x128xf32>
    %437 = arith.mulf %436, %435 : vector<8x128xf32>
    %438 = math.tanh %437 : vector<8x128xf32>
    %cst_144 = arith.constant 1.000000e+00 : f32
    %439 = vector.broadcast %cst_144 : f32 to vector<8x128xf32>
    %440 = arith.addf %439, %438 : vector<8x128xf32>
    %cst_145 = arith.constant 5.000000e-01 : f32
    %441 = vector.broadcast %cst_145 : f32 to vector<8x128xf32>
    %442 = arith.mulf %441, %440 : vector<8x128xf32>
    %443 = arith.mulf %430, %442 : vector<8x128xf32>
    %444 = arith.truncf %443 : vector<8x128xf32> to vector<8x128xbf16>
    %cst_146 = arith.constant dense<0.000000e+00> : vector<8x32xf32>
    %445 = tpu.matmul %444, %26, %cst_146 {dimension_numbers = #tpu.dot_dimension_numbers<[1], [0], [0], [1], [0, 0, 1, 1], [], []>} : vector<8x128xbf16>, vector<128x32xbf16>, vector<8x32xf32> -> vector<8x32xf32>
    %446 = arith.addf %404, %445 : vector<8x32xf32>
    %447 = vector.broadcast %28 : vector<1x32xf32> to vector<8x32xf32>
    %448 = arith.addf %446, %447 : vector<8x32xf32>
    %c1_147 = arith.constant 1 : index
    %c0_148 = arith.constant 0 : index
    %c0_149 = arith.constant 0 : index
    %449 = vector.load %arg22[%c1_147, %c0_148, %c0_149] : memref<2x8x32xf32, #tpu.memory_space<vmem>>, vector<1x8x32xf32>
    %450 = vector.shape_cast %449 : vector<1x8x32xf32> to vector<8x32xf32>
    %451 = vector.shape_cast %448 : vector<8x32xf32> to vector<1x8x32xf32>
    tpu.vector_store %arg22[%c1_147, %c0_148, %c0_149], %451 {strides = array<i32>} : memref<2x8x32xf32, #tpu.memory_space<vmem>>, vector<1x8x32xf32>,
    %c1_i32_150 = arith.constant 1 : i32
    %452 = arith.cmpi eq, %arg1, %c1_i32_150 : i32
    %453 = arith.extui %452 : i1 to i32
    %c0_i32_151 = arith.constant 0 : i32
    %454 = arith.cmpi ne, %453, %c0_i32_151 : i32
    scf.if %454 {
      %c0_152 = arith.constant 0 : index
      %c0_153 = arith.constant 0 : index
      %455 = vector.load %arg7[%c0_152, %c0_153] : memref<1x32xf32, #tpu.memory_space<vmem>>, vector<1x32xf32>
      %c0_154 = arith.constant 0 : index
      %c0_155 = arith.constant 0 : index
      %456 = vector.load %arg8[%c0_154, %c0_155] : memref<1x32xf32, #tpu.memory_space<vmem>>, vector<1x32xf32>
      %cst_156 = arith.constant dense<0.000000e+00> : vector<8xf32>
      %457 = vector.multi_reduction <add>, %448, %cst_156 [1] : vector<8x32xf32> to vector<8xf32>
      %458 = vector.shape_cast %457 : vector<8xf32> to vector<8x1xf32>
      %cst_157 = arith.constant 3.200000e+01 : f32
      %459 = vector.broadcast %cst_157 : f32 to vector<8x1xf32>
      %460 = arith.divf %458, %459 : vector<8x1xf32>
      %461 = vector.broadcast %460 : vector<8x1xf32> to vector<8x32xf32>
      %462 = arith.subf %448, %461 : vector<8x32xf32>
      %463 = arith.mulf %462, %462 : vector<8x32xf32>
      %cst_158 = arith.constant dense<0.000000e+00> : vector<8xf32>
      %464 = vector.multi_reduction <add>, %463, %cst_158 [1] : vector<8x32xf32> to vector<8xf32>
      %465 = vector.shape_cast %464 : vector<8xf32> to vector<8x1xf32>
      %cst_159 = arith.constant 3.200000e+01 : f32
      %466 = vector.broadcast %cst_159 : f32 to vector<8x1xf32>
      %467 = arith.divf %465, %466 : vector<8x1xf32>
      %468 = vector.broadcast %460 : vector<8x1xf32> to vector<8x32xf32>
      %469 = arith.subf %448, %468 : vector<8x32xf32>
      %cst_160 = arith.constant 9.99999974E-6 : f32
      %470 = vector.broadcast %cst_160 : f32 to vector<8x1xf32>
      %471 = arith.addf %467, %470 : vector<8x1xf32>
      %472 = math.rsqrt %471 : vector<8x1xf32>
      %473 = vector.broadcast %472 : vector<8x1xf32> to vector<8x32xf32>
      %474 = arith.mulf %469, %473 : vector<8x32xf32>
      %475 = vector.broadcast %455 : vector<1x32xf32> to vector<8x32xf32>
      %476 = arith.mulf %474, %475 : vector<8x32xf32>
      %477 = vector.broadcast %456 : vector<1x32xf32> to vector<8x32xf32>
      %478 = arith.addf %476, %477 : vector<8x32xf32>
      %c1_161 = arith.constant 1 : index
      %c0_162 = arith.constant 0 : index
      %c0_163 = arith.constant 0 : index
      %479 = vector.load %arg4[%c1_161, %c0_162, %c0_163] : memref<2x1x8xf32, #tpu.memory_space<vmem>>, vector<1x1x8xf32>
      %480 = vector.shape_cast %479 : vector<1x1x8xf32> to vector<1x8xf32>
      %cst_164 = arith.constant dense<0.000000e+00> : vector<1x32xf32>
      %481 = tpu.matmul %480, %478, %cst_164 {dimension_numbers = #tpu.dot_dimension_numbers<[1], [0], [0], [1], [0, 0, 1, 1], [], []>} : vector<1x8xf32>, vector<8x32xf32>, vector<1x32xf32> -> vector<1x32xf32>
      %cst_165 = arith.constant dense<0.000000e+00> : vector<1xf32>
      %482 = vector.multi_reduction <add>, %480, %cst_165 [1] : vector<1x8xf32> to vector<1xf32>
      %483 = vector.shape_cast %482 : vector<1xf32> to vector<1x1xf32>
      %cst_166 = arith.constant 1.000000e+00 : f32
      %484 = vector.broadcast %cst_166 : f32 to vector<1x1xf32>
      %485 = arith.maximumf %483, %484 : vector<1x1xf32>
      %486 = vector.broadcast %485 : vector<1x1xf32> to vector<1x32xf32>
      %487 = arith.divf %481, %486 : vector<1x32xf32>
      %c1_167 = arith.constant 1 : index
      %c0_168 = arith.constant 0 : index
      %c0_169 = arith.constant 0 : index
      %488 = vector.load %arg21[%c1_167, %c0_168, %c0_169] : memref<2x1x32xf32, #tpu.memory_space<vmem>>, vector<1x1x32xf32>
      %489 = vector.shape_cast %488 : vector<1x1x32xf32> to vector<1x32xf32>
      %490 = vector.shape_cast %487 : vector<1x32xf32> to vector<1x1x32xf32>
      tpu.vector_store %arg21[%c1_167, %c0_168, %c0_169], %490 {strides = array<i32>} : memref<2x1x32xf32, #tpu.memory_space<vmem>>, vector<1x1x32xf32>,
    } else {
    }
    return
  }
  func.func @transform_0(%arg0: i32, %arg1: i32) -> (i32, i32, i32) {
    %c0_i32 = arith.constant 0 : i32
    %c0_i32_0 = arith.constant 0 : i32
    %c0_i32_1 = arith.constant 0 : i32
    return %arg0, %c0_i32, %c0_i32_0 : i32, i32, i32
  }
  func.func @transform_1(%arg0: i32, %arg1: i32) -> (i32, i32, i32) {
    %c0_i32 = arith.constant 0 : i32
    %c0_i32_0 = arith.constant 0 : i32
    %c0_i32_1 = arith.constant 0 : i32
    return %arg0, %c0_i32, %c0_i32_0 : i32, i32, i32
  }
  func.func @transform_2(%arg0: i32, %arg1: i32) -> (i32, i32, i32) {
    %c0_i32 = arith.constant 0 : i32
    %c0_i32_0 = arith.constant 0 : i32
    %c0_i32_1 = arith.constant 0 : i32
    return %arg0, %c0_i32, %c0_i32_0 : i32, i32, i32
  }
  func.func @transform_3(%arg0: i32, %arg1: i32) -> (i32, i32) {
    %c0_i32 = arith.constant 0 : i32
    %c0_i32_0 = arith.constant 0 : i32
    %c0_i32_1 = arith.constant 0 : i32
    return %c0_i32, %c0_i32_0 : i32, i32
  }
  func.func @transform_4(%arg0: i32, %arg1: i32) -> (i32, i32) {
    %c0_i32 = arith.constant 0 : i32
    %c0_i32_0 = arith.constant 0 : i32
    %c0_i32_1 = arith.constant 0 : i32
    return %c0_i32, %c0_i32_0 : i32, i32
  }
  func.func @transform_5(%arg0: i32, %arg1: i32) -> (i32, i32) {
    %c0_i32 = arith.constant 0 : i32
    %c0_i32_0 = arith.constant 0 : i32
    %c0_i32_1 = arith.constant 0 : i32
    return %c0_i32, %c0_i32_0 : i32, i32
  }
  func.func @transform_6(%arg0: i32, %arg1: i32) -> (i32, i32) {
    %c0_i32 = arith.constant 0 : i32
    %c0_i32_0 = arith.constant 0 : i32
    %c0_i32_1 = arith.constant 0 : i32
    return %c0_i32, %c0_i32_0 : i32, i32
  }
  func.func @transform_7(%arg0: i32, %arg1: i32) -> (i32, i32, i32) {
    %c0_i32 = arith.constant 0 : i32
    %c0_i32_0 = arith.constant 0 : i32
    %c0_i32_1 = arith.constant 0 : i32
    return %arg1, %c0_i32, %c0_i32_0 : i32, i32, i32
  }
  func.func @transform_8(%arg0: i32, %arg1: i32) -> (i32, i32, i32) {
    %c0_i32 = arith.constant 0 : i32
    %c0_i32_0 = arith.constant 0 : i32
    %c0_i32_1 = arith.constant 0 : i32
    return %arg1, %c0_i32, %c0_i32_0 : i32, i32, i32
  }
  func.func @transform_9(%arg0: i32, %arg1: i32) -> (i32, i32, i32) {
    %c0_i32 = arith.constant 0 : i32
    %c0_i32_0 = arith.constant 0 : i32
    %c0_i32_1 = arith.constant 0 : i32
    return %arg1, %c0_i32, %c0_i32_0 : i32, i32, i32
  }
  func.func @transform_10(%arg0: i32, %arg1: i32) -> (i32, i32, i32) {
    %c0_i32 = arith.constant 0 : i32
    %c0_i32_0 = arith.constant 0 : i32
    %c0_i32_1 = arith.constant 0 : i32
    return %arg1, %c0_i32, %c0_i32_0 : i32, i32, i32
  }
  func.func @transform_11(%arg0: i32, %arg1: i32) -> (i32, i32, i32) {
    %c0_i32 = arith.constant 0 : i32
    %c0_i32_0 = arith.constant 0 : i32
    %c0_i32_1 = arith.constant 0 : i32
    return %arg1, %c0_i32, %c0_i32_0 : i32, i32, i32
  }
  func.func @transform_12(%arg0: i32, %arg1: i32) -> (i32, i32, i32) {
    %c0_i32 = arith.constant 0 : i32
    %c0_i32_0 = arith.constant 0 : i32
    %c0_i32_1 = arith.constant 0 : i32
    return %arg1, %c0_i32, %c0_i32_0 : i32, i32, i32
  }
  func.func @transform_13(%arg0: i32, %arg1: i32) -> (i32, i32, i32) {
    %c0_i32 = arith.constant 0 : i32
    %c0_i32_0 = arith.constant 0 : i32
    %c0_i32_1 = arith.constant 0 : i32
    return %arg1, %c0_i32, %c0_i32_0 : i32, i32, i32
  }
  func.func @transform_14(%arg0: i32, %arg1: i32) -> (i32, i32, i32) {
    %c0_i32 = arith.constant 0 : i32
    %c0_i32_0 = arith.constant 0 : i32
    %c0_i32_1 = arith.constant 0 : i32
    return %arg1, %c0_i32, %c0_i32_0 : i32, i32, i32
  }
  func.func @transform_15(%arg0: i32, %arg1: i32) -> (i32, i32, i32) {
    %c0_i32 = arith.constant 0 : i32
    %c0_i32_0 = arith.constant 0 : i32
    %c0_i32_1 = arith.constant 0 : i32
    return %arg1, %c0_i32, %c0_i32_0 : i32, i32, i32
  }
  func.func @transform_16(%arg0: i32, %arg1: i32) -> (i32, i32, i32) {
    %c0_i32 = arith.constant 0 : i32
    %c0_i32_0 = arith.constant 0 : i32
    %c0_i32_1 = arith.constant 0 : i32
    return %arg1, %c0_i32, %c0_i32_0 : i32, i32, i32
  }
  func.func @transform_17(%arg0: i32, %arg1: i32) -> (i32, i32, i32) {
    %c0_i32 = arith.constant 0 : i32
    %c0_i32_0 = arith.constant 0 : i32
    %c0_i32_1 = arith.constant 0 : i32
    return %arg1, %c0_i32, %c0_i32_0 : i32, i32, i32
  }
  func.func @transform_18(%arg0: i32, %arg1: i32) -> (i32, i32, i32) {
    %c0_i32 = arith.constant 0 : i32
    %c0_i32_0 = arith.constant 0 : i32
    %c0_i32_1 = arith.constant 0 : i32
    return %arg1, %c0_i32, %c0_i32_0 : i32, i32, i32
  }
  func.func @transform_19(%arg0: i32, %arg1: i32) -> (i32, i32, i32) {
    %c0_i32 = arith.constant 0 : i32
    %c0_i32_0 = arith.constant 0 : i32
    %c0_i32_1 = arith.constant 0 : i32
    return %arg0, %c0_i32, %c0_i32_0 : i32, i32, i32
  }
}

</mosaic_0001>

<llo_original>
// kernel: tpu_custom_call.1
$region0: #{tpu_custom_call.1}
  #allocation0 [shape = 'u32[]', space=smem, size = 0x4, offset = 0x4, fixed_abs, tag = 'smem constant byte address 0x4 - core index']
  #allocation1 [shape = 'u32[144,128]{1,0:T(1,128)}', space=vmem, size = 0x12000, scoped, tag = 'internal scratch']
  #allocation2 [shape = 'f32[2,8,32]{2,1,0:T(8,128)}', space=vmem, size = 0x2000, scoped, tag = 'scratch operand']
  #allocation3 [shape = 'f32[8,32]{1,0:T(8,128)}', space=vmem, size = 0x1000, scoped, tag = 'scratch operand']
  %s0 = inlined_call_operand.vmem [shape: f32[2,8,32], index: 0, kind: input, shape index: {}]
  %s1 = inlined_call_operand.vmem [shape: f32[2,1,8], index: 1, kind: input, shape index: {}]
  %s2 = inlined_call_operand.vmem [shape: f32[2,1,8], index: 2, kind: input, shape index: {}]
  %s3 = inlined_call_operand.vmem [shape: f32[8,32], index: 3, kind: input, shape index: {}]
  %s4 = inlined_call_operand.vmem [shape: f32[8,32], index: 4, kind: input, shape index: {}]
  %s5 = inlined_call_operand.vmem [shape: f32[1,32], index: 5, kind: input, shape index: {}]
  %s6 = inlined_call_operand.vmem [shape: f32[1,32], index: 6, kind: input, shape index: {}]
  %s7 = inlined_call_operand.vmem [shape: f32[2,1,32], index: 7, kind: input, shape index: {}]
  %s8 = inlined_call_operand.vmem [shape: f32[2,1,32], index: 8, kind: input, shape index: {}]
  %s9 = inlined_call_operand.vmem [shape: bf16[2,32,96], index: 9, kind: input, shape index: {}]
  %s10 = inlined_call_operand.vmem [shape: f32[2,1,96], index: 10, kind: input, shape index: {}]
  %s11 = inlined_call_operand.vmem [shape: bf16[2,32,32], index: 11, kind: input, shape index: {}]
  %s12 = inlined_call_operand.vmem [shape: f32[2,1,32], index: 12, kind: input, shape index: {}]
  %s13 = inlined_call_operand.vmem [shape: f32[2,1,32], index: 13, kind: input, shape index: {}]
  %s14 = inlined_call_operand.vmem [shape: f32[2,1,32], index: 14, kind: input, shape index: {}]
  %s15 = inlined_call_operand.vmem [shape: bf16[2,32,128], index: 15, kind: input, shape index: {}]
  %s16 = inlined_call_operand.vmem [shape: f32[2,1,128], index: 16, kind: input, shape index: {}]
  %s17 = inlined_call_operand.vmem [shape: bf16[2,128,32], index: 17, kind: input, shape index: {}]
  %s18 = inlined_call_operand.vmem [shape: f32[2,1,32], index: 18, kind: input, shape index: {}]
  %s19 = inlined_call_operand.hbm [shape: f32[2,1,32], index: 19, kind: output, shape index: {}]
  %s20 = sld [smem:[#allocation0]]
  $region121: #{tpu_custom_call.1} parent=0
    _
  %s22 = ssub.s32 1, %s20
  %s23 = scalar_select 0, %s22, %s20
  $region1: #{tpu_custom_call.1} parent=0
    #allocation4 [shape = 'u8[1024]{0}', space=vmem, size = 0x400, scoped, tag = 'output window, operand 0, single buffered']
    #allocation5 [shape = 's32[2]{0}', space=sflag, size = 0x8, scoped, tag = 'scoped memory for tpu_custom_call.1']
    %24 = vsyncpa [#allocation5], 0
    loop: start=0, step=1, limit=4
    $region2: #{tpu_custom_call.1} parent=1 // loop_pre_header
      _
    $region3: #{tpu_custom_call.1} parent=1 // loop_header
      %s26 = sphi 0, %s30
      %p27 = scmp.ge.s32.totalorder %s26, 4
      %s33 = sphi 0, %s45
      %s34 = sphi 0, %s41
      %s35 = sphi 0, %s33
      %s36 = sphi 0, %s34
      %s37 = sphi 0, %s35
      %s38 = sphi 0, %s36
      %s48 = sphi 0, %s50
      %s51 = sphi 0, %s48
      %s52 = sphi 0, %s51
      %s68 = sphi 0, %s52
      %s74 = sphi 0, %s76
      %s77 = sphi 0, %s74
      %s78 = sphi 0, %s77
      %s94 = sphi 0, %s78
      %s100 = sphi 0, %s102
      %s103 = sphi 0, %s100
      %s104 = sphi 0, %s103
      %s120 = sphi 0, %s104
      %s124 = sphi 0, %s124
      %s126 = sphi 0, %s124
      %s127 = sphi 0, %s126
      %s141 = sphi 0, %s127
      %s145 = sphi 0, %s145
      %s147 = sphi 0, %s145
      %s148 = sphi 0, %s147
      %s162 = sphi 0, %s148
      %s166 = sphi 0, %s166
      %s168 = sphi 0, %s166
      %s169 = sphi 0, %s168
      %s183 = sphi 0, %s169
      %s187 = sphi 0, %s187
      %s189 = sphi 0, %s187
      %s190 = sphi 0, %s189
      %s204 = sphi 0, %s190
      %s210 = sphi 0, %s212
      %s213 = sphi 0, %s210
      %s214 = sphi 0, %s213
      %s230 = sphi 0, %s214
      %s236 = sphi 0, %s238
      %s239 = sphi 0, %s236
      %s240 = sphi 0, %s239
      %s256 = sphi 0, %s240
      %s262 = sphi 0, %s264
      %s265 = sphi 0, %s262
      %s266 = sphi 0, %s265
      %s282 = sphi 0, %s266
      %s288 = sphi 0, %s290
      %s291 = sphi 0, %s288
      %s292 = sphi 0, %s291
      %s308 = sphi 0, %s292
      %s314 = sphi 0, %s316
      %s317 = sphi 0, %s314
      %s318 = sphi 0, %s317
      %s334 = sphi 0, %s318
      %s340 = sphi 0, %s342
      %s343 = sphi 0, %s340
      %s344 = sphi 0, %s343
      %s360 = sphi 0, %s344
      %s366 = sphi 0, %s368
      %s369 = sphi 0, %s366
      %s370 = sphi 0, %s369
      %s386 = sphi 0, %s370
      %s392 = sphi 0, %s394
      %s395 = sphi 0, %s392
      %s396 = sphi 0, %s395
      %s412 = sphi 0, %s396
      %s418 = sphi 0, %s420
      %s421 = sphi 0, %s418
      %s422 = sphi 0, %s421
      %s438 = sphi 0, %s422
      %s444 = sphi 0, %s446
      %s447 = sphi 0, %s444
      %s448 = sphi 0, %s447
      %s464 = sphi 0, %s448
      %s470 = sphi 0, %s472
      %s473 = sphi 0, %s470
      %s474 = sphi 0, %s473
      %s490 = sphi 0, %s474
      %s496 = sphi 0, %s498
      %s499 = sphi 0, %s496
      %s500 = sphi 0, %s499
      %s516 = sphi 0, %s500
      %s522 = sphi 0, %s524
      %s525 = sphi 0, %s522
      %s526 = sphi 0, %s525
      %s542 = sphi 0, %s526
    $region4: #{tpu_custom_call.1} parent=1 // loop_header_branch
      %29 = sbr.rel (%p27) target = $region8
    $region5: #{tpu_custom_call.1} parent=1 // loop_body
      %s31 = ssub.s32 %s26, 1
      %s32 = ssub.s32 %s26, 2
      %s39 = sadd.s32 1, %s34
      %p40 = scmp.ge.s32.totalorder %s39, 2
      %s41 = scalar_select %p40, 0, %s39
      %s42 = sadd.s32 1, %s33
      %s43 = scalar_select %p40, %s42, %s33
      %p44 = scmp.ge.s32.totalorder %s43, 1
      %s45 = scalar_select %p44, 0, %s43
      %s46 = ssub.s32 %s33, %s45
      %p47 = scmp.eq.s32.totalorder %s46, 0
      %s49 = sadd.s32 %s48, 1
      %s50 = scalar_select %p47, %s48, %s49
      %p53 = pneg %p47
      %p54 = scmp.eq.s32.totalorder %s26, 1
      %p55 = por %p53, %p54
      %p56 = scmp.ne.s32.totalorder %s48, %s51
      %p57 = scmp.eq.s32.totalorder %s26, 0
      %p58 = por %p56, %p57
      %p59 = scmp.ne.s32.totalorder %s48, %s51
      %p60 = scmp.eq.s32.totalorder %s31, 1
      %p61 = por %p59, %p60
      %p62 = scmp.ne.s32.totalorder %s51, %s52
      %p63 = scmp.eq.s32.totalorder %s31, 0
      %p64 = por %p62, %p63
      %p65 = scmp.ne.s32.totalorder %s51, %s52
      %p66 = scmp.eq.s32.totalorder %s32, 1
      %p67 = por %p65, %p66
      %p69 = scmp.ne.s32.totalorder %s52, %s68
      %p70 = scmp.eq.s32.totalorder %s32, 0
      %p71 = por %p69, %p70
      %s72 = ssub.s32 %s33, %s45
      %p73 = scmp.eq.s32.totalorder %s72, 0
      %s75 = sadd.s32 %s74, 1
      %s76 = scalar_select %p73, %s74, %s75
      %p79 = pneg %p73
      %p80 = scmp.eq.s32.totalorder %s26, 1
      %p81 = por %p79, %p80
      %p82 = scmp.ne.s32.totalorder %s74, %s77
      %p83 = scmp.eq.s32.totalorder %s26, 0
      %p84 = por %p82, %p83
      %p85 = scmp.ne.s32.totalorder %s74, %s77
      %p86 = scmp.eq.s32.totalorder %s31, 1
      %p87 = por %p85, %p86
      %p88 = scmp.ne.s32.totalorder %s77, %s78
      %p89 = scmp.eq.s32.totalorder %s31, 0
      %p90 = por %p88, %p89
      %p91 = scmp.ne.s32.totalorder %s77, %s78
      %p92 = scmp.eq.s32.totalorder %s32, 1
      %p93 = por %p91, %p92
      %p95 = scmp.ne.s32.totalorder %s78, %s94
      %p96 = scmp.eq.s32.totalorder %s32, 0
      %p97 = por %p95, %p96
      %s98 = ssub.s32 %s33, %s45
      %p99 = scmp.eq.s32.totalorder %s98, 0
      %s101 = sadd.s32 %s100, 1
      %s102 = scalar_select %p99, %s100, %s101
      %p105 = pneg %p99
      %p106 = scmp.eq.s32.totalorder %s26, 1
      %p107 = por %p105, %p106
      %p108 = scmp.ne.s32.totalorder %s100, %s103
      %p109 = scmp.eq.s32.totalorder %s26, 0
      %p110 = por %p108, %p109
      %p111 = scmp.ne.s32.totalorder %s100, %s103
      %p112 = scmp.eq.s32.totalorder %s31, 1
      %p113 = por %p111, %p112
      %p114 = scmp.ne.s32.totalorder %s103, %s104
      %p115 = scmp.eq.s32.totalorder %s31, 0
      %p116 = por %p114, %p115
      %p117 = scmp.ne.s32.totalorder %s103, %s104
      %p118 = scmp.eq.s32.totalorder %s32, 1
      %p119 = por %p117, %p118
      %p121 = scmp.ne.s32.totalorder %s104, %s120
      %p122 = scmp.eq.s32.totalorder %s32, 0
      %p123 = por %p121, %p122
      %s125 = sadd.s32 %s124, 1
      %p128 = scmp.eq.s32.totalorder %s26, 1
      %p129 = scmp.ne.s32.totalorder %s124, %s126
      %p130 = scmp.eq.s32.totalorder %s26, 0
      %p131 = por %p129, %p130
      %p132 = scmp.ne.s32.totalorder %s124, %s126
      %p133 = scmp.eq.s32.totalorder %s31, 1
      %p134 = por %p132, %p133
      %p135 = scmp.ne.s32.totalorder %s126, %s127
      %p136 = scmp.eq.s32.totalorder %s31, 0
      %p137 = por %p135, %p136
      %p138 = scmp.ne.s32.totalorder %s126, %s127
      %p139 = scmp.eq.s32.totalorder %s32, 1
      %p140 = por %p138, %p139
      %p142 = scmp.ne.s32.totalorder %s127, %s141
      %p143 = scmp.eq.s32.totalorder %s32, 0
      %p144 = por %p142, %p143
      %s146 = sadd.s32 %s145, 1
      %p149 = scmp.eq.s32.totalorder %s26, 1
      %p150 = scmp.ne.s32.totalorder %s145, %s147
      %p151 = scmp.eq.s32.totalorder %s26, 0
      %p152 = por %p150, %p151
      %p153 = scmp.ne.s32.totalorder %s145, %s147
      %p154 = scmp.eq.s32.totalorder %s31, 1
      %p155 = por %p153, %p154
      %p156 = scmp.ne.s32.totalorder %s147, %s148
      %p157 = scmp.eq.s32.totalorder %s31, 0
      %p158 = por %p156, %p157
      %p159 = scmp.ne.s32.totalorder %s147, %s148
      %p160 = scmp.eq.s32.totalorder %s32, 1
      %p161 = por %p159, %p160
      %p163 = scmp.ne.s32.totalorder %s148, %s162
      %p164 = scmp.eq.s32.totalorder %s32, 0
      %p165 = por %p163, %p164
      %s167 = sadd.s32 %s166, 1
      %p170 = scmp.eq.s32.totalorder %s26, 1
      %p171 = scmp.ne.s32.totalorder %s166, %s168
      %p172 = scmp.eq.s32.totalorder %s26, 0
      %p173 = por %p171, %p172
      %p174 = scmp.ne.s32.totalorder %s166, %s168
      %p175 = scmp.eq.s32.totalorder %s31, 1
      %p176 = por %p174, %p175
      %p177 = scmp.ne.s32.totalorder %s168, %s169
      %p178 = scmp.eq.s32.totalorder %s31, 0
      %p179 = por %p177, %p178
      %p180 = scmp.ne.s32.totalorder %s168, %s169
      %p181 = scmp.eq.s32.totalorder %s32, 1
      %p182 = por %p180, %p181
      %p184 = scmp.ne.s32.totalorder %s169, %s183
      %p185 = scmp.eq.s32.totalorder %s32, 0
      %p186 = por %p184, %p185
      %s188 = sadd.s32 %s187, 1
      %p191 = scmp.eq.s32.totalorder %s26, 1
      %p192 = scmp.ne.s32.totalorder %s187, %s189
      %p193 = scmp.eq.s32.totalorder %s26, 0
      %p194 = por %p192, %p193
      %p195 = scmp.ne.s32.totalorder %s187, %s189
      %p196 = scmp.eq.s32.totalorder %s31, 1
      %p197 = por %p195, %p196
      %p198 = scmp.ne.s32.totalorder %s189, %s190
      %p199 = scmp.eq.s32.totalorder %s31, 0
      %p200 = por %p198, %p199
      %p201 = scmp.ne.s32.totalorder %s189, %s190
      %p202 = scmp.eq.s32.totalorder %s32, 1
      %p203 = por %p201, %p202
      %p205 = scmp.ne.s32.totalorder %s190, %s204
      %p206 = scmp.eq.s32.totalorder %s32, 0
      %p207 = por %p205, %p206
      %s208 = ssub.s32 %s34, %s41
      %p209 = scmp.eq.s32.totalorder %s208, 0
      %s211 = sadd.s32 %s210, 1
      %s212 = scalar_select %p209, %s210, %s211
      %p215 = pneg %p209
      %p216 = scmp.eq.s32.totalorder %s26, 1
      %p217 = por %p215, %p216
      %p218 = scmp.ne.s32.totalorder %s210, %s213
      %p219 = scmp.eq.s32.totalorder %s26, 0
      %p220 = por %p218, %p219
      %p221 = scmp.ne.s32.totalorder %s210, %s213
      %p222 = scmp.eq.s32.totalorder %s31, 1
      %p223 = por %p221, %p222
      %p224 = scmp.ne.s32.totalorder %s213, %s214
      %p225 = scmp.eq.s32.totalorder %s31, 0
      %p226 = por %p224, %p225
      %p227 = scmp.ne.s32.totalorder %s213, %s214
      %p228 = scmp.eq.s32.totalorder %s32, 1
      %p229 = por %p227, %p228
      %p231 = scmp.ne.s32.totalorder %s214, %s230
      %p232 = scmp.eq.s32.totalorder %s32, 0
      %p233 = por %p231, %p232
      %s234 = ssub.s32 %s34, %s41
      %p235 = scmp.eq.s32.totalorder %s234, 0
      %s237 = sadd.s32 %s236, 1
      %s238 = scalar_select %p235, %s236, %s237
      %p241 = pneg %p235
      %p242 = scmp.eq.s32.totalorder %s26, 1
      %p243 = por %p241, %p242
      %p244 = scmp.ne.s32.totalorder %s236, %s239
      %p245 = scmp.eq.s32.totalorder %s26, 0
      %p246 = por %p244, %p245
      %p247 = scmp.ne.s32.totalorder %s236, %s239
      %p248 = scmp.eq.s32.totalorder %s31, 1
      %p249 = por %p247, %p248
      %p250 = scmp.ne.s32.totalorder %s239, %s240
      %p251 = scmp.eq.s32.totalorder %s31, 0
      %p252 = por %p250, %p251
      %p253 = scmp.ne.s32.totalorder %s239, %s240
      %p254 = scmp.eq.s32.totalorder %s32, 1
      %p255 = por %p253, %p254
      %p257 = scmp.ne.s32.totalorder %s240, %s256
      %p258 = scmp.eq.s32.totalorder %s32, 0
      %p259 = por %p257, %p258
      %s260 = ssub.s32 %s34, %s41
      %p261 = scmp.eq.s32.totalorder %s260, 0
      %s263 = sadd.s32 %s262, 1
      %s264 = scalar_select %p261, %s262, %s263
      %p267 = pneg %p261
      %p268 = scmp.eq.s32.totalorder %s26, 1
      %p269 = por %p267, %p268
      %p270 = scmp.ne.s32.totalorder %s262, %s265
      %p271 = scmp.eq.s32.totalorder %s26, 0
      %p272 = por %p270, %p271
      %p273 = scmp.ne.s32.totalorder %s262, %s265
      %p274 = scmp.eq.s32.totalorder %s31, 1
      %p275 = por %p273, %p274
      %p276 = scmp.ne.s32.totalorder %s265, %s266
      %p277 = scmp.eq.s32.totalorder %s31, 0
      %p278 = por %p276, %p277
      %p279 = scmp.ne.s32.totalorder %s265, %s266
      %p280 = scmp.eq.s32.totalorder %s32, 1
      %p281 = por %p279, %p280
      %p283 = scmp.ne.s32.totalorder %s266, %s282
      %p284 = scmp.eq.s32.totalorder %s32, 0
      %p285 = por %p283, %p284
      %s286 = ssub.s32 %s34, %s41
      %p287 = scmp.eq.s32.totalorder %s286, 0
      %s289 = sadd.s32 %s288, 1
      %s290 = scalar_select %p287, %s288, %s289
      %p293 = pneg %p287
      %p294 = scmp.eq.s32.totalorder %s26, 1
      %p295 = por %p293, %p294
      %p296 = scmp.ne.s32.totalorder %s288, %s291
      %p297 = scmp.eq.s32.totalorder %s26, 0
      %p298 = por %p296, %p297
      %p299 = scmp.ne.s32.totalorder %s288, %s291
      %p300 = scmp.eq.s32.totalorder %s31, 1
      %p301 = por %p299, %p300
      %p302 = scmp.ne.s32.totalorder %s291, %s292
      %p303 = scmp.eq.s32.totalorder %s31, 0
      %p304 = por %p302, %p303
      %p305 = scmp.ne.s32.totalorder %s291, %s292
      %p306 = scmp.eq.s32.totalorder %s32, 1
      %p307 = por %p305, %p306
      %p309 = scmp.ne.s32.totalorder %s292, %s308
      %p310 = scmp.eq.s32.totalorder %s32, 0
      %p311 = por %p309, %p310
      %s312 = ssub.s32 %s34, %s41
      %p313 = scmp.eq.s32.totalorder %s312, 0
      %s315 = sadd.s32 %s314, 1
      %s316 = scalar_select %p313, %s314, %s315
      %p319 = pneg %p313
      %p320 = scmp.eq.s32.totalorder %s26, 1
      %p321 = por %p319, %p320
      %p322 = scmp.ne.s32.totalorder %s314, %s317
      %p323 = scmp.eq.s32.totalorder %s26, 0
      %p324 = por %p322, %p323
      %p325 = scmp.ne.s32.totalorder %s314, %s317
      %p326 = scmp.eq.s32.totalorder %s31, 1
      %p327 = por %p325, %p326
      %p328 = scmp.ne.s32.totalorder %s317, %s318
      %p329 = scmp.eq.s32.totalorder %s31, 0
      %p330 = por %p328, %p329
      %p331 = scmp.ne.s32.totalorder %s317, %s318
      %p332 = scmp.eq.s32.totalorder %s32, 1
      %p333 = por %p331, %p332
      %p335 = scmp.ne.s32.totalorder %s318, %s334
      %p336 = scmp.eq.s32.totalorder %s32, 0
      %p337 = por %p335, %p336
      %s338 = ssub.s32 %s34, %s41
      %p339 = scmp.eq.s32.totalorder %s338, 0
      %s341 = sadd.s32 %s340, 1
      %s342 = scalar_select %p339, %s340, %s341
      %p345 = pneg %p339
      %p346 = scmp.eq.s32.totalorder %s26, 1
      %p347 = por %p345, %p346
      %p348 = scmp.ne.s32.totalorder %s340, %s343
      %p349 = scmp.eq.s32.totalorder %s26, 0
      %p350 = por %p348, %p349
      %p351 = scmp.ne.s32.totalorder %s340, %s343
      %p352 = scmp.eq.s32.totalorder %s31, 1
      %p353 = por %p351, %p352
      %p354 = scmp.ne.s32.totalorder %s343, %s344
      %p355 = scmp.eq.s32.totalorder %s31, 0
      %p356 = por %p354, %p355
      %p357 = scmp.ne.s32.totalorder %s343, %s344
      %p358 = scmp.eq.s32.totalorder %s32, 1
      %p359 = por %p357, %p358
      %p361 = scmp.ne.s32.totalorder %s344, %s360
      %p362 = scmp.eq.s32.totalorder %s32, 0
      %p363 = por %p361, %p362
      %s364 = ssub.s32 %s34, %s41
      %p365 = scmp.eq.s32.totalorder %s364, 0
      %s367 = sadd.s32 %s366, 1
      %s368 = scalar_select %p365, %s366, %s367
      %p371 = pneg %p365
      %p372 = scmp.eq.s32.totalorder %s26, 1
      %p373 = por %p371, %p372
      %p374 = scmp.ne.s32.totalorder %s366, %s369
      %p375 = scmp.eq.s32.totalorder %s26, 0
      %p376 = por %p374, %p375
      %p377 = scmp.ne.s32.totalorder %s366, %s369
      %p378 = scmp.eq.s32.totalorder %s31, 1
      %p379 = por %p377, %p378
      %p380 = scmp.ne.s32.totalorder %s369, %s370
      %p381 = scmp.eq.s32.totalorder %s31, 0
      %p382 = por %p380, %p381
      %p383 = scmp.ne.s32.totalorder %s369, %s370
      %p384 = scmp.eq.s32.totalorder %s32, 1
      %p385 = por %p383, %p384
      %p387 = scmp.ne.s32.totalorder %s370, %s386
      %p388 = scmp.eq.s32.totalorder %s32, 0
      %p389 = por %p387, %p388
      %s390 = ssub.s32 %s34, %s41
      %p391 = scmp.eq.s32.totalorder %s390, 0
      %s393 = sadd.s32 %s392, 1
      %s394 = scalar_select %p391, %s392, %s393
      %p397 = pneg %p391
      %p398 = scmp.eq.s32.totalorder %s26, 1
      %p399 = por %p397, %p398
      %p400 = scmp.ne.s32.totalorder %s392, %s395
      %p401 = scmp.eq.s32.totalorder %s26, 0
      %p402 = por %p400, %p401
      %p403 = scmp.ne.s32.totalorder %s392, %s395
      %p404 = scmp.eq.s32.totalorder %s31, 1
      %p405 = por %p403, %p404
      %p406 = scmp.ne.s32.totalorder %s395, %s396
      %p407 = scmp.eq.s32.totalorder %s31, 0
      %p408 = por %p406, %p407
      %p409 = scmp.ne.s32.totalorder %s395, %s396
      %p410 = scmp.eq.s32.totalorder %s32, 1
      %p411 = por %p409, %p410
      %p413 = scmp.ne.s32.totalorder %s396, %s412
      %p414 = scmp.eq.s32.totalorder %s32, 0
      %p415 = por %p413, %p414
      %s416 = ssub.s32 %s34, %s41
      %p417 = scmp.eq.s32.totalorder %s416, 0
      %s419 = sadd.s32 %s418, 1
      %s420 = scalar_select %p417, %s418, %s419
      %p423 = pneg %p417
      %p424 = scmp.eq.s32.totalorder %s26, 1
      %p425 = por %p423, %p424
      %p426 = scmp.ne.s32.totalorder %s418, %s421
      %p427 = scmp.eq.s32.totalorder %s26, 0
      %p428 = por %p426, %p427
      %p429 = scmp.ne.s32.totalorder %s418, %s421
      %p430 = scmp.eq.s32.totalorder %s31, 1
      %p431 = por %p429, %p430
      %p432 = scmp.ne.s32.totalorder %s421, %s422
      %p433 = scmp.eq.s32.totalorder %s31, 0
      %p434 = por %p432, %p433
      %p435 = scmp.ne.s32.totalorder %s421, %s422
      %p436 = scmp.eq.s32.totalorder %s32, 1
      %p437 = por %p435, %p436
      %p439 = scmp.ne.s32.totalorder %s422, %s438
      %p440 = scmp.eq.s32.totalorder %s32, 0
      %p441 = por %p439, %p440
      %s442 = ssub.s32 %s34, %s41
      %p443 = scmp.eq.s32.totalorder %s442, 0
      %s445 = sadd.s32 %s444, 1
      %s446 = scalar_select %p443, %s444, %s445
      %p449 = pneg %p443
      %p450 = scmp.eq.s32.totalorder %s26, 1
      %p451 = por %p449, %p450
      %p452 = scmp.ne.s32.totalorder %s444, %s447
      %p453 = scmp.eq.s32.totalorder %s26, 0
      %p454 = por %p452, %p453
      %p455 = scmp.ne.s32.totalorder %s444, %s447
      %p456 = scmp.eq.s32.totalorder %s31, 1
      %p457 = por %p455, %p456
      %p458 = scmp.ne.s32.totalorder %s447, %s448
      %p459 = scmp.eq.s32.totalorder %s31, 0
      %p460 = por %p458, %p459
      %p461 = scmp.ne.s32.totalorder %s447, %s448
      %p462 = scmp.eq.s32.totalorder %s32, 1
      %p463 = por %p461, %p462
      %p465 = scmp.ne.s32.totalorder %s448, %s464
      %p466 = scmp.eq.s32.totalorder %s32, 0
      %p467 = por %p465, %p466
      %s468 = ssub.s32 %s34, %s41
      %p469 = scmp.eq.s32.totalorder %s468, 0
      %s471 = sadd.s32 %s470, 1
      %s472 = scalar_select %p469, %s470, %s471
      %p475 = pneg %p469
      %p476 = scmp.eq.s32.totalorder %s26, 1
      %p477 = por %p475, %p476
      %p478 = scmp.ne.s32.totalorder %s470, %s473
      %p479 = scmp.eq.s32.totalorder %s26, 0
      %p480 = por %p478, %p479
      %p481 = scmp.ne.s32.totalorder %s470, %s473
      %p482 = scmp.eq.s32.totalorder %s31, 1
      %p483 = por %p481, %p482
      %p484 = scmp.ne.s32.totalorder %s473, %s474
      %p485 = scmp.eq.s32.totalorder %s31, 0
      %p486 = por %p484, %p485
      %p487 = scmp.ne.s32.totalorder %s473, %s474
      %p488 = scmp.eq.s32.totalorder %s32, 1
      %p489 = por %p487, %p488
      %p491 = scmp.ne.s32.totalorder %s474, %s490
      %p492 = scmp.eq.s32.totalorder %s32, 0
      %p493 = por %p491, %p492
      %s494 = ssub.s32 %s34, %s41
      %p495 = scmp.eq.s32.totalorder %s494, 0
      %s497 = sadd.s32 %s496, 1
      %s498 = scalar_select %p495, %s496, %s497
      %p501 = pneg %p495
      %p502 = scmp.eq.s32.totalorder %s26, 1
      %p503 = por %p501, %p502
      %p504 = scmp.ne.s32.totalorder %s496, %s499
      %p505 = scmp.eq.s32.totalorder %s26, 0
      %p506 = por %p504, %p505
      %p507 = scmp.ne.s32.totalorder %s496, %s499
      %p508 = scmp.eq.s32.totalorder %s31, 1
      %p509 = por %p507, %p508
      %p510 = scmp.ne.s32.totalorder %s499, %s500
      %p511 = scmp.eq.s32.totalorder %s31, 0
      %p512 = por %p510, %p511
      %p513 = scmp.ne.s32.totalorder %s499, %s500
      %p514 = scmp.eq.s32.totalorder %s32, 1
      %p515 = por %p513, %p514
      %p517 = scmp.ne.s32.totalorder %s500, %s516
      %p518 = scmp.eq.s32.totalorder %s32, 0
      %p519 = por %p517, %p518
      %s520 = ssub.s32 %s33, %s45
      %p521 = scmp.eq.s32.totalorder %s520, 0
      %s523 = sadd.s32 %s522, 1
      %s524 = scalar_select %p521, %s522, %s523
      %p527 = pneg %p521
      %p528 = scmp.eq.s32.totalorder %s26, 1
      %p529 = por %p527, %p528
      %p530 = scmp.ne.s32.totalorder %s522, %s525
      %p531 = scmp.eq.s32.totalorder %s26, 0
      %p532 = por %p530, %p531
      %p533 = scmp.ne.s32.totalorder %s522, %s525
      %p534 = scmp.eq.s32.totalorder %s31, 1
      %p535 = por %p533, %p534
      %p536 = scmp.ne.s32.totalorder %s525, %s526
      %p537 = scmp.eq.s32.totalorder %s31, 0
      %p538 = por %p536, %p537
      %p539 = scmp.ne.s32.totalorder %s525, %s526
      %p540 = scmp.eq.s32.totalorder %s32, 1
      %p541 = por %p539, %p540
      %p543 = scmp.ne.s32.totalorder %s526, %s542
      %p544 = scmp.eq.s32.totalorder %s32, 0
      %p545 = por %p543, %p544
      %p546 = scmp.le.s32.totalorder 1, %s26
      %p547 = scmp.lt.s32.totalorder %s26, 3
      %p548 = pnand %p546, %p547
      %p549 = pneg %p548
      // Predicated region
      $region9: #{tpu_custom_call.1} parent=5 // pred_check
        _
      $region10: #{tpu_custom_call.1} parent=5 // pred_check_branch
        %551 = sbr.rel (%p548) target = $region12
      $region11: #{tpu_custom_call.1} parent=5 // pred_region
        %s552 = ssub.s32 %s26, 1
        // Predicated region
        $region13: #{tpu_custom_call.1} parent=11 // pred_check
          %p553 = pneg %p64
        $region14: #{tpu_custom_call.1} parent=11 // pred_check_branch
          %555 = sbr.rel (%p553) target = $region16
        $region15: #{tpu_custom_call.1} parent=11 // pred_region
          %s556 = smul.u32 2, %s35
          %p557 = scmp.lt.s32.totalorder %s556, 1
          %s558 = scalar_select %p557, %s556, 1
          %s559 = smul.addr %s558, 8
          %s560 = scalar_lea.vmem %s0, %s559
          %s561 = smul.u32 2, %s35
        $region16: #{tpu_custom_call.1} parent=11 // pred_fallthru
          _
        // Predicated region
        $region17: #{tpu_custom_call.1} parent=11 // pred_check
          %p562 = pneg %p90
        $region18: #{tpu_custom_call.1} parent=11 // pred_check_branch
          %564 = sbr.rel (%p562) target = $region20
        $region19: #{tpu_custom_call.1} parent=11 // pred_region
          %s565 = smul.u32 2, %s35
          %p566 = scmp.lt.s32.totalorder %s565, 1
          %s567 = scalar_select %p566, %s565, 1
          %s568 = scalar_lea.vmem %s1, %s567
          %s569 = smul.u32 2, %s35
        $region20: #{tpu_custom_call.1} parent=11 // pred_fallthru
          _
        // Predicated region
        $region21: #{tpu_custom_call.1} parent=11 // pred_check
          %p570 = pneg %p116
        $region22: #{tpu_custom_call.1} parent=11 // pred_check_branch
          %572 = sbr.rel (%p570) target = $region24
        $region23: #{tpu_custom_call.1} parent=11 // pred_region
          %s573 = smul.u32 2, %s35
          %p574 = scmp.lt.s32.totalorder %s573, 1
          %s575 = scalar_select %p574, %s573, 1
          %s576 = scalar_lea.vmem %s2, %s575
          %s577 = smul.u32 2, %s35
        $region24: #{tpu_custom_call.1} parent=11 // pred_fallthru
          _
        // Predicated region
        $region25: #{tpu_custom_call.1} parent=11 // pred_check
          %p578 = pneg %p137
        $region26: #{tpu_custom_call.1} parent=11 // pred_check_branch
          %580 = sbr.rel (%p578) target = $region28
        $region27: #{tpu_custom_call.1} parent=11 // pred_region
          _
        $region28: #{tpu_custom_call.1} parent=11 // pred_fallthru
          _
        // Predicated region
        $region29: #{tpu_custom_call.1} parent=11 // pred_check
          %p581 = pneg %p158
        $region30: #{tpu_custom_call.1} parent=11 // pred_check_branch
          %583 = sbr.rel (%p581) target = $region32
        $region31: #{tpu_custom_call.1} parent=11 // pred_region
          _
        $region32: #{tpu_custom_call.1} parent=11 // pred_fallthru
          _
        // Predicated region
        $region33: #{tpu_custom_call.1} parent=11 // pred_check
          %p584 = pneg %p179
        $region34: #{tpu_custom_call.1} parent=11 // pred_check_branch
          %586 = sbr.rel (%p584) target = $region36
        $region35: #{tpu_custom_call.1} parent=11 // pred_region
          _
        $region36: #{tpu_custom_call.1} parent=11 // pred_fallthru
          _
        // Predicated region
        $region37: #{tpu_custom_call.1} parent=11 // pred_check
          %p587 = pneg %p200
        $region38: #{tpu_custom_call.1} parent=11 // pred_check_branch
          %589 = sbr.rel (%p587) target = $region40
        $region39: #{tpu_custom_call.1} parent=11 // pred_region
          _
        $region40: #{tpu_custom_call.1} parent=11 // pred_fallthru
          _
      $region12: #{tpu_custom_call.1} parent=5 // pred_fallthru
        _
      %p590 = scmp.lt.s32.totalorder %s26, 2
      // Predicated region
      $region41: #{tpu_custom_call.1} parent=5 // pred_check
        %p591 = pneg %p590
      $region42: #{tpu_custom_call.1} parent=5 // pred_check_branch
        %593 = sbr.rel (%p591) target = $region44
      $region43: #{tpu_custom_call.1} parent=5 // pred_region
        // Predicated region
        $region45: #{tpu_custom_call.1} parent=43 // pred_check
          %p594 = pneg %p220
        $region46: #{tpu_custom_call.1} parent=43 // pred_check_branch
          %596 = sbr.rel (%p594) target = $region48
        $region47: #{tpu_custom_call.1} parent=43 // pred_region
          %p597 = scmp.lt.s32.totalorder %s34, 1
          %s598 = scalar_select %p597, %s34, 1
          %s599 = scalar_lea.vmem %s7, %s598
        $region48: #{tpu_custom_call.1} parent=43 // pred_fallthru
          _
        // Predicated region
        $region49: #{tpu_custom_call.1} parent=43 // pred_check
          %p600 = pneg %p246
        $region50: #{tpu_custom_call.1} parent=43 // pred_check_branch
          %602 = sbr.rel (%p600) target = $region52
        $region51: #{tpu_custom_call.1} parent=43 // pred_region
          %p603 = scmp.lt.s32.totalorder %s34, 1
          %s604 = scalar_select %p603, %s34, 1
          %s605 = scalar_lea.vmem %s8, %s604
        $region52: #{tpu_custom_call.1} parent=43 // pred_fallthru
          _
        // Predicated region
        $region53: #{tpu_custom_call.1} parent=43 // pred_check
          %p606 = pneg %p272
        $region54: #{tpu_custom_call.1} parent=43 // pred_check_branch
          %608 = sbr.rel (%p606) target = $region56
        $region55: #{tpu_custom_call.1} parent=43 // pred_region
          %p609 = scmp.lt.s32.totalorder %s34, 1
          %s610 = scalar_select %p609, %s34, 1
          %s611 = smul.addr %s610, 4
          %s612 = smul.addr %s611, 4
          %s613 = scalar_lea.vmem %s9, %s612
        $region56: #{tpu_custom_call.1} parent=43 // pred_fallthru
          _
        // Predicated region
        $region57: #{tpu_custom_call.1} parent=43 // pred_check
          %p614 = pneg %p298
        $region58: #{tpu_custom_call.1} parent=43 // pred_check_branch
          %616 = sbr.rel (%p614) target = $region60
        $region59: #{tpu_custom_call.1} parent=43 // pred_region
          %p617 = scmp.lt.s32.totalorder %s34, 1
          %s618 = scalar_select %p617, %s34, 1
          %s619 = scalar_lea.vmem %s10, %s618
        $region60: #{tpu_custom_call.1} parent=43 // pred_fallthru
          _
        // Predicated region
        $region61: #{tpu_custom_call.1} parent=43 // pred_check
          %p620 = pneg %p324
        $region62: #{tpu_custom_call.1} parent=43 // pred_check_branch
          %622 = sbr.rel (%p620) target = $region64
        $region63: #{tpu_custom_call.1} parent=43 // pred_region
          %p623 = scmp.lt.s32.totalorder %s34, 1
          %s624 = scalar_select %p623, %s34, 1
          %s625 = smul.addr %s624, 4
          %s626 = smul.addr %s625, 4
          %s627 = scalar_lea.vmem %s11, %s626
        $region64: #{tpu_custom_call.1} parent=43 // pred_fallthru
          _
        // Predicated region
        $region65: #{tpu_custom_call.1} parent=43 // pred_check
          %p628 = pneg %p350
        $region66: #{tpu_custom_call.1} parent=43 // pred_check_branch
          %630 = sbr.rel (%p628) target = $region68
        $region67: #{tpu_custom_call.1} parent=43 // pred_region
          %p631 = scmp.lt.s32.totalorder %s34, 1
          %s632 = scalar_select %p631, %s34, 1
          %s633 = scalar_lea.vmem %s12, %s632
        $region68: #{tpu_custom_call.1} parent=43 // pred_fallthru
          _
        // Predicated region
        $region69: #{tpu_custom_call.1} parent=43 // pred_check
          %p634 = pneg %p376
        $region70: #{tpu_custom_call.1} parent=43 // pred_check_branch
          %636 = sbr.rel (%p634) target = $region72
        $region71: #{tpu_custom_call.1} parent=43 // pred_region
          %p637 = scmp.lt.s32.totalorder %s34, 1
          %s638 = scalar_select %p637, %s34, 1
          %s639 = scalar_lea.vmem %s13, %s638
        $region72: #{tpu_custom_call.1} parent=43 // pred_fallthru
          _
        // Predicated region
        $region73: #{tpu_custom_call.1} parent=43 // pred_check
          %p640 = pneg %p402
        $region74: #{tpu_custom_call.1} parent=43 // pred_check_branch
          %642 = sbr.rel (%p640) target = $region76
        $region75: #{tpu_custom_call.1} parent=43 // pred_region
          %p643 = scmp.lt.s32.totalorder %s34, 1
          %s644 = scalar_select %p643, %s34, 1
          %s645 = scalar_lea.vmem %s14, %s644
        $region76: #{tpu_custom_call.1} parent=43 // pred_fallthru
          _
        // Predicated region
        $region77: #{tpu_custom_call.1} parent=43 // pred_check
          %p646 = pneg %p428
        $region78: #{tpu_custom_call.1} parent=43 // pred_check_branch
          %648 = sbr.rel (%p646) target = $region80
        $region79: #{tpu_custom_call.1} parent=43 // pred_region
          %p649 = scmp.lt.s32.totalorder %s34, 1
          %s650 = scalar_select %p649, %s34, 1
          %s651 = smul.addr %s650, 4
          %s652 = smul.addr %s651, 4
          %s653 = scalar_lea.vmem %s15, %s652
        $region80: #{tpu_custom_call.1} parent=43 // pred_fallthru
          _
        // Predicated region
        $region81: #{tpu_custom_call.1} parent=43 // pred_check
          %p654 = pneg %p454
        $region82: #{tpu_custom_call.1} parent=43 // pred_check_branch
          %656 = sbr.rel (%p654) target = $region84
        $region83: #{tpu_custom_call.1} parent=43 // pred_region
          %p657 = scmp.lt.s32.totalorder %s34, 1
          %s658 = scalar_select %p657, %s34, 1
          %s659 = scalar_lea.vmem %s16, %s658
        $region84: #{tpu_custom_call.1} parent=43 // pred_fallthru
          _
        // Predicated region
        $region85: #{tpu_custom_call.1} parent=43 // pred_check
          %p660 = pneg %p480
        $region86: #{tpu_custom_call.1} parent=43 // pred_check_branch
          %662 = sbr.rel (%p660) target = $region88
        $region87: #{tpu_custom_call.1} parent=43 // pred_region
          %p663 = scmp.lt.s32.totalorder %s34, 1
          %s664 = scalar_select %p663, %s34, 1
          %s665 = smul.addr %s664, 16
          %s666 = smul.addr %s665, 4
          %s667 = scalar_lea.vmem %s17, %s666
        $region88: #{tpu_custom_call.1} parent=43 // pred_fallthru
          _
        // Predicated region
        $region89: #{tpu_custom_call.1} parent=43 // pred_check
          %p668 = pneg %p506
        $region90: #{tpu_custom_call.1} parent=43 // pred_check_branch
          %670 = sbr.rel (%p668) target = $region92
        $region91: #{tpu_custom_call.1} parent=43 // pred_region
          %p671 = scmp.lt.s32.totalorder %s34, 1
          %s672 = scalar_select %p671, %s34, 1
          %s673 = scalar_lea.vmem %s18, %s672
        $region92: #{tpu_custom_call.1} parent=43 // pred_fallthru
          _
      $region44: #{tpu_custom_call.1} parent=5 // pred_fallthru
        _
      %p674 = scmp.le.s32.totalorder 1, %s26
      %p675 = scmp.lt.s32.totalorder %s26, 3
      %p676 = pnand %p674, %p675
      %p677 = pneg %p676
      // Predicated region
      $region93: #{tpu_custom_call.1} parent=5 // pred_check
        _
      $region94: #{tpu_custom_call.1} parent=5 // pred_check_branch
        %679 = sbr.rel (%p676) target = $region96
      $region95: #{tpu_custom_call.1} parent=5 // pred_region
        %s680 = ssub.s32 %s26, 1
        %s681 = smul.u32 2, %s35
        %p682 = scmp.lt.s32.totalorder %s681, 1
        %s683 = scalar_select %p682, %s681, 1
        %s684 = smul.addr %s683, 8
        %s685 = scalar_lea.vmem %s0, %s684
        %p686 = pneg %p64
        %p687 = pneg %p61
        %s688 = smul.u32 2, %s35
        %p689 = scmp.lt.s32.totalorder %s688, 1
        %s690 = scalar_select %p689, %s688, 1
        %s691 = scalar_lea.vmem %s1, %s690
        %p692 = pneg %p90
        %p693 = pneg %p87
        %s694 = smul.u32 2, %s35
        %p695 = scmp.lt.s32.totalorder %s694, 1
        %s696 = scalar_select %p695, %s694, 1
        %s697 = scalar_lea.vmem %s2, %s696
        %p698 = pneg %p116
        %p699 = pneg %p113
        %p700 = pneg %p137
        %p701 = pneg %p134
        %p702 = pneg %p158
        %p703 = pneg %p155
        %p704 = pneg %p179
        %p705 = pneg %p176
        %p706 = pneg %p200
        %p707 = pneg %p197
        %p708 = scmp.lt.s32.totalorder %s36, 1
        %s709 = scalar_select %p708, %s36, 1
        %s710 = scalar_lea.vmem %s7, %s709
        %p711 = pneg %p226
        %p712 = pneg %p223
        %p713 = scmp.lt.s32.totalorder %s36, 1
        %s714 = scalar_select %p713, %s36, 1
        %s715 = scalar_lea.vmem %s8, %s714
        %p716 = pneg %p252
        %p717 = pneg %p249
        %p718 = scmp.lt.s32.totalorder %s36, 1
        %s719 = scalar_select %p718, %s36, 1
        %s720 = smul.addr %s719, 4
        %s721 = smul.addr %s720, 4
        %s722 = scalar_lea.vmem %s9, %s721
        %p723 = pneg %p278
        %p724 = pneg %p275
        %p725 = scmp.lt.s32.totalorder %s36, 1
        %s726 = scalar_select %p725, %s36, 1
        %s727 = scalar_lea.vmem %s10, %s726
        %p728 = pneg %p304
        %p729 = pneg %p301
        %p730 = scmp.lt.s32.totalorder %s36, 1
        %s731 = scalar_select %p730, %s36, 1
        %s732 = smul.addr %s731, 4
        %s733 = smul.addr %s732, 4
        %s734 = scalar_lea.vmem %s11, %s733
        %p735 = pneg %p330
        %p736 = pneg %p327
        %p737 = scmp.lt.s32.totalorder %s36, 1
        %s738 = scalar_select %p737, %s36, 1
        %s739 = scalar_lea.vmem %s12, %s738
        %p740 = pneg %p356
        %p741 = pneg %p353
        %p742 = scmp.lt.s32.totalorder %s36, 1
        %s743 = scalar_select %p742, %s36, 1
        %s744 = scalar_lea.vmem %s13, %s743
        %p745 = pneg %p382
        %p746 = pneg %p379
        %p747 = scmp.lt.s32.totalorder %s36, 1
        %s748 = scalar_select %p747, %s36, 1
        %s749 = scalar_lea.vmem %s14, %s748
        %p750 = pneg %p408
        %p751 = pneg %p405
        %p752 = scmp.lt.s32.totalorder %s36, 1
        %s753 = scalar_select %p752, %s36, 1
        %s754 = smul.addr %s753, 4
        %s755 = smul.addr %s754, 4
        %s756 = scalar_lea.vmem %s15, %s755
        %p757 = pneg %p434
        %p758 = pneg %p431
        %p759 = scmp.lt.s32.totalorder %s36, 1
        %s760 = scalar_select %p759, %s36, 1
        %s761 = scalar_lea.vmem %s16, %s760
        %p762 = pneg %p460
        %p763 = pneg %p457
        %p764 = scmp.lt.s32.totalorder %s36, 1
        %s765 = scalar_select %p764, %s36, 1
        %s766 = smul.addr %s765, 16
        %s767 = smul.addr %s766, 4
        %s768 = scalar_lea.vmem %s17, %s767
        %p769 = pneg %p486
        %p770 = pneg %p483
        %p771 = scmp.lt.s32.totalorder %s36, 1
        %s772 = scalar_select %p771, %s36, 1
        %s773 = scalar_lea.vmem %s18, %s772
        %p774 = pneg %p512
        %p775 = pneg %p509
        %p776 = pneg %p538
        %p777 = pneg %p535
        %s778 = smul.u32 2, %s35
        %p779 = scmp.lt.s32.totalorder %s778, 1
        %s780 = scalar_select %p779, %s778, 1
        %s781 = smul.addr %s780, 8
        %s782 = scalar_lea.vmem %s0, %s781
        %s783 = smul.u32 2, %s35
        %s784 = smul.u32 2, %s35
        %p785 = scmp.lt.s32.totalorder %s784, 1
        %s786 = scalar_select %p785, %s784, 1
        %s787 = scalar_lea.vmem %s1, %s786
        %s788 = smul.u32 2, %s35
        %s789 = smul.u32 2, %s35
        %p790 = scmp.lt.s32.totalorder %s789, 1
        %s791 = scalar_select %p790, %s789, 1
        %s792 = scalar_lea.vmem %s2, %s791
        %s793 = smul.u32 2, %s35
        %p794 = scmp.lt.s32.totalorder %s36, 1
        %s795 = scalar_select %p794, %s36, 1
        %s796 = scalar_lea.vmem %s7, %s795
        %p797 = scmp.lt.s32.totalorder %s36, 1
        %s798 = scalar_select %p797, %s36, 1
        %s799 = scalar_lea.vmem %s8, %s798
        %p800 = scmp.lt.s32.totalorder %s36, 1
        %s801 = scalar_select %p800, %s36, 1
        %s802 = smul.addr %s801, 4
        %s803 = smul.addr %s802, 4
        %s804 = scalar_lea.vmem %s9, %s803
        %p805 = scmp.lt.s32.totalorder %s36, 1
        %s806 = scalar_select %p805, %s36, 1
        %s807 = scalar_lea.vmem %s10, %s806
        %p808 = scmp.lt.s32.totalorder %s36, 1
        %s809 = scalar_select %p808, %s36, 1
        %s810 = smul.addr %s809, 4
        %s811 = smul.addr %s810, 4
        %s812 = scalar_lea.vmem %s11, %s811
        %p813 = scmp.lt.s32.totalorder %s36, 1
        %s814 = scalar_select %p813, %s36, 1
        %s815 = scalar_lea.vmem %s12, %s814
        %p816 = scmp.lt.s32.totalorder %s36, 1
        %s817 = scalar_select %p816, %s36, 1
        %s818 = scalar_lea.vmem %s13, %s817
        %p819 = scmp.lt.s32.totalorder %s36, 1
        %s820 = scalar_select %p819, %s36, 1
        %s821 = scalar_lea.vmem %s14, %s820
        %p822 = scmp.lt.s32.totalorder %s36, 1
        %s823 = scalar_select %p822, %s36, 1
        %s824 = smul.addr %s823, 4
        %s825 = smul.addr %s824, 4
        %s826 = scalar_lea.vmem %s15, %s825
        %p827 = scmp.lt.s32.totalorder %s36, 1
        %s828 = scalar_select %p827, %s36, 1
        %s829 = scalar_lea.vmem %s16, %s828
        %p830 = scmp.lt.s32.totalorder %s36, 1
        %s831 = scalar_select %p830, %s36, 1
        %s832 = smul.addr %s831, 16
        %s833 = smul.addr %s832, 4
        %s834 = scalar_lea.vmem %s17, %s833
        %p835 = scmp.lt.s32.totalorder %s36, 1
        %s836 = scalar_select %p835, %s36, 1
        %s837 = scalar_lea.vmem %s18, %s836
        %s838 = smul.u32 2, %s35
        %p840 = scmp.eq.s32.totalorder %s36, 0
        // Predicated region
        $region97: #{tpu_custom_call.1} parent=95 // pred_check
          %p841 = pneg %p840
        $region98: #{tpu_custom_call.1} parent=95 // pred_check_branch
          %843 = sbr.rel (%p841) target = $region100
        $region99: #{tpu_custom_call.1} parent=95 // pred_region
          %v844 = vld [vmem:[%s782] sm:$0xff]
          %v845 = vld [vmem:[%s782 + $0x8] sm:$0xff]
          %vm846 = vcmask 261120
          %847 = vst.msk [vmem:[#allocation2] sm:$0xff] %vm846, %v844
          %848 = vst.msk [vmem:[#allocation2 + $0x8] sm:$0xff] %vm846, %v845
        $region100: #{tpu_custom_call.1} parent=95 // pred_fallthru
          _
        %v849 = vld [vmem:[%s3] sm:$0xff]
        %v850 = vld [vmem:[%s4] sm:$0xff]
        %v851 = vld [vmem:[%s796] sm:$0x1]
        %v852 = vld [vmem:[%s799] sm:$0x1]
        %v853 = vld [vmem:[%s818] sm:$0x1]
        %v854 = vld [vmem:[%s821] sm:$0x1]
        %v855 = vld [vmem:[%s804] sm:$0xf]
        %v856 = vld [vmem:[%s804 + $0x4] sm:$0xf]
        %v857 = vld [vmem:[%s804 + $0x8] sm:$0xf]
        %v858 = vld [vmem:[%s804 + $0xc] sm:$0xf]
        %v859 = vld [vmem:[%s807] sm:$0x1]
        %v860 = vld [vmem:[%s812] sm:$0xf]
        %v861 = vld [vmem:[%s812 + $0x4] sm:$0xf]
        %v862 = vld [vmem:[%s812 + $0x8] sm:$0xf]
        %v863 = vld [vmem:[%s812 + $0xc] sm:$0xf]
        %v864 = vld [vmem:[%s815] sm:$0x1]
        %v865 = vld [vmem:[%s826] sm:$0xf]
        %v866 = vld [vmem:[%s826 + $0x4] sm:$0xf]
        %v867 = vld [vmem:[%s826 + $0x8] sm:$0xf]
        %v868 = vld [vmem:[%s826 + $0xc] sm:$0xf]
        %v869 = vld [vmem:[%s829] sm:$0x1]
        %v870 = vld [vmem:[%s834] sm:$0xf]
        %v871 = vld [vmem:[%s834 + $0x4] sm:$0xf]
        %v872 = vld [vmem:[%s834 + $0x8] sm:$0xf]
        %v873 = vld [vmem:[%s834 + $0xc] sm:$0xf]
        %v874 = vld [vmem:[%s834 + $0x10] sm:$0xf]
        %v875 = vld [vmem:[%s834 + $0x14] sm:$0xf]
        %v876 = vld [vmem:[%s834 + $0x18] sm:$0xf]
        %v877 = vld [vmem:[%s834 + $0x1c] sm:$0xf]
        %v878 = vld [vmem:[%s834 + $0x20] sm:$0xf]
        %v879 = vld [vmem:[%s834 + $0x24] sm:$0xf]
        %v880 = vld [vmem:[%s834 + $0x28] sm:$0xf]
        %v881 = vld [vmem:[%s834 + $0x2c] sm:$0xf]
        %v882 = vld [vmem:[%s834 + $0x30] sm:$0xf]
        %v883 = vld [vmem:[%s834 + $0x34] sm:$0xf]
        %v884 = vld [vmem:[%s834 + $0x38] sm:$0xf]
        %v885 = vld [vmem:[%s834 + $0x3c] sm:$0xf]
        %v886 = vld [vmem:[%s837] sm:$0x1]
        %v887 = vld [vmem:[#allocation2] sm:$0xff]
        %v888 = vld [vmem:[%s787] sm:$0x1]
        %vm889 = vcmask 261120
        %v890 = vsel %vm889, %v887, 0.0
        %891 = vadd.xlane.f32.xlu0 %v890
        %v892 = vpop.xlane.xlu0 %891
        %v893 = vrcp.pop 32.0
        %v894 = vmul.f32 %v892, %v893
        %v895 = vsub.f32 %v887, %v894
        %v896 = vmul.f32 %v895, %v895
        %v897 = vsel %vm889, %v896, 0.0
        %898 = vadd.xlane.f32.xlu0 %v897
        %v899 = vpop.xlane.xlu0 %898
        %v900 = vmul.f32 %v899, %v893
        %v901 = vadd.f32 %v900, 1e-05
        %v902 = vrsqrt.pop %v901
        %v903 = vmul.f32 %v895, %v902
        %v905 = vlaneseq
        %v906 = vshrl.u32 %v905, 7
        %v907 = vsub.s32 0, %v906
        %v908 = vrot.slane %v851, %v907
        %v910 = vmul.f32 %v903, %v908
        %v912 = vlaneseq
        %v913 = vshrl.u32 %v912, 7
        %v914 = vsub.s32 0, %v913
        %v915 = vrot.slane %v852, %v914
        %v917 = vadd.f32 %v910, %v915
        %v918 = vpack.c.bf16 %v917, %v917
        %v920 = vlaneseq
        %v921 = vshrl.u32 %v920, 7
        %v922 = vsub.s32 0, %v921
        %v923 = vrot.slane %v859, %v922
        %v929 = vunpack.c.l.b16 %v855
        %v930 = vunpack.c.l.b16 %v856
        %v931 = vunpack.c.l.b16 %v857
        %v932 = vunpack.c.l.b16 %v858
        %v933 = vpack.c.b16 %v930, %v929
        %v934 = vpack.c.b16 %v932, %v931
        %v938 = vsel %vm889, %v918, 0
        %940 = vmatprep.subr.bf16.mxu0 0
        %941 = vmatpush1.bf16.msra.mxu0 0
        %942 = vmatprep.subr.bf16.mxu0 0
        %943 = vmatpush1.bf16.msra.mxu0 0
        %944 = vmatprep.subr.bf16.mxu0 0
        %945 = vmatpush1.bf16.msra.mxu0 0
        %946 = vmatprep.subr.bf16.mxu0 0
        %947 = vmatpush1.bf16.msra.mxu0 0
        %948 = vmatprep.subr.bf16.mxu0 0
        %949 = vmatpush1.bf16.msra.mxu0 0
        %950 = vmatprep.subr.bf16.mxu0 0
        %951 = vmatpush1.bf16.msra.mxu0 0
        %952 = vmatprep.subr.bf16.mxu0 0
        %953 = vmatpush1.bf16.msra.mxu0 %v934
        %954 = vmatprep.subr.bf16.mxu0 0
        %955 = vmatpush1.bf16.msra.mxu0 %v933
        %956 = vmatprep.subr.bf16.mxu0 0
        %957 = vmatpush2.bf16.msra.mxu0 0
        %958 = vmatprep.subr.bf16.mxu0 0
        %959 = vmatpush2.bf16.msra.mxu0 0
        %960 = vmatprep.subr.bf16.mxu0 0
        %961 = vmatpush2.bf16.msra.mxu0 0
        %962 = vmatprep.subr.bf16.mxu0 0
        %963 = vmatpush2.bf16.msra.mxu0 0
        %964 = vmatprep.subr.bf16.mxu0 0
        %965 = vmatpush2.bf16.msra.mxu0 0
        %966 = vmatprep.subr.bf16.mxu0 0
        %967 = vmatpush2.bf16.msra.mxu0 0
        %968 = vmatprep.subr.bf16.mxu0 0
        %969 = vmatpush2.bf16.msra.mxu0 0
        %970 = vmatprep.subr.bf16.mxu0 0
        %971 = vmatpush2.bf16.msra.mxu0 0
        %972 = vmatprep.mubr.bf16.mxu0 0
        %973 = vmatmul.mubr.bf16.gmra.mxu0 %v938
        %v974 = vpop.f32.mrf.mxu0
        %v975 = vadd.f32 %v923, %v974
        %v976 = vpop.f32.mrf.mxu0
        %v977 = vpop.f32.mrf.mxu0
        %v978 = vpop.f32.mrf.mxu0
        %979 = vdwg.mxu0
        %v980 = vmul.f32 %v975, %v849
        %982 = vrot.lane.b32.xlu0 %v975, 112
        %v983 = vpop.permute.xlu0 %982
        %985 = vrot.lane.b32.xlu0 %v975, 16
        %v986 = vpop.permute.xlu0 %985
        %vm988 = vcmask 130048
        %v989 = vsel %vm988, %v983, %v986
        %v990 = vmul.f32 %v989, %v850
        %v991 = vadd.f32 %v980, %v990
        %993 = vrot.lane.b32.xlu0 %v849, 32
        %v994 = vpop.permute.xlu0 %993
        %v996 = vmul.f32 %v975, %v994
        %997 = vrot.lane.b32.xlu0 %v975, 80
        %v998 = vpop.permute.xlu0 %997
        %v1000 = vsel %vm988, %v998, %v983
        %v1001 = vmul.f32 %v1000, %v850
        %1003 = vrot.lane.b32.xlu0 %v1001, 32
        %v1004 = vpop.permute.xlu0 %1003
        %v1006 = vadd.f32 %v996, %v1004
        %v1007 = vpack.c.bf16 %v991, %v991
        %v1008 = vpack.c.bf16 %v1006, %v1006
        %1010 = vrot.lane.b32.xlu0 %v1007, 112
        %v1011 = vpop.permute.xlu0 %1010
        %1013 = vrot.lane.b32.xlu0 %v1008, 80
        %v1014 = vpop.permute.xlu0 %1013
        %vm1015 = vcmask 31744
        %v1017 = vsel %vm1015, %v1011, 0
        %v1020 = vsel %vm1015, %v1014, 0
        %1022 = vmatprep.subr.bf16.mxu0 0
        %1023 = vmatpush1.bf16.xpose.msra.mxu0 0
        %1024 = vmatprep.subr.bf16.mxu0 0
        %1025 = vmatpush1.bf16.xpose.msra.mxu0 0
        %1026 = vmatprep.subr.bf16.mxu0 0
        %1027 = vmatpush1.bf16.xpose.msra.mxu0 0
        %1028 = vmatprep.subr.bf16.mxu0 0
        %1029 = vmatpush1.bf16.xpose.msra.mxu0 0
        %1030 = vmatprep.subr.bf16.mxu0 0
        %1031 = vmatpush1.bf16.xpose.msra.mxu0 0
        %1032 = vmatprep.subr.bf16.mxu0 0
        %1033 = vmatpush1.bf16.xpose.msra.mxu0 0
        %1034 = vmatprep.subr.bf16.mxu0 0
        %1035 = vmatpush1.bf16.xpose.msra.mxu0 0
        %1036 = vmatprep.subr.bf16.mxu0 0
        %1037 = vmatpush1.bf16.xpose.msra.mxu0 %v1020
        %1038 = vmatprep.subr.bf16.mxu0 0
        %1039 = vmatpush2.bf16.xpose.msra.mxu0 0
        %1040 = vmatprep.subr.bf16.mxu0 0
        %1041 = vmatpush2.bf16.xpose.msra.mxu0 0
        %1042 = vmatprep.subr.bf16.mxu0 0
        %1043 = vmatpush2.bf16.xpose.msra.mxu0 0
        %1044 = vmatprep.subr.bf16.mxu0 0
        %1045 = vmatpush2.bf16.xpose.msra.mxu0 0
        %1046 = vmatprep.subr.bf16.mxu0 0
        %1047 = vmatpush2.bf16.xpose.msra.mxu0 0
        %1048 = vmatprep.subr.bf16.mxu0 0
        %1049 = vmatpush2.bf16.xpose.msra.mxu0 0
        %1050 = vmatprep.subr.bf16.mxu0 0
        %1051 = vmatpush2.bf16.xpose.msra.mxu0 0
        %1052 = vmatprep.subr.bf16.mxu0 0
        %1053 = vmatpush2.bf16.xpose.msra.mxu0 0
        %1054 = vmatprep.mubr.bf16.mxu0 0
        %1055 = vmatmul.mubr.bf16.gmra.mxu0 %v1017
        %v1056 = vpop.f32.mrf.mxu0
        %v1057 = vadd.f32 0.0, %v1056
        %v1058 = vpop.f32.mrf.mxu0
        %v1059 = vpop.f32.mrf.mxu0
        %v1060 = vpop.f32.mrf.mxu0
        %1061 = vdwg.mxu0
        %1062 = vrot.lane.b32.xlu0 %v1008, 96
        %v1063 = vpop.permute.xlu0 %1062
        %v1065 = vsel %vm1015, %v1007, 0
        %v1068 = vsel %vm1015, %v1063, 0
        %1070 = vmatprep.subr.bf16.mxu0 0
        %1071 = vmatpush1.bf16.xpose.msra.mxu0 0
        %1072 = vmatprep.subr.bf16.mxu0 0
        %1073 = vmatpush1.bf16.xpose.msra.mxu0 0
        %1074 = vmatprep.subr.bf16.mxu0 0
        %1075 = vmatpush1.bf16.xpose.msra.mxu0 0
        %1076 = vmatprep.subr.bf16.mxu0 0
        %1077 = vmatpush1.bf16.xpose.msra.mxu0 0
        %1078 = vmatprep.subr.bf16.mxu0 0
        %1079 = vmatpush1.bf16.xpose.msra.mxu0 0
        %1080 = vmatprep.subr.bf16.mxu0 0
        %1081 = vmatpush1.bf16.xpose.msra.mxu0 0
        %1082 = vmatprep.subr.bf16.mxu0 0
        %1083 = vmatpush1.bf16.xpose.msra.mxu0 0
        %1084 = vmatprep.subr.bf16.mxu0 0
        %1085 = vmatpush1.bf16.xpose.msra.mxu0 %v1068
        %1086 = vmatprep.subr.bf16.mxu0 0
        %1087 = vmatpush2.bf16.xpose.msra.mxu0 0
        %1088 = vmatprep.subr.bf16.mxu0 0
        %1089 = vmatpush2.bf16.xpose.msra.mxu0 0
        %1090 = vmatprep.subr.bf16.mxu0 0
        %1091 = vmatpush2.bf16.xpose.msra.mxu0 0
        %1092 = vmatprep.subr.bf16.mxu0 0
        %1093 = vmatpush2.bf16.xpose.msra.mxu0 0
        %1094 = vmatprep.subr.bf16.mxu0 0
        %1095 = vmatpush2.bf16.xpose.msra.mxu0 0
        %1096 = vmatprep.subr.bf16.mxu0 0
        %1097 = vmatpush2.bf16.xpose.msra.mxu0 0
        %1098 = vmatprep.subr.bf16.mxu0 0
        %1099 = vmatpush2.bf16.xpose.msra.mxu0 0
        %1100 = vmatprep.subr.bf16.mxu0 0
        %1101 = vmatpush2.bf16.xpose.msra.mxu0 0
        %1102 = vmatprep.mubr.bf16.mxu0 0
        %1103 = vmatmul.mubr.bf16.gmra.mxu0 %v1065
        %v1104 = vpop.f32.mrf.mxu0
        %v1105 = vadd.f32 %v1057, %v1104
        %v1106 = vpop.f32.mrf.mxu0
        %v1107 = vpop.f32.mrf.mxu0
        %v1108 = vpop.f32.mrf.mxu0
        %1109 = vdwg.mxu0
        %v1111 = vlaneseq
        %v1112 = vshrl.u32 %v1111, 7
        %v1113 = vsub.s32 0, %v1112
        %v1114 = vrot.slane %v888, %v1113
        %v1116 = vadd.f32 %v1105, %v1114
        %vm1117 = vcmask 64512
        %v1118 = vsel %vm1117, %v1116, -inf
        %1119 = vmax.xlane.f32.xlu0 %v1118
        %v1120 = vpop.xlane.xlu0 %1119
        %v1121 = vsub.f32 %v1116, %v1120
        %v1122 = vmul.f32 %v1121, 1.442695
        %v1123 = vpow.pop %v1122
        %v1124 = vsel %vm1117, %v1123, 0.0
        %1125 = vadd.xlane.f32.xlu0 %v1124
        %v1126 = vpop.xlane.xlu0 %1125
        %v1127 = vrcp.pop %v1126
        %v1128 = vpack.c.bf16 %v975, %v975
        %v1129 = vpack.c.bf16 %v1123, %v1123
        %1131 = vrot.lane.b32.xlu0 %v1128, 64
        %v1132 = vpop.permute.xlu0 %1131
        %v1134 = vsel %vm1117, %v1129, 0
        %vm1136 = vcmask 1043456
        %v1138 = vsel %vm1136, %v1132, 0
        %1140 = vmatprep.subr.bf16.mxu0 0
        %1141 = vmatpush1.bf16.msra.mxu0 0
        %1142 = vmatprep.subr.bf16.mxu0 0
        %1143 = vmatpush1.bf16.msra.mxu0 0
        %1144 = vmatprep.subr.bf16.mxu0 0
        %1145 = vmatpush1.bf16.msra.mxu0 0
        %1146 = vmatprep.subr.bf16.mxu0 0
        %1147 = vmatpush1.bf16.msra.mxu0 0
        %1148 = vmatprep.subr.bf16.mxu0 0
        %1149 = vmatpush1.bf16.msra.mxu0 0
        %1150 = vmatprep.subr.bf16.mxu0 0
        %1151 = vmatpush1.bf16.msra.mxu0 0
        %1152 = vmatprep.subr.bf16.mxu0 0
        %1153 = vmatpush1.bf16.msra.mxu0 0
        %1154 = vmatprep.subr.bf16.mxu0 0
        %1155 = vmatpush1.bf16.msra.mxu0 %v1138
        %1156 = vmatprep.subr.bf16.mxu0 0
        %1157 = vmatpush2.bf16.msra.mxu0 0
        %1158 = vmatprep.subr.bf16.mxu0 0
        %1159 = vmatpush2.bf16.msra.mxu0 0
        %1160 = vmatprep.subr.bf16.mxu0 0
        %1161 = vmatpush2.bf16.msra.mxu0 0
        %1162 = vmatprep.subr.bf16.mxu0 0
        %1163 = vmatpush2.bf16.msra.mxu0 0
        %1164 = vmatprep.subr.bf16.mxu0 0
        %1165 = vmatpush2.bf16.msra.mxu0 0
        %1166 = vmatprep.subr.bf16.mxu0 0
        %1167 = vmatpush2.bf16.msra.mxu0 0
        %1168 = vmatprep.subr.bf16.mxu0 0
        %1169 = vmatpush2.bf16.msra.mxu0 0
        %1170 = vmatprep.subr.bf16.mxu0 0
        %1171 = vmatpush2.bf16.msra.mxu0 0
        %1172 = vmatprep.mubr.bf16.mxu0 0
        %1173 = vmatmul.mubr.bf16.gmra.mxu0 %v1134
        %v1174 = vpop.f32.mrf.mxu0
        %v1175 = vadd.f32 0.0, %v1174
        %v1176 = vpop.f32.mrf.mxu0
        %v1177 = vpop.f32.mrf.mxu0
        %v1178 = vpop.f32.mrf.mxu0
        %1179 = vdwg.mxu0
        %v1180 = vmul.f32 %v1175, %v1127
        %1181 = vst.msk [vmem:[#allocation3] sm:$0xff] %vm1117, %v1180
        %1182 = vrot.lane.b32.xlu0 %v1007, 108
        %v1183 = vpop.permute.xlu0 %1182
        %1184 = vrot.lane.b32.xlu0 %v1008, 76
        %v1185 = vpop.permute.xlu0 %1184
        %v1187 = vsel %vm1015, %v1183, 0
        %v1190 = vsel %vm1015, %v1185, 0
        %1192 = vmatprep.subr.bf16.mxu0 0
        %1193 = vmatpush1.bf16.xpose.msra.mxu0 0
        %1194 = vmatprep.subr.bf16.mxu0 0
        %1195 = vmatpush1.bf16.xpose.msra.mxu0 0
        %1196 = vmatprep.subr.bf16.mxu0 0
        %1197 = vmatpush1.bf16.xpose.msra.mxu0 0
        %1198 = vmatprep.subr.bf16.mxu0 0
        %1199 = vmatpush1.bf16.xpose.msra.mxu0 0
        %1200 = vmatprep.subr.bf16.mxu0 0
        %1201 = vmatpush1.bf16.xpose.msra.mxu0 0
        %1202 = vmatprep.subr.bf16.mxu0 0
        %1203 = vmatpush1.bf16.xpose.msra.mxu0 0
        %1204 = vmatprep.subr.bf16.mxu0 0
        %1205 = vmatpush1.bf16.xpose.msra.mxu0 0
        %1206 = vmatprep.subr.bf16.mxu0 0
        %1207 = vmatpush1.bf16.xpose.msra.mxu0 %v1190
        %1208 = vmatprep.subr.bf16.mxu0 0
        %1209 = vmatpush2.bf16.xpose.msra.mxu0 0
        %1210 = vmatprep.subr.bf16.mxu0 0
        %1211 = vmatpush2.bf16.xpose.msra.mxu0 0
        %1212 = vmatprep.subr.bf16.mxu0 0
        %1213 = vmatpush2.bf16.xpose.msra.mxu0 0
        %1214 = vmatprep.subr.bf16.mxu0 0
        %1215 = vmatpush2.bf16.xpose.msra.mxu0 0
        %1216 = vmatprep.subr.bf16.mxu0 0
        %1217 = vmatpush2.bf16.xpose.msra.mxu0 0
        %1218 = vmatprep.subr.bf16.mxu0 0
        %1219 = vmatpush2.bf16.xpose.msra.mxu0 0
        %1220 = vmatprep.subr.bf16.mxu0 0
        %1221 = vmatpush2.bf16.xpose.msra.mxu0 0
        %1222 = vmatprep.subr.bf16.mxu0 0
        %1223 = vmatpush2.bf16.xpose.msra.mxu0 0
        %1224 = vmatprep.mubr.bf16.mxu0 0
        %1225 = vmatmul.mubr.bf16.gmra.mxu0 %v1187
        %v1226 = vpop.f32.mrf.mxu0
        %v1227 = vadd.f32 0.0, %v1226
        %v1228 = vpop.f32.mrf.mxu0
        %v1229 = vpop.f32.mrf.mxu0
        %v1230 = vpop.f32.mrf.mxu0
        %1231 = vdwg.mxu0
        %1232 = vrot.lane.b32.xlu0 %v1007, 124
        %v1233 = vpop.permute.xlu0 %1232
        %1234 = vrot.lane.b32.xlu0 %v1008, 92
        %v1235 = vpop.permute.xlu0 %1234
        %v1237 = vsel %vm1015, %v1233, 0
        %v1240 = vsel %vm1015, %v1235, 0
        %1242 = vmatprep.subr.bf16.mxu0 0
        %1243 = vmatpush1.bf16.xpose.msra.mxu0 0
        %1244 = vmatprep.subr.bf16.mxu0 0
        %1245 = vmatpush1.bf16.xpose.msra.mxu0 0
        %1246 = vmatprep.subr.bf16.mxu0 0
        %1247 = vmatpush1.bf16.xpose.msra.mxu0 0
        %1248 = vmatprep.subr.bf16.mxu0 0
        %1249 = vmatpush1.bf16.xpose.msra.mxu0 0
        %1250 = vmatprep.subr.bf16.mxu0 0
        %1251 = vmatpush1.bf16.xpose.msra.mxu0 0
        %1252 = vmatprep.subr.bf16.mxu0 0
        %1253 = vmatpush1.bf16.xpose.msra.mxu0 0
        %1254 = vmatprep.subr.bf16.mxu0 0
        %1255 = vmatpush1.bf16.xpose.msra.mxu0 0
        %1256 = vmatprep.subr.bf16.mxu0 0
        %1257 = vmatpush1.bf16.xpose.msra.mxu0 %v1240
        %1258 = vmatprep.subr.bf16.mxu0 0
        %1259 = vmatpush2.bf16.xpose.msra.mxu0 0
        %1260 = vmatprep.subr.bf16.mxu0 0
        %1261 = vmatpush2.bf16.xpose.msra.mxu0 0
        %1262 = vmatprep.subr.bf16.mxu0 0
        %1263 = vmatpush2.bf16.xpose.msra.mxu0 0
        %1264 = vmatprep.subr.bf16.mxu0 0
        %1265 = vmatpush2.bf16.xpose.msra.mxu0 0
        %1266 = vmatprep.subr.bf16.mxu0 0
        %1267 = vmatpush2.bf16.xpose.msra.mxu0 0
        %1268 = vmatprep.subr.bf16.mxu0 0
        %1269 = vmatpush2.bf16.xpose.msra.mxu0 0
        %1270 = vmatprep.subr.bf16.mxu0 0
        %1271 = vmatpush2.bf16.xpose.msra.mxu0 0
        %1272 = vmatprep.subr.bf16.mxu0 0
        %1273 = vmatpush2.bf16.xpose.msra.mxu0 0
        %1274 = vmatprep.mubr.bf16.mxu0 0
        %1275 = vmatmul.mubr.bf16.gmra.mxu0 %v1237
        %v1276 = vpop.f32.mrf.mxu0
        %v1277 = vadd.f32 %v1227, %v1276
        %v1278 = vpop.f32.mrf.mxu0
        %v1279 = vpop.f32.mrf.mxu0
        %v1280 = vpop.f32.mrf.mxu0
        %1281 = vdwg.mxu0
        %v1282 = vadd.f32 %v1277, %v1114
        %v1283 = vsel %vm1117, %v1282, -inf
        %1284 = vmax.xlane.f32.xlu0 %v1283
        %v1285 = vpop.xlane.xlu0 %1284
        %v1286 = vsub.f32 %v1282, %v1285
        %v1287 = vmul.f32 %v1286, 1.442695
        %v1288 = vpow.pop %v1287
        %v1289 = vsel %vm1117, %v1288, 0.0
        %1290 = vadd.xlane.f32.xlu0 %v1289
        %v1291 = vpop.xlane.xlu0 %1290
        %v1292 = vrcp.pop %v1291
        %v1293 = vpack.c.bf16 %v1288, %v1288
        %1294 = vrot.lane.b32.xlu0 %v1128, 56
        %v1295 = vpop.permute.xlu0 %1294
        %v1297 = vsel %vm1117, %v1293, 0
        %v1300 = vsel %vm1136, %v1295, 0
        %1302 = vmatprep.subr.bf16.mxu0 0
        %1303 = vmatpush1.bf16.msra.mxu0 0
        %1304 = vmatprep.subr.bf16.mxu0 0
        %1305 = vmatpush1.bf16.msra.mxu0 0
        %1306 = vmatprep.subr.bf16.mxu0 0
        %1307 = vmatpush1.bf16.msra.mxu0 0
        %1308 = vmatprep.subr.bf16.mxu0 0
        %1309 = vmatpush1.bf16.msra.mxu0 0
        %1310 = vmatprep.subr.bf16.mxu0 0
        %1311 = vmatpush1.bf16.msra.mxu0 0
        %1312 = vmatprep.subr.bf16.mxu0 0
        %1313 = vmatpush1.bf16.msra.mxu0 0
        %1314 = vmatprep.subr.bf16.mxu0 0
        %1315 = vmatpush1.bf16.msra.mxu0 0
        %1316 = vmatprep.subr.bf16.mxu0 0
        %1317 = vmatpush1.bf16.msra.mxu0 %v1300
        %1318 = vmatprep.subr.bf16.mxu0 0
        %1319 = vmatpush2.bf16.msra.mxu0 0
        %1320 = vmatprep.subr.bf16.mxu0 0
        %1321 = vmatpush2.bf16.msra.mxu0 0
        %1322 = vmatprep.subr.bf16.mxu0 0
        %1323 = vmatpush2.bf16.msra.mxu0 0
        %1324 = vmatprep.subr.bf16.mxu0 0
        %1325 = vmatpush2.bf16.msra.mxu0 0
        %1326 = vmatprep.subr.bf16.mxu0 0
        %1327 = vmatpush2.bf16.msra.mxu0 0
        %1328 = vmatprep.subr.bf16.mxu0 0
        %1329 = vmatpush2.bf16.msra.mxu0 0
        %1330 = vmatprep.subr.bf16.mxu0 0
        %1331 = vmatpush2.bf16.msra.mxu0 0
        %1332 = vmatprep.subr.bf16.mxu0 0
        %1333 = vmatpush2.bf16.msra.mxu0 0
        %1334 = vmatprep.mubr.bf16.mxu0 0
        %1335 = vmatmul.mubr.bf16.gmra.mxu0 %v1297
        %v1336 = vpop.f32.mrf.mxu0
        %v1337 = vadd.f32 0.0, %v1336
        %v1338 = vpop.f32.mrf.mxu0
        %v1339 = vpop.f32.mrf.mxu0
        %v1340 = vpop.f32.mrf.mxu0
        %1341 = vdwg.mxu0
        %v1342 = vmul.f32 %v1337, %v1292
        %1344 = vrot.lane.b32.xlu0 %v1342, 8
        %v1345 = vpop.permute.xlu0 %1344
        %vm1347 = vcmask 130112
        %1348 = vst.msk [vmem:[#allocation3] sm:$0xff] %vm1347, %v1345
        %1349 = vrot.lane.b32.xlu0 %v1007, 104
        %v1350 = vpop.permute.xlu0 %1349
        %1351 = vrot.lane.b32.xlu0 %v1008, 72
        %v1352 = vpop.permute.xlu0 %1351
        %v1354 = vsel %vm1015, %v1350, 0
        %v1357 = vsel %vm1015, %v1352, 0
        %1359 = vmatprep.subr.bf16.mxu0 0
        %1360 = vmatpush1.bf16.xpose.msra.mxu0 0
        %1361 = vmatprep.subr.bf16.mxu0 0
        %1362 = vmatpush1.bf16.xpose.msra.mxu0 0
        %1363 = vmatprep.subr.bf16.mxu0 0
        %1364 = vmatpush1.bf16.xpose.msra.mxu0 0
        %1365 = vmatprep.subr.bf16.mxu0 0
        %1366 = vmatpush1.bf16.xpose.msra.mxu0 0
        %1367 = vmatprep.subr.bf16.mxu0 0
        %1368 = vmatpush1.bf16.xpose.msra.mxu0 0
        %1369 = vmatprep.subr.bf16.mxu0 0
        %1370 = vmatpush1.bf16.xpose.msra.mxu0 0
        %1371 = vmatprep.subr.bf16.mxu0 0
        %1372 = vmatpush1.bf16.xpose.msra.mxu0 0
        %1373 = vmatprep.subr.bf16.mxu0 0
        %1374 = vmatpush1.bf16.xpose.msra.mxu0 %v1357
        %1375 = vmatprep.subr.bf16.mxu0 0
        %1376 = vmatpush2.bf16.xpose.msra.mxu0 0
        %1377 = vmatprep.subr.bf16.mxu0 0
        %1378 = vmatpush2.bf16.xpose.msra.mxu0 0
        %1379 = vmatprep.subr.bf16.mxu0 0
        %1380 = vmatpush2.bf16.xpose.msra.mxu0 0
        %1381 = vmatprep.subr.bf16.mxu0 0
        %1382 = vmatpush2.bf16.xpose.msra.mxu0 0
        %1383 = vmatprep.subr.bf16.mxu0 0
        %1384 = vmatpush2.bf16.xpose.msra.mxu0 0
        %1385 = vmatprep.subr.bf16.mxu0 0
        %1386 = vmatpush2.bf16.xpose.msra.mxu0 0
        %1387 = vmatprep.subr.bf16.mxu0 0
        %1388 = vmatpush2.bf16.xpose.msra.mxu0 0
        %1389 = vmatprep.subr.bf16.mxu0 0
        %1390 = vmatpush2.bf16.xpose.msra.mxu0 0
        %1391 = vmatprep.mubr.bf16.mxu0 0
        %1392 = vmatmul.mubr.bf16.gmra.mxu0 %v1354
        %v1393 = vpop.f32.mrf.mxu0
        %v1394 = vadd.f32 0.0, %v1393
        %v1395 = vpop.f32.mrf.mxu0
        %v1396 = vpop.f32.mrf.mxu0
        %v1397 = vpop.f32.mrf.mxu0
        %1398 = vdwg.mxu0
        %1399 = vrot.lane.b32.xlu0 %v1007, 120
        %v1400 = vpop.permute.xlu0 %1399
        %1401 = vrot.lane.b32.xlu0 %v1008, 88
        %v1402 = vpop.permute.xlu0 %1401
        %v1404 = vsel %vm1015, %v1400, 0
        %v1407 = vsel %vm1015, %v1402, 0
        %1409 = vmatprep.subr.bf16.mxu0 0
        %1410 = vmatpush1.bf16.xpose.msra.mxu0 0
        %1411 = vmatprep.subr.bf16.mxu0 0
        %1412 = vmatpush1.bf16.xpose.msra.mxu0 0
        %1413 = vmatprep.subr.bf16.mxu0 0
        %1414 = vmatpush1.bf16.xpose.msra.mxu0 0
        %1415 = vmatprep.subr.bf16.mxu0 0
        %1416 = vmatpush1.bf16.xpose.msra.mxu0 0
        %1417 = vmatprep.subr.bf16.mxu0 0
        %1418 = vmatpush1.bf16.xpose.msra.mxu0 0
        %1419 = vmatprep.subr.bf16.mxu0 0
        %1420 = vmatpush1.bf16.xpose.msra.mxu0 0
        %1421 = vmatprep.subr.bf16.mxu0 0
        %1422 = vmatpush1.bf16.xpose.msra.mxu0 0
        %1423 = vmatprep.subr.bf16.mxu0 0
        %1424 = vmatpush1.bf16.xpose.msra.mxu0 %v1407
        %1425 = vmatprep.subr.bf16.mxu0 0
        %1426 = vmatpush2.bf16.xpose.msra.mxu0 0
        %1427 = vmatprep.subr.bf16.mxu0 0
        %1428 = vmatpush2.bf16.xpose.msra.mxu0 0
        %1429 = vmatprep.subr.bf16.mxu0 0
        %1430 = vmatpush2.bf16.xpose.msra.mxu0 0
        %1431 = vmatprep.subr.bf16.mxu0 0
        %1432 = vmatpush2.bf16.xpose.msra.mxu0 0
        %1433 = vmatprep.subr.bf16.mxu0 0
        %1434 = vmatpush2.bf16.xpose.msra.mxu0 0
        %1435 = vmatprep.subr.bf16.mxu0 0
        %1436 = vmatpush2.bf16.xpose.msra.mxu0 0
        %1437 = vmatprep.subr.bf16.mxu0 0
        %1438 = vmatpush2.bf16.xpose.msra.mxu0 0
        %1439 = vmatprep.subr.bf16.mxu0 0
        %1440 = vmatpush2.bf16.xpose.msra.mxu0 0
        %1441 = vmatprep.mubr.bf16.mxu0 0
        %1442 = vmatmul.mubr.bf16.gmra.mxu0 %v1404
        %v1443 = vpop.f32.mrf.mxu0
        %v1444 = vadd.f32 %v1394, %v1443
        %v1445 = vpop.f32.mrf.mxu0
        %v1446 = vpop.f32.mrf.mxu0
        %v1447 = vpop.f32.mrf.mxu0
        %1448 = vdwg.mxu0
        %v1449 = vadd.f32 %v1444, %v1114
        %v1450 = vsel %vm1117, %v1449, -inf
        %1451 = vmax.xlane.f32.xlu0 %v1450
        %v1452 = vpop.xlane.xlu0 %1451
        %v1453 = vsub.f32 %v1449, %v1452
        %v1454 = vmul.f32 %v1453, 1.442695
        %v1455 = vpow.pop %v1454
        %v1456 = vsel %vm1117, %v1455, 0.0
        %1457 = vadd.xlane.f32.xlu0 %v1456
        %v1458 = vpop.xlane.xlu0 %1457
        %v1459 = vrcp.pop %v1458
        %v1460 = vpack.c.bf16 %v1455, %v1455
        %1461 = vrot.lane.b32.xlu0 %v1128, 48
        %v1462 = vpop.permute.xlu0 %1461
        %v1464 = vsel %vm1117, %v1460, 0
        %v1467 = vsel %vm1136, %v1462, 0
        %1469 = vmatprep.subr.bf16.mxu0 0
        %1470 = vmatpush1.bf16.msra.mxu0 0
        %1471 = vmatprep.subr.bf16.mxu0 0
        %1472 = vmatpush1.bf16.msra.mxu0 0
        %1473 = vmatprep.subr.bf16.mxu0 0
        %1474 = vmatpush1.bf16.msra.mxu0 0
        %1475 = vmatprep.subr.bf16.mxu0 0
        %1476 = vmatpush1.bf16.msra.mxu0 0
        %1477 = vmatprep.subr.bf16.mxu0 0
        %1478 = vmatpush1.bf16.msra.mxu0 0
        %1479 = vmatprep.subr.bf16.mxu0 0
        %1480 = vmatpush1.bf16.msra.mxu0 0
        %1481 = vmatprep.subr.bf16.mxu0 0
        %1482 = vmatpush1.bf16.msra.mxu0 0
        %1483 = vmatprep.subr.bf16.mxu0 0
        %1484 = vmatpush1.bf16.msra.mxu0 %v1467
        %1485 = vmatprep.subr.bf16.mxu0 0
        %1486 = vmatpush2.bf16.msra.mxu0 0
        %1487 = vmatprep.subr.bf16.mxu0 0
        %1488 = vmatpush2.bf16.msra.mxu0 0
        %1489 = vmatprep.subr.bf16.mxu0 0
        %1490 = vmatpush2.bf16.msra.mxu0 0
        %1491 = vmatprep.subr.bf16.mxu0 0
        %1492 = vmatpush2.bf16.msra.mxu0 0
        %1493 = vmatprep.subr.bf16.mxu0 0
        %1494 = vmatpush2.bf16.msra.mxu0 0
        %1495 = vmatprep.subr.bf16.mxu0 0
        %1496 = vmatpush2.bf16.msra.mxu0 0
        %1497 = vmatprep.subr.bf16.mxu0 0
        %1498 = vmatpush2.bf16.msra.mxu0 0
        %1499 = vmatprep.subr.bf16.mxu0 0
        %1500 = vmatpush2.bf16.msra.mxu0 0
        %1501 = vmatprep.mubr.bf16.mxu0 0
        %1502 = vmatmul.mubr.bf16.gmra.mxu0 %v1464
        %v1503 = vpop.f32.mrf.mxu0
        %v1504 = vadd.f32 0.0, %v1503
        %v1505 = vpop.f32.mrf.mxu0
        %v1506 = vpop.f32.mrf.mxu0
        %v1507 = vpop.f32.mrf.mxu0
        %1508 = vdwg.mxu0
        %v1509 = vmul.f32 %v1504, %v1459
        %1511 = vrot.lane.b32.xlu0 %v1509, 16
        %v1512 = vpop.permute.xlu0 %1511
        %vm1514 = vcmask 195712
        %1515 = vst.msk [vmem:[#allocation3] sm:$0xff] %vm1514, %v1512
        %1516 = vrot.lane.b32.xlu0 %v1007, 100
        %v1517 = vpop.permute.xlu0 %1516
        %1518 = vrot.lane.b32.xlu0 %v1008, 68
        %v1519 = vpop.permute.xlu0 %1518
        %v1521 = vsel %vm1015, %v1517, 0
        %v1524 = vsel %vm1015, %v1519, 0
        %1526 = vmatprep.subr.bf16.mxu0 0
        %1527 = vmatpush1.bf16.xpose.msra.mxu0 0
        %1528 = vmatprep.subr.bf16.mxu0 0
        %1529 = vmatpush1.bf16.xpose.msra.mxu0 0
        %1530 = vmatprep.subr.bf16.mxu0 0
        %1531 = vmatpush1.bf16.xpose.msra.mxu0 0
        %1532 = vmatprep.subr.bf16.mxu0 0
        %1533 = vmatpush1.bf16.xpose.msra.mxu0 0
        %1534 = vmatprep.subr.bf16.mxu0 0
        %1535 = vmatpush1.bf16.xpose.msra.mxu0 0
        %1536 = vmatprep.subr.bf16.mxu0 0
        %1537 = vmatpush1.bf16.xpose.msra.mxu0 0
        %1538 = vmatprep.subr.bf16.mxu0 0
        %1539 = vmatpush1.bf16.xpose.msra.mxu0 0
        %1540 = vmatprep.subr.bf16.mxu0 0
        %1541 = vmatpush1.bf16.xpose.msra.mxu0 %v1524
        %1542 = vmatprep.subr.bf16.mxu0 0
        %1543 = vmatpush2.bf16.xpose.msra.mxu0 0
        %1544 = vmatprep.subr.bf16.mxu0 0
        %1545 = vmatpush2.bf16.xpose.msra.mxu0 0
        %1546 = vmatprep.subr.bf16.mxu0 0
        %1547 = vmatpush2.bf16.xpose.msra.mxu0 0
        %1548 = vmatprep.subr.bf16.mxu0 0
        %1549 = vmatpush2.bf16.xpose.msra.mxu0 0
        %1550 = vmatprep.subr.bf16.mxu0 0
        %1551 = vmatpush2.bf16.xpose.msra.mxu0 0
        %1552 = vmatprep.subr.bf16.mxu0 0
        %1553 = vmatpush2.bf16.xpose.msra.mxu0 0
        %1554 = vmatprep.subr.bf16.mxu0 0
        %1555 = vmatpush2.bf16.xpose.msra.mxu0 0
        %1556 = vmatprep.subr.bf16.mxu0 0
        %1557 = vmatpush2.bf16.xpose.msra.mxu0 0
        %1558 = vmatprep.mubr.bf16.mxu0 0
        %1559 = vmatmul.mubr.bf16.gmra.mxu0 %v1521
        %v1560 = vpop.f32.mrf.mxu0
        %v1561 = vadd.f32 0.0, %v1560
        %v1562 = vpop.f32.mrf.mxu0
        %v1563 = vpop.f32.mrf.mxu0
        %v1564 = vpop.f32.mrf.mxu0
        %1565 = vdwg.mxu0
        %1566 = vrot.lane.b32.xlu0 %v1007, 116
        %v1567 = vpop.permute.xlu0 %1566
        %1568 = vrot.lane.b32.xlu0 %v1008, 84
        %v1569 = vpop.permute.xlu0 %1568
        %v1571 = vsel %vm1015, %v1567, 0
        %v1574 = vsel %vm1015, %v1569, 0
        %1576 = vmatprep.subr.bf16.mxu0 0
        %1577 = vmatpush1.bf16.xpose.msra.mxu0 0
        %1578 = vmatprep.subr.bf16.mxu0 0
        %1579 = vmatpush1.bf16.xpose.msra.mxu0 0
        %1580 = vmatprep.subr.bf16.mxu0 0
        %1581 = vmatpush1.bf16.xpose.msra.mxu0 0
        %1582 = vmatprep.subr.bf16.mxu0 0
        %1583 = vmatpush1.bf16.xpose.msra.mxu0 0
        %1584 = vmatprep.subr.bf16.mxu0 0
        %1585 = vmatpush1.bf16.xpose.msra.mxu0 0
        %1586 = vmatprep.subr.bf16.mxu0 0
        %1587 = vmatpush1.bf16.xpose.msra.mxu0 0
        %1588 = vmatprep.subr.bf16.mxu0 0
        %1589 = vmatpush1.bf16.xpose.msra.mxu0 0
        %1590 = vmatprep.subr.bf16.mxu0 0
        %1591 = vmatpush1.bf16.xpose.msra.mxu0 %v1574
        %1592 = vmatprep.subr.bf16.mxu0 0
        %1593 = vmatpush2.bf16.xpose.msra.mxu0 0
        %1594 = vmatprep.subr.bf16.mxu0 0
        %1595 = vmatpush2.bf16.xpose.msra.mxu0 0
        %1596 = vmatprep.subr.bf16.mxu0 0
        %1597 = vmatpush2.bf16.xpose.msra.mxu0 0
        %1598 = vmatprep.subr.bf16.mxu0 0
        %1599 = vmatpush2.bf16.xpose.msra.mxu0 0
        %1600 = vmatprep.subr.bf16.mxu0 0
        %1601 = vmatpush2.bf16.xpose.msra.mxu0 0
        %1602 = vmatprep.subr.bf16.mxu0 0
        %1603 = vmatpush2.bf16.xpose.msra.mxu0 0
        %1604 = vmatprep.subr.bf16.mxu0 0
        %1605 = vmatpush2.bf16.xpose.msra.mxu0 0
        %1606 = vmatprep.subr.bf16.mxu0 0
        %1607 = vmatpush2.bf16.xpose.msra.mxu0 0
        %1608 = vmatprep.mubr.bf16.mxu0 0
        %1609 = vmatmul.mubr.bf16.gmra.mxu0 %v1571
        %v1610 = vpop.f32.mrf.mxu0
        %v1611 = vadd.f32 %v1561, %v1610
        %v1612 = vpop.f32.mrf.mxu0
        %v1613 = vpop.f32.mrf.mxu0
        %v1614 = vpop.f32.mrf.mxu0
        %1615 = vdwg.mxu0
        %v1616 = vadd.f32 %v1611, %v1114
        %v1617 = vsel %vm1117, %v1616, -inf
        %1618 = vmax.xlane.f32.xlu0 %v1617
        %v1619 = vpop.xlane.xlu0 %1618
        %v1620 = vsub.f32 %v1616, %v1619
        %v1621 = vmul.f32 %v1620, 1.442695
        %v1622 = vpow.pop %v1621
        %v1623 = vsel %vm1117, %v1622, 0.0
        %1624 = vadd.xlane.f32.xlu0 %v1623
        %v1625 = vpop.xlane.xlu0 %1624
        %v1626 = vrcp.pop %v1625
        %v1627 = vpack.c.bf16 %v1622, %v1622
        %1628 = vrot.lane.b32.xlu0 %v1128, 40
        %v1629 = vpop.permute.xlu0 %1628
        %v1631 = vsel %vm1117, %v1627, 0
        %v1634 = vsel %vm1136, %v1629, 0
        %1636 = vmatprep.subr.bf16.mxu0 0
        %1637 = vmatpush1.bf16.msra.mxu0 0
        %1638 = vmatprep.subr.bf16.mxu0 0
        %1639 = vmatpush1.bf16.msra.mxu0 0
        %1640 = vmatprep.subr.bf16.mxu0 0
        %1641 = vmatpush1.bf16.msra.mxu0 0
        %1642 = vmatprep.subr.bf16.mxu0 0
        %1643 = vmatpush1.bf16.msra.mxu0 0
        %1644 = vmatprep.subr.bf16.mxu0 0
        %1645 = vmatpush1.bf16.msra.mxu0 0
        %1646 = vmatprep.subr.bf16.mxu0 0
        %1647 = vmatpush1.bf16.msra.mxu0 0
        %1648 = vmatprep.subr.bf16.mxu0 0
        %1649 = vmatpush1.bf16.msra.mxu0 0
        %1650 = vmatprep.subr.bf16.mxu0 0
        %1651 = vmatpush1.bf16.msra.mxu0 %v1634
        %1652 = vmatprep.subr.bf16.mxu0 0
        %1653 = vmatpush2.bf16.msra.mxu0 0
        %1654 = vmatprep.subr.bf16.mxu0 0
        %1655 = vmatpush2.bf16.msra.mxu0 0
        %1656 = vmatprep.subr.bf16.mxu0 0
        %1657 = vmatpush2.bf16.msra.mxu0 0
        %1658 = vmatprep.subr.bf16.mxu0 0
        %1659 = vmatpush2.bf16.msra.mxu0 0
        %1660 = vmatprep.subr.bf16.mxu0 0
        %1661 = vmatpush2.bf16.msra.mxu0 0
        %1662 = vmatprep.subr.bf16.mxu0 0
        %1663 = vmatpush2.bf16.msra.mxu0 0
        %1664 = vmatprep.subr.bf16.mxu0 0
        %1665 = vmatpush2.bf16.msra.mxu0 0
        %1666 = vmatprep.subr.bf16.mxu0 0
        %1667 = vmatpush2.bf16.msra.mxu0 0
        %1668 = vmatprep.mubr.bf16.mxu0 0
        %1669 = vmatmul.mubr.bf16.gmra.mxu0 %v1631
        %v1670 = vpop.f32.mrf.mxu0
        %v1671 = vadd.f32 0.0, %v1670
        %v1672 = vpop.f32.mrf.mxu0
        %v1673 = vpop.f32.mrf.mxu0
        %v1674 = vpop.f32.mrf.mxu0
        %1675 = vdwg.mxu0
        %v1676 = vmul.f32 %v1671, %v1626
        %1678 = vrot.lane.b32.xlu0 %v1676, 24
        %v1679 = vpop.permute.xlu0 %1678
        %vm1681 = vcmask 261312
        %1682 = vst.msk [vmem:[#allocation3] sm:$0xff] %vm1681, %v1679
        %v1683 = vld [vmem:[#allocation3] sm:$0xff]
        %v1684 = vpack.c.bf16 %v1683, %v1683
        %v1689 = vunpack.c.l.b16 %v860
        %v1690 = vunpack.c.l.b16 %v861
        %v1691 = vunpack.c.l.b16 %v862
        %v1692 = vunpack.c.l.b16 %v863
        %v1693 = vpack.c.b16 %v1690, %v1689
        %v1694 = vpack.c.b16 %v1692, %v1691
        %v1698 = vsel %vm889, %v1684, 0
        %1700 = vmatprep.subr.bf16.mxu0 0
        %1701 = vmatpush1.bf16.msra.mxu0 0
        %1702 = vmatprep.subr.bf16.mxu0 0
        %1703 = vmatpush1.bf16.msra.mxu0 0
        %1704 = vmatprep.subr.bf16.mxu0 0
        %1705 = vmatpush1.bf16.msra.mxu0 0
        %1706 = vmatprep.subr.bf16.mxu0 0
        %1707 = vmatpush1.bf16.msra.mxu0 0
        %1708 = vmatprep.subr.bf16.mxu0 0
        %1709 = vmatpush1.bf16.msra.mxu0 0
        %1710 = vmatprep.subr.bf16.mxu0 0
        %1711 = vmatpush1.bf16.msra.mxu0 0
        %1712 = vmatprep.subr.bf16.mxu0 0
        %1713 = vmatpush1.bf16.msra.mxu0 %v1694
        %1714 = vmatprep.subr.bf16.mxu0 0
        %1715 = vmatpush1.bf16.msra.mxu0 %v1693
        %1716 = vmatprep.subr.bf16.mxu0 0
        %1717 = vmatpush2.bf16.msra.mxu0 0
        %1718 = vmatprep.subr.bf16.mxu0 0
        %1719 = vmatpush2.bf16.msra.mxu0 0
        %1720 = vmatprep.subr.bf16.mxu0 0
        %1721 = vmatpush2.bf16.msra.mxu0 0
        %1722 = vmatprep.subr.bf16.mxu0 0
        %1723 = vmatpush2.bf16.msra.mxu0 0
        %1724 = vmatprep.subr.bf16.mxu0 0
        %1725 = vmatpush2.bf16.msra.mxu0 0
        %1726 = vmatprep.subr.bf16.mxu0 0
        %1727 = vmatpush2.bf16.msra.mxu0 0
        %1728 = vmatprep.subr.bf16.mxu0 0
        %1729 = vmatpush2.bf16.msra.mxu0 0
        %1730 = vmatprep.subr.bf16.mxu0 0
        %1731 = vmatpush2.bf16.msra.mxu0 0
        %1732 = vmatprep.mubr.bf16.mxu0 0
        %1733 = vmatmul.mubr.bf16.gmra.mxu0 %v1698
        %v1734 = vpop.f32.mrf.mxu0
        %v1735 = vadd.f32 0.0, %v1734
        %v1736 = vpop.f32.mrf.mxu0
        %v1737 = vpop.f32.mrf.mxu0
        %v1738 = vpop.f32.mrf.mxu0
        %1739 = vdwg.mxu0
        %v1740 = vadd.f32 %v887, %v1735
        %v1742 = vlaneseq
        %v1743 = vshrl.u32 %v1742, 7
        %v1744 = vsub.s32 0, %v1743
        %v1745 = vrot.slane %v864, %v1744
        %v1747 = vadd.f32 %v1740, %v1745
        %v1748 = vsel %vm889, %v1747, 0.0
        %1749 = vadd.xlane.f32.xlu0 %v1748
        %v1750 = vpop.xlane.xlu0 %1749
        %v1751 = vmul.f32 %v1750, %v893
        %v1752 = vsub.f32 %v1747, %v1751
        %v1753 = vmul.f32 %v1752, %v1752
        %v1754 = vsel %vm889, %v1753, 0.0
        %1755 = vadd.xlane.f32.xlu0 %v1754
        %v1756 = vpop.xlane.xlu0 %1755
        %v1757 = vmul.f32 %v1756, %v893
        %v1758 = vadd.f32 %v1757, 1e-05
        %v1759 = vrsqrt.pop %v1758
        %v1760 = vmul.f32 %v1752, %v1759
        %v1762 = vlaneseq
        %v1763 = vshrl.u32 %v1762, 7
        %v1764 = vsub.s32 0, %v1763
        %v1765 = vrot.slane %v853, %v1764
        %v1767 = vmul.f32 %v1760, %v1765
        %v1769 = vlaneseq
        %v1770 = vshrl.u32 %v1769, 7
        %v1771 = vsub.s32 0, %v1770
        %v1772 = vrot.slane %v854, %v1771
        %v1774 = vadd.f32 %v1767, %v1772
        %v1775 = vpack.c.bf16 %v1774, %v1774
        %v1777 = vlaneseq
        %v1778 = vshrl.u32 %v1777, 7
        %v1779 = vsub.s32 0, %v1778
        %v1780 = vrot.slane %v869, %v1779
        %v1786 = vunpack.c.l.b16 %v865
        %v1787 = vunpack.c.l.b16 %v866
        %v1788 = vunpack.c.l.b16 %v867
        %v1789 = vunpack.c.l.b16 %v868
        %v1790 = vpack.c.b16 %v1787, %v1786
        %v1791 = vpack.c.b16 %v1789, %v1788
        %v1795 = vsel %vm889, %v1775, 0
        %1797 = vmatprep.subr.bf16.mxu0 0
        %1798 = vmatpush1.bf16.msra.mxu0 0
        %1799 = vmatprep.subr.bf16.mxu0 0
        %1800 = vmatpush1.bf16.msra.mxu0 0
        %1801 = vmatprep.subr.bf16.mxu0 0
        %1802 = vmatpush1.bf16.msra.mxu0 0
        %1803 = vmatprep.subr.bf16.mxu0 0
        %1804 = vmatpush1.bf16.msra.mxu0 0
        %1805 = vmatprep.subr.bf16.mxu0 0
        %1806 = vmatpush1.bf16.msra.mxu0 0
        %1807 = vmatprep.subr.bf16.mxu0 0
        %1808 = vmatpush1.bf16.msra.mxu0 0
        %1809 = vmatprep.subr.bf16.mxu0 0
        %1810 = vmatpush1.bf16.msra.mxu0 %v1791
        %1811 = vmatprep.subr.bf16.mxu0 0
        %1812 = vmatpush1.bf16.msra.mxu0 %v1790
        %1813 = vmatprep.subr.bf16.mxu0 0
        %1814 = vmatpush2.bf16.msra.mxu0 0
        %1815 = vmatprep.subr.bf16.mxu0 0
        %1816 = vmatpush2.bf16.msra.mxu0 0
        %1817 = vmatprep.subr.bf16.mxu0 0
        %1818 = vmatpush2.bf16.msra.mxu0 0
        %1819 = vmatprep.subr.bf16.mxu0 0
        %1820 = vmatpush2.bf16.msra.mxu0 0
        %1821 = vmatprep.subr.bf16.mxu0 0
        %1822 = vmatpush2.bf16.msra.mxu0 0
        %1823 = vmatprep.subr.bf16.mxu0 0
        %1824 = vmatpush2.bf16.msra.mxu0 0
        %1825 = vmatprep.subr.bf16.mxu0 0
        %1826 = vmatpush2.bf16.msra.mxu0 0
        %1827 = vmatprep.subr.bf16.mxu0 0
        %1828 = vmatpush2.bf16.msra.mxu0 0
        %1829 = vmatprep.mubr.bf16.mxu0 0
        %1830 = vmatmul.mubr.bf16.gmra.mxu0 %v1795
        %v1831 = vpop.f32.mrf.mxu0
        %v1832 = vadd.f32 %v1780, %v1831
        %v1833 = vpop.f32.mrf.mxu0
        %v1834 = vpop.f32.mrf.mxu0
        %v1835 = vpop.f32.mrf.mxu0
        %1836 = vdwg.mxu0
        %v1837 = vmul.f32 %v1832, %v1832
        %v1838 = vmul.f32 %v1832, %v1837
        %v1839 = vmul.f32 %v1838, 0.044715
        %v1840 = vadd.f32 %v1832, %v1839
        %v1841 = vmul.f32 %v1840, 0.7978846
        %v1842 = vtanh.pop %v1841
        %v1843 = vadd.f32 %v1842, 1.0
        %v1844 = vmul.f32 %v1843, 0.5
        %v1845 = vmul.f32 %v1832, %v1844
        %v1846 = vpack.c.bf16 %v1845, %v1845
        %v1863 = vunpack.c.l.b16 %v870
        %v1864 = vunpack.c.l.b16 %v871
        %v1865 = vunpack.c.l.b16 %v872
        %v1866 = vunpack.c.l.b16 %v873
        %v1867 = vunpack.c.l.b16 %v874
        %v1868 = vunpack.c.l.b16 %v875
        %v1869 = vunpack.c.l.b16 %v876
        %v1870 = vunpack.c.l.b16 %v877
        %v1871 = vunpack.c.l.b16 %v878
        %v1872 = vunpack.c.l.b16 %v879
        %v1873 = vunpack.c.l.b16 %v880
        %v1874 = vunpack.c.l.b16 %v881
        %v1875 = vunpack.c.l.b16 %v882
        %v1876 = vunpack.c.l.b16 %v883
        %v1877 = vunpack.c.l.b16 %v884
        %v1878 = vunpack.c.l.b16 %v885
        %v1879 = vpack.c.b16 %v1864, %v1863
        %v1880 = vpack.c.b16 %v1866, %v1865
        %v1881 = vpack.c.b16 %v1868, %v1867
        %v1882 = vpack.c.b16 %v1870, %v1869
        %v1883 = vpack.c.b16 %v1872, %v1871
        %v1884 = vpack.c.b16 %v1874, %v1873
        %v1885 = vpack.c.b16 %v1876, %v1875
        %v1886 = vpack.c.b16 %v1878, %v1877
        %1895 = vmatprep.subr.bf16.mxu0 0
        %1896 = vmatpush1.bf16.msra.mxu0 %v1886
        %1897 = vmatprep.subr.bf16.mxu0 0
        %1898 = vmatpush1.bf16.msra.mxu0 %v1885
        %1899 = vmatprep.subr.bf16.mxu0 0
        %1900 = vmatpush1.bf16.msra.mxu0 %v1884
        %1901 = vmatprep.subr.bf16.mxu0 0
        %1902 = vmatpush1.bf16.msra.mxu0 %v1883
        %1903 = vmatprep.subr.bf16.mxu0 0
        %1904 = vmatpush1.bf16.msra.mxu0 %v1882
        %1905 = vmatprep.subr.bf16.mxu0 0
        %1906 = vmatpush1.bf16.msra.mxu0 %v1881
        %1907 = vmatprep.subr.bf16.mxu0 0
        %1908 = vmatpush1.bf16.msra.mxu0 %v1880
        %1909 = vmatprep.subr.bf16.mxu0 0
        %1910 = vmatpush1.bf16.msra.mxu0 %v1879
        %1911 = vmatprep.subr.bf16.mxu0 0
        %1912 = vmatpush2.bf16.msra.mxu0 0
        %1913 = vmatprep.subr.bf16.mxu0 0
        %1914 = vmatpush2.bf16.msra.mxu0 0
        %1915 = vmatprep.subr.bf16.mxu0 0
        %1916 = vmatpush2.bf16.msra.mxu0 0
        %1917 = vmatprep.subr.bf16.mxu0 0
        %1918 = vmatpush2.bf16.msra.mxu0 0
        %1919 = vmatprep.subr.bf16.mxu0 0
        %1920 = vmatpush2.bf16.msra.mxu0 0
        %1921 = vmatprep.subr.bf16.mxu0 0
        %1922 = vmatpush2.bf16.msra.mxu0 0
        %1923 = vmatprep.subr.bf16.mxu0 0
        %1924 = vmatpush2.bf16.msra.mxu0 0
        %1925 = vmatprep.subr.bf16.mxu0 0
        %1926 = vmatpush2.bf16.msra.mxu0 0
        %1927 = vmatprep.mubr.bf16.mxu0 0
        %1928 = vmatmul.mubr.bf16.gmra.mxu0 %v1846
        %v1929 = vpop.f32.mrf.mxu0
        %v1930 = vadd.f32 0.0, %v1929
        %v1931 = vpop.f32.mrf.mxu0
        %v1932 = vpop.f32.mrf.mxu0
        %v1933 = vpop.f32.mrf.mxu0
        %1934 = vdwg.mxu0
        %v1935 = vadd.f32 %v1747, %v1930
        %v1937 = vlaneseq
        %v1938 = vshrl.u32 %v1937, 7
        %v1939 = vsub.s32 0, %v1938
        %v1940 = vrot.slane %v886, %v1939
        %v1942 = vadd.f32 %v1935, %v1940
        %1943 = vst.msk [vmem:[#allocation2] sm:$0xff] %vm889, %v1942
        %p1944 = scmp.eq.s32.totalorder %s36, 1
        // Predicated region
        $region101: #{tpu_custom_call.1} parent=95 // pred_check
          %p1945 = pneg %p1944
        $region102: #{tpu_custom_call.1} parent=95 // pred_check_branch
          %1947 = sbr.rel (%p1945) target = $region104
        $region103: #{tpu_custom_call.1} parent=95 // pred_region
          %v1948 = vld [vmem:[%s5] sm:$0x1]
          %v1949 = vld [vmem:[%s6] sm:$0x1]
          %v1950 = vsel %vm889, %v1942, 0.0
          %1951 = vadd.xlane.f32.xlu0 %v1950
          %v1952 = vpop.xlane.xlu0 %1951
          %v1953 = vmul.f32 %v1952, %v893
          %v1954 = vsub.f32 %v1942, %v1953
          %v1955 = vmul.f32 %v1954, %v1954
          %v1956 = vsel %vm889, %v1955, 0.0
          %1957 = vadd.xlane.f32.xlu0 %v1956
          %v1958 = vpop.xlane.xlu0 %1957
          %v1959 = vmul.f32 %v1958, %v893
          %v1960 = vadd.f32 %v1959, 1e-05
          %v1961 = vrsqrt.pop %v1960
          %v1962 = vmul.f32 %v1954, %v1961
          %v1964 = vlaneseq
          %v1965 = vshrl.u32 %v1964, 7
          %v1966 = vsub.s32 0, %v1965
          %v1967 = vrot.slane %v1948, %v1966
          %v1969 = vmul.f32 %v1962, %v1967
          %v1971 = vlaneseq
          %v1972 = vshrl.u32 %v1971, 7
          %v1973 = vsub.s32 0, %v1972
          %v1974 = vrot.slane %v1949, %v1973
          %v1976 = vadd.f32 %v1969, %v1974
          %v1977 = vld [vmem:[%s792] sm:$0x1]
          %v1979 = vsel %vm1117, %v1977, 0
          %1981 = vmatprep.subr.mxu0 0.0
          %1982 = vmatpush1.msra.mxu0 0.0
          %1983 = vmatprep.subr.mxu0 0.0
          %1984 = vmatpush1.msra.mxu0 0.0
          %1985 = vmatprep.subr.mxu0 0.0
          %1986 = vmatpush1.msra.mxu0 0.0
          %1987 = vmatprep.subr.mxu0 0.0
          %1988 = vmatpush1.msra.mxu0 0.0
          %1989 = vmatprep.subr.mxu0 0.0
          %1990 = vmatpush1.msra.mxu0 0.0
          %1991 = vmatprep.subr.mxu0 0.0
          %1992 = vmatpush1.msra.mxu0 0.0
          %1993 = vmatprep.subr.mxu0 0.0
          %1994 = vmatpush1.msra.mxu0 0.0
          %1995 = vmatprep.subr.mxu0 0.0
          %1996 = vmatpush1.msra.mxu0 0.0
          %1997 = vmatprep.subr.mxu0 0.0
          %1998 = vmatpush1.msra.mxu0 0.0
          %1999 = vmatprep.subr.mxu0 0.0
          %2000 = vmatpush1.msra.mxu0 0.0
          %2001 = vmatprep.subr.mxu0 0.0
          %2002 = vmatpush1.msra.mxu0 0.0
          %2003 = vmatprep.subr.mxu0 0.0
          %2004 = vmatpush1.msra.mxu0 0.0
          %2005 = vmatprep.subr.mxu0 0.0
          %2006 = vmatpush1.msra.mxu0 0.0
          %2007 = vmatprep.subr.mxu0 0.0
          %2008 = vmatpush1.msra.mxu0 0.0
          %2009 = vmatprep.subr.mxu0 0.0
          %2010 = vmatpush1.msra.mxu0 0.0
          %2011 = vmatprep.subr.mxu0 0.0
          %2012 = vmatpush1.msra.mxu0 %v1976
          %2013 = vmatprep.subr.mxu0 0.0
          %2014 = vmatpush2.msra.mxu0 0.0
          %2015 = vmatprep.subr.mxu0 0.0
          %2016 = vmatpush2.msra.mxu0 0.0
          %2017 = vmatprep.subr.mxu0 0.0
          %2018 = vmatpush2.msra.mxu0 0.0
          %2019 = vmatprep.subr.mxu0 0.0
          %2020 = vmatpush2.msra.mxu0 0.0
          %2021 = vmatprep.subr.mxu0 0.0
          %2022 = vmatpush2.msra.mxu0 0.0
          %2023 = vmatprep.subr.mxu0 0.0
          %2024 = vmatpush2.msra.mxu0 0.0
          %2025 = vmatprep.subr.mxu0 0.0
          %2026 = vmatpush2.msra.mxu0 0.0
          %2027 = vmatprep.subr.mxu0 0.0
          %2028 = vmatpush2.msra.mxu0 0.0
          %2029 = vmatprep.subr.mxu0 0.0
          %2030 = vmatpush2.msra.mxu0 0.0
          %2031 = vmatprep.subr.mxu0 0.0
          %2032 = vmatpush2.msra.mxu0 0.0
          %2033 = vmatprep.subr.mxu0 0.0
          %2034 = vmatpush2.msra.mxu0 0.0
          %2035 = vmatprep.subr.mxu0 0.0
          %2036 = vmatpush2.msra.mxu0 0.0
          %2037 = vmatprep.subr.mxu0 0.0
          %2038 = vmatpush2.msra.mxu0 0.0
          %2039 = vmatprep.subr.mxu0 0.0
          %2040 = vmatpush2.msra.mxu0 0.0
          %2041 = vmatprep.subr.mxu0 0.0
          %2042 = vmatpush2.msra.mxu0 0.0
          %2043 = vmatprep.subr.mxu0 0.0
          %2044 = vmatpush2.msra.mxu0 0.0
          %2045 = vmatprep.mubr.f32.mxu0 0.0
          %2046 = vmatmul.mubr.f32.gmra.mxu0 %v1979
          %v2047 = vpop.f32.mrf.mxu0
          %v2048 = vadd.f32 0.0, %v2047
          %v2049 = vpop.f32.mrf.mxu0
          %2050 = vdwg.mxu0
          %vm2051 = vcmask 57344
          %v2052 = vsel %vm2051, %v1977, 0.0
          %2053 = vadd.xlane.f32.xlu0 %v2052
          %v2054 = vpop.xlane.xlu0 %2053
          %v2055 = vmax.f32 %v2054, 1.0
          %v2056 = vrcp.pop %v2055
          %v2057 = vmul.f32 %v2048, %v2056
          %vm2058 = vcmask 253952
          %2059 = vst.msk [vmem:[#allocation4] sm:$0x1] %vm2058, %v2057
        $region104: #{tpu_custom_call.1} parent=95 // pred_fallthru
          _
        %s2060 = scalar_lea.vmem [#allocation2], 8
        %v2061 = vld [vmem:[%s2060] sm:$0xff]
        %s2062 = scalar_lea.vmem %s787, 1
        %v2063 = vld [vmem:[%s2062] sm:$0x1]
        %v2064 = vsel %vm889, %v2061, 0.0
        %2065 = vadd.xlane.f32.xlu0 %v2064
        %v2066 = vpop.xlane.xlu0 %2065
        %v2067 = vmul.f32 %v2066, %v893
        %v2068 = vsub.f32 %v2061, %v2067
        %v2069 = vmul.f32 %v2068, %v2068
        %v2070 = vsel %vm889, %v2069, 0.0
        %2071 = vadd.xlane.f32.xlu0 %v2070
        %v2072 = vpop.xlane.xlu0 %2071
        %v2073 = vmul.f32 %v2072, %v893
        %v2074 = vadd.f32 %v2073, 1e-05
        %v2075 = vrsqrt.pop %v2074
        %v2076 = vmul.f32 %v2068, %v2075
        %v2077 = vmul.f32 %v2076, %v908
        %v2078 = vadd.f32 %v2077, %v915
        %v2079 = vpack.c.bf16 %v2078, %v2078
        %v2081 = vsel %vm889, %v2079, 0
        %2083 = vmatprep.subr.bf16.mxu0 0
        %2084 = vmatpush1.bf16.msra.mxu0 0
        %2085 = vmatprep.subr.bf16.mxu0 0
        %2086 = vmatpush1.bf16.msra.mxu0 0
        %2087 = vmatprep.subr.bf16.mxu0 0
        %2088 = vmatpush1.bf16.msra.mxu0 0
        %2089 = vmatprep.subr.bf16.mxu0 0
        %2090 = vmatpush1.bf16.msra.mxu0 0
        %2091 = vmatprep.subr.bf16.mxu0 0
        %2092 = vmatpush1.bf16.msra.mxu0 0
        %2093 = vmatprep.subr.bf16.mxu0 0
        %2094 = vmatpush1.bf16.msra.mxu0 0
        %2095 = vmatprep.subr.bf16.mxu0 0
        %2096 = vmatpush1.bf16.msra.mxu0 %v934
        %2097 = vmatprep.subr.bf16.mxu0 0
        %2098 = vmatpush1.bf16.msra.mxu0 %v933
        %2099 = vmatprep.subr.bf16.mxu0 0
        %2100 = vmatpush2.bf16.msra.mxu0 0
        %2101 = vmatprep.subr.bf16.mxu0 0
        %2102 = vmatpush2.bf16.msra.mxu0 0
        %2103 = vmatprep.subr.bf16.mxu0 0
        %2104 = vmatpush2.bf16.msra.mxu0 0
        %2105 = vmatprep.subr.bf16.mxu0 0
        %2106 = vmatpush2.bf16.msra.mxu0 0
        %2107 = vmatprep.subr.bf16.mxu0 0
        %2108 = vmatpush2.bf16.msra.mxu0 0
        %2109 = vmatprep.subr.bf16.mxu0 0
        %2110 = vmatpush2.bf16.msra.mxu0 0
        %2111 = vmatprep.subr.bf16.mxu0 0
        %2112 = vmatpush2.bf16.msra.mxu0 0
        %2113 = vmatprep.subr.bf16.mxu0 0
        %2114 = vmatpush2.bf16.msra.mxu0 0
        %2115 = vmatprep.mubr.bf16.mxu0 0
        %2116 = vmatmul.mubr.bf16.gmra.mxu0 %v2081
        %v2117 = vpop.f32.mrf.mxu0
        %v2118 = vadd.f32 %v923, %v2117
        %v2119 = vpop.f32.mrf.mxu0
        %v2120 = vpop.f32.mrf.mxu0
        %v2121 = vpop.f32.mrf.mxu0
        %2122 = vdwg.mxu0
        %v2123 = vmul.f32 %v2118, %v849
        %2125 = vrot.lane.b32.xlu0 %v2118, 112
        %v2126 = vpop.permute.xlu0 %2125
        %2128 = vrot.lane.b32.xlu0 %v2118, 16
        %v2129 = vpop.permute.xlu0 %2128
        %v2131 = vsel %vm988, %v2126, %v2129
        %v2132 = vmul.f32 %v2131, %v850
        %v2133 = vadd.f32 %v2123, %v2132
        %v2134 = vmul.f32 %v2118, %v994
        %2135 = vrot.lane.b32.xlu0 %v2118, 80
        %v2136 = vpop.permute.xlu0 %2135
        %v2138 = vsel %vm988, %v2136, %v2126
        %v2139 = vmul.f32 %v2138, %v850
        %2141 = vrot.lane.b32.xlu0 %v2139, 32
        %v2142 = vpop.permute.xlu0 %2141
        %v2144 = vadd.f32 %v2134, %v2142
        %v2145 = vpack.c.bf16 %v2133, %v2133
        %v2146 = vpack.c.bf16 %v2144, %v2144
        %2148 = vrot.lane.b32.xlu0 %v2145, 112
        %v2149 = vpop.permute.xlu0 %2148
        %2151 = vrot.lane.b32.xlu0 %v2146, 80
        %v2152 = vpop.permute.xlu0 %2151
        %v2154 = vsel %vm1015, %v2149, 0
        %v2157 = vsel %vm1015, %v2152, 0
        %2159 = vmatprep.subr.bf16.mxu0 0
        %2160 = vmatpush1.bf16.xpose.msra.mxu0 0
        %2161 = vmatprep.subr.bf16.mxu0 0
        %2162 = vmatpush1.bf16.xpose.msra.mxu0 0
        %2163 = vmatprep.subr.bf16.mxu0 0
        %2164 = vmatpush1.bf16.xpose.msra.mxu0 0
        %2165 = vmatprep.subr.bf16.mxu0 0
        %2166 = vmatpush1.bf16.xpose.msra.mxu0 0
        %2167 = vmatprep.subr.bf16.mxu0 0
        %2168 = vmatpush1.bf16.xpose.msra.mxu0 0
        %2169 = vmatprep.subr.bf16.mxu0 0
        %2170 = vmatpush1.bf16.xpose.msra.mxu0 0
        %2171 = vmatprep.subr.bf16.mxu0 0
        %2172 = vmatpush1.bf16.xpose.msra.mxu0 0
        %2173 = vmatprep.subr.bf16.mxu0 0
        %2174 = vmatpush1.bf16.xpose.msra.mxu0 %v2157
        %2175 = vmatprep.subr.bf16.mxu0 0
        %2176 = vmatpush2.bf16.xpose.msra.mxu0 0
        %2177 = vmatprep.subr.bf16.mxu0 0
        %2178 = vmatpush2.bf16.xpose.msra.mxu0 0
        %2179 = vmatprep.subr.bf16.mxu0 0
        %2180 = vmatpush2.bf16.xpose.msra.mxu0 0
        %2181 = vmatprep.subr.bf16.mxu0 0
        %2182 = vmatpush2.bf16.xpose.msra.mxu0 0
        %2183 = vmatprep.subr.bf16.mxu0 0
        %2184 = vmatpush2.bf16.xpose.msra.mxu0 0
        %2185 = vmatprep.subr.bf16.mxu0 0
        %2186 = vmatpush2.bf16.xpose.msra.mxu0 0
        %2187 = vmatprep.subr.bf16.mxu0 0
        %2188 = vmatpush2.bf16.xpose.msra.mxu0 0
        %2189 = vmatprep.subr.bf16.mxu0 0
        %2190 = vmatpush2.bf16.xpose.msra.mxu0 0
        %2191 = vmatprep.mubr.bf16.mxu0 0
        %2192 = vmatmul.mubr.bf16.gmra.mxu0 %v2154
        %v2193 = vpop.f32.mrf.mxu0
        %v2194 = vadd.f32 0.0, %v2193
        %v2195 = vpop.f32.mrf.mxu0
        %v2196 = vpop.f32.mrf.mxu0
        %v2197 = vpop.f32.mrf.mxu0
        %2198 = vdwg.mxu0
        %2199 = vrot.lane.b32.xlu0 %v2146, 96
        %v2200 = vpop.permute.xlu0 %2199
        %v2202 = vsel %vm1015, %v2145, 0
        %v2205 = vsel %vm1015, %v2200, 0
        %2207 = vmatprep.subr.bf16.mxu0 0
        %2208 = vmatpush1.bf16.xpose.msra.mxu0 0
        %2209 = vmatprep.subr.bf16.mxu0 0
        %2210 = vmatpush1.bf16.xpose.msra.mxu0 0
        %2211 = vmatprep.subr.bf16.mxu0 0
        %2212 = vmatpush1.bf16.xpose.msra.mxu0 0
        %2213 = vmatprep.subr.bf16.mxu0 0
        %2214 = vmatpush1.bf16.xpose.msra.mxu0 0
        %2215 = vmatprep.subr.bf16.mxu0 0
        %2216 = vmatpush1.bf16.xpose.msra.mxu0 0
        %2217 = vmatprep.subr.bf16.mxu0 0
        %2218 = vmatpush1.bf16.xpose.msra.mxu0 0
        %2219 = vmatprep.subr.bf16.mxu0 0
        %2220 = vmatpush1.bf16.xpose.msra.mxu0 0
        %2221 = vmatprep.subr.bf16.mxu0 0
        %2222 = vmatpush1.bf16.xpose.msra.mxu0 %v2205
        %2223 = vmatprep.subr.bf16.mxu0 0
        %2224 = vmatpush2.bf16.xpose.msra.mxu0 0
        %2225 = vmatprep.subr.bf16.mxu0 0
        %2226 = vmatpush2.bf16.xpose.msra.mxu0 0
        %2227 = vmatprep.subr.bf16.mxu0 0
        %2228 = vmatpush2.bf16.xpose.msra.mxu0 0
        %2229 = vmatprep.subr.bf16.mxu0 0
        %2230 = vmatpush2.bf16.xpose.msra.mxu0 0
        %2231 = vmatprep.subr.bf16.mxu0 0
        %2232 = vmatpush2.bf16.xpose.msra.mxu0 0
        %2233 = vmatprep.subr.bf16.mxu0 0
        %2234 = vmatpush2.bf16.xpose.msra.mxu0 0
        %2235 = vmatprep.subr.bf16.mxu0 0
        %2236 = vmatpush2.bf16.xpose.msra.mxu0 0
        %2237 = vmatprep.subr.bf16.mxu0 0
        %2238 = vmatpush2.bf16.xpose.msra.mxu0 0
        %2239 = vmatprep.mubr.bf16.mxu0 0
        %2240 = vmatmul.mubr.bf16.gmra.mxu0 %v2202
        %v2241 = vpop.f32.mrf.mxu0
        %v2242 = vadd.f32 %v2194, %v2241
        %v2243 = vpop.f32.mrf.mxu0
        %v2244 = vpop.f32.mrf.mxu0
        %v2245 = vpop.f32.mrf.mxu0
        %2246 = vdwg.mxu0
        %v2248 = vlaneseq
        %v2249 = vshrl.u32 %v2248, 7
        %v2250 = vsub.s32 0, %v2249
        %v2251 = vrot.slane %v2063, %v2250
        %v2253 = vadd.f32 %v2242, %v2251
        %v2254 = vsel %vm1117, %v2253, -inf
        %2255 = vmax.xlane.f32.xlu0 %v2254
        %v2256 = vpop.xlane.xlu0 %2255
        %v2257 = vsub.f32 %v2253, %v2256
        %v2258 = vmul.f32 %v2257, 1.442695
        %v2259 = vpow.pop %v2258
        %v2260 = vsel %vm1117, %v2259, 0.0
        %2261 = vadd.xlane.f32.xlu0 %v2260
        %v2262 = vpop.xlane.xlu0 %2261
        %v2263 = vrcp.pop %v2262
        %v2264 = vpack.c.bf16 %v2118, %v2118
        %v2265 = vpack.c.bf16 %v2259, %v2259
        %2267 = vrot.lane.b32.xlu0 %v2264, 64
        %v2268 = vpop.permute.xlu0 %2267
        %v2270 = vsel %vm1117, %v2265, 0
        %v2273 = vsel %vm1136, %v2268, 0
        %2275 = vmatprep.subr.bf16.mxu0 0
        %2276 = vmatpush1.bf16.msra.mxu0 0
        %2277 = vmatprep.subr.bf16.mxu0 0
        %2278 = vmatpush1.bf16.msra.mxu0 0
        %2279 = vmatprep.subr.bf16.mxu0 0
        %2280 = vmatpush1.bf16.msra.mxu0 0
        %2281 = vmatprep.subr.bf16.mxu0 0
        %2282 = vmatpush1.bf16.msra.mxu0 0
        %2283 = vmatprep.subr.bf16.mxu0 0
        %2284 = vmatpush1.bf16.msra.mxu0 0
        %2285 = vmatprep.subr.bf16.mxu0 0
        %2286 = vmatpush1.bf16.msra.mxu0 0
        %2287 = vmatprep.subr.bf16.mxu0 0
        %2288 = vmatpush1.bf16.msra.mxu0 0
        %2289 = vmatprep.subr.bf16.mxu0 0
        %2290 = vmatpush1.bf16.msra.mxu0 %v2273
        %2291 = vmatprep.subr.bf16.mxu0 0
        %2292 = vmatpush2.bf16.msra.mxu0 0
        %2293 = vmatprep.subr.bf16.mxu0 0
        %2294 = vmatpush2.bf16.msra.mxu0 0
        %2295 = vmatprep.subr.bf16.mxu0 0
        %2296 = vmatpush2.bf16.msra.mxu0 0
        %2297 = vmatprep.subr.bf16.mxu0 0
        %2298 = vmatpush2.bf16.msra.mxu0 0
        %2299 = vmatprep.subr.bf16.mxu0 0
        %2300 = vmatpush2.bf16.msra.mxu0 0
        %2301 = vmatprep.subr.bf16.mxu0 0
        %2302 = vmatpush2.bf16.msra.mxu0 0
        %2303 = vmatprep.subr.bf16.mxu0 0
        %2304 = vmatpush2.bf16.msra.mxu0 0
        %2305 = vmatprep.subr.bf16.mxu0 0
        %2306 = vmatpush2.bf16.msra.mxu0 0
        %2307 = vmatprep.mubr.bf16.mxu0 0
        %2308 = vmatmul.mubr.bf16.gmra.mxu0 %v2270
        %v2309 = vpop.f32.mrf.mxu0
        %v2310 = vadd.f32 0.0, %v2309
        %v2311 = vpop.f32.mrf.mxu0
        %v2312 = vpop.f32.mrf.mxu0
        %v2313 = vpop.f32.mrf.mxu0
        %2314 = vdwg.mxu0
        %v2315 = vmul.f32 %v2310, %v2263
        %2316 = vst.msk [vmem:[#allocation3] sm:$0xff] %vm1117, %v2315
        %2317 = vrot.lane.b32.xlu0 %v2145, 108
        %v2318 = vpop.permute.xlu0 %2317
        %2319 = vrot.lane.b32.xlu0 %v2146, 76
        %v2320 = vpop.permute.xlu0 %2319
        %v2322 = vsel %vm1015, %v2318, 0
        %v2325 = vsel %vm1015, %v2320, 0
        %2327 = vmatprep.subr.bf16.mxu0 0
        %2328 = vmatpush1.bf16.xpose.msra.mxu0 0
        %2329 = vmatprep.subr.bf16.mxu0 0
        %2330 = vmatpush1.bf16.xpose.msra.mxu0 0
        %2331 = vmatprep.subr.bf16.mxu0 0
        %2332 = vmatpush1.bf16.xpose.msra.mxu0 0
        %2333 = vmatprep.subr.bf16.mxu0 0
        %2334 = vmatpush1.bf16.xpose.msra.mxu0 0
        %2335 = vmatprep.subr.bf16.mxu0 0
        %2336 = vmatpush1.bf16.xpose.msra.mxu0 0
        %2337 = vmatprep.subr.bf16.mxu0 0
        %2338 = vmatpush1.bf16.xpose.msra.mxu0 0
        %2339 = vmatprep.subr.bf16.mxu0 0
        %2340 = vmatpush1.bf16.xpose.msra.mxu0 0
        %2341 = vmatprep.subr.bf16.mxu0 0
        %2342 = vmatpush1.bf16.xpose.msra.mxu0 %v2325
        %2343 = vmatprep.subr.bf16.mxu0 0
        %2344 = vmatpush2.bf16.xpose.msra.mxu0 0
        %2345 = vmatprep.subr.bf16.mxu0 0
        %2346 = vmatpush2.bf16.xpose.msra.mxu0 0
        %2347 = vmatprep.subr.bf16.mxu0 0
        %2348 = vmatpush2.bf16.xpose.msra.mxu0 0
        %2349 = vmatprep.subr.bf16.mxu0 0
        %2350 = vmatpush2.bf16.xpose.msra.mxu0 0
        %2351 = vmatprep.subr.bf16.mxu0 0
        %2352 = vmatpush2.bf16.xpose.msra.mxu0 0
        %2353 = vmatprep.subr.bf16.mxu0 0
        %2354 = vmatpush2.bf16.xpose.msra.mxu0 0
        %2355 = vmatprep.subr.bf16.mxu0 0
        %2356 = vmatpush2.bf16.xpose.msra.mxu0 0
        %2357 = vmatprep.subr.bf16.mxu0 0
        %2358 = vmatpush2.bf16.xpose.msra.mxu0 0
        %2359 = vmatprep.mubr.bf16.mxu0 0
        %2360 = vmatmul.mubr.bf16.gmra.mxu0 %v2322
        %v2361 = vpop.f32.mrf.mxu0
        %v2362 = vadd.f32 0.0, %v2361
        %v2363 = vpop.f32.mrf.mxu0
        %v2364 = vpop.f32.mrf.mxu0
        %v2365 = vpop.f32.mrf.mxu0
        %2366 = vdwg.mxu0
        %2367 = vrot.lane.b32.xlu0 %v2145, 124
        %v2368 = vpop.permute.xlu0 %2367
        %2369 = vrot.lane.b32.xlu0 %v2146, 92
        %v2370 = vpop.permute.xlu0 %2369
        %v2372 = vsel %vm1015, %v2368, 0
        %v2375 = vsel %vm1015, %v2370, 0
        %2377 = vmatprep.subr.bf16.mxu0 0
        %2378 = vmatpush1.bf16.xpose.msra.mxu0 0
        %2379 = vmatprep.subr.bf16.mxu0 0
        %2380 = vmatpush1.bf16.xpose.msra.mxu0 0
        %2381 = vmatprep.subr.bf16.mxu0 0
        %2382 = vmatpush1.bf16.xpose.msra.mxu0 0
        %2383 = vmatprep.subr.bf16.mxu0 0
        %2384 = vmatpush1.bf16.xpose.msra.mxu0 0
        %2385 = vmatprep.subr.bf16.mxu0 0
        %2386 = vmatpush1.bf16.xpose.msra.mxu0 0
        %2387 = vmatprep.subr.bf16.mxu0 0
        %2388 = vmatpush1.bf16.xpose.msra.mxu0 0
        %2389 = vmatprep.subr.bf16.mxu0 0
        %2390 = vmatpush1.bf16.xpose.msra.mxu0 0
        %2391 = vmatprep.subr.bf16.mxu0 0
        %2392 = vmatpush1.bf16.xpose.msra.mxu0 %v2375
        %2393 = vmatprep.subr.bf16.mxu0 0
        %2394 = vmatpush2.bf16.xpose.msra.mxu0 0
        %2395 = vmatprep.subr.bf16.mxu0 0
        %2396 = vmatpush2.bf16.xpose.msra.mxu0 0
        %2397 = vmatprep.subr.bf16.mxu0 0
        %2398 = vmatpush2.bf16.xpose.msra.mxu0 0
        %2399 = vmatprep.subr.bf16.mxu0 0
        %2400 = vmatpush2.bf16.xpose.msra.mxu0 0
        %2401 = vmatprep.subr.bf16.mxu0 0
        %2402 = vmatpush2.bf16.xpose.msra.mxu0 0
        %2403 = vmatprep.subr.bf16.mxu0 0
        %2404 = vmatpush2.bf16.xpose.msra.mxu0 0
        %2405 = vmatprep.subr.bf16.mxu0 0
        %2406 = vmatpush2.bf16.xpose.msra.mxu0 0
        %2407 = vmatprep.subr.bf16.mxu0 0
        %2408 = vmatpush2.bf16.xpose.msra.mxu0 0
        %2409 = vmatprep.mubr.bf16.mxu0 0
        %2410 = vmatmul.mubr.bf16.gmra.mxu0 %v2372
        %v2411 = vpop.f32.mrf.mxu0
        %v2412 = vadd.f32 %v2362, %v2411
        %v2413 = vpop.f32.mrf.mxu0
        %v2414 = vpop.f32.mrf.mxu0
        %v2415 = vpop.f32.mrf.mxu0
        %2416 = vdwg.mxu0
        %v2417 = vadd.f32 %v2412, %v2251
        %v2418 = vsel %vm1117, %v2417, -inf
        %2419 = vmax.xlane.f32.xlu0 %v2418
        %v2420 = vpop.xlane.xlu0 %2419
        %v2421 = vsub.f32 %v2417, %v2420
        %v2422 = vmul.f32 %v2421, 1.442695
        %v2423 = vpow.pop %v2422
        %v2424 = vsel %vm1117, %v2423, 0.0
        %2425 = vadd.xlane.f32.xlu0 %v2424
        %v2426 = vpop.xlane.xlu0 %2425
        %v2427 = vrcp.pop %v2426
        %v2428 = vpack.c.bf16 %v2423, %v2423
        %2429 = vrot.lane.b32.xlu0 %v2264, 56
        %v2430 = vpop.permute.xlu0 %2429
        %v2432 = vsel %vm1117, %v2428, 0
        %v2435 = vsel %vm1136, %v2430, 0
        %2437 = vmatprep.subr.bf16.mxu0 0
        %2438 = vmatpush1.bf16.msra.mxu0 0
        %2439 = vmatprep.subr.bf16.mxu0 0
        %2440 = vmatpush1.bf16.msra.mxu0 0
        %2441 = vmatprep.subr.bf16.mxu0 0
        %2442 = vmatpush1.bf16.msra.mxu0 0
        %2443 = vmatprep.subr.bf16.mxu0 0
        %2444 = vmatpush1.bf16.msra.mxu0 0
        %2445 = vmatprep.subr.bf16.mxu0 0
        %2446 = vmatpush1.bf16.msra.mxu0 0
        %2447 = vmatprep.subr.bf16.mxu0 0
        %2448 = vmatpush1.bf16.msra.mxu0 0
        %2449 = vmatprep.subr.bf16.mxu0 0
        %2450 = vmatpush1.bf16.msra.mxu0 0
        %2451 = vmatprep.subr.bf16.mxu0 0
        %2452 = vmatpush1.bf16.msra.mxu0 %v2435
        %2453 = vmatprep.subr.bf16.mxu0 0
        %2454 = vmatpush2.bf16.msra.mxu0 0
        %2455 = vmatprep.subr.bf16.mxu0 0
        %2456 = vmatpush2.bf16.msra.mxu0 0
        %2457 = vmatprep.subr.bf16.mxu0 0
        %2458 = vmatpush2.bf16.msra.mxu0 0
        %2459 = vmatprep.subr.bf16.mxu0 0
        %2460 = vmatpush2.bf16.msra.mxu0 0
        %2461 = vmatprep.subr.bf16.mxu0 0
        %2462 = vmatpush2.bf16.msra.mxu0 0
        %2463 = vmatprep.subr.bf16.mxu0 0
        %2464 = vmatpush2.bf16.msra.mxu0 0
        %2465 = vmatprep.subr.bf16.mxu0 0
        %2466 = vmatpush2.bf16.msra.mxu0 0
        %2467 = vmatprep.subr.bf16.mxu0 0
        %2468 = vmatpush2.bf16.msra.mxu0 0
        %2469 = vmatprep.mubr.bf16.mxu0 0
        %2470 = vmatmul.mubr.bf16.gmra.mxu0 %v2432
        %v2471 = vpop.f32.mrf.mxu0
        %v2472 = vadd.f32 0.0, %v2471
        %v2473 = vpop.f32.mrf.mxu0
        %v2474 = vpop.f32.mrf.mxu0
        %v2475 = vpop.f32.mrf.mxu0
        %2476 = vdwg.mxu0
        %v2477 = vmul.f32 %v2472, %v2427
        %2479 = vrot.lane.b32.xlu0 %v2477, 8
        %v2480 = vpop.permute.xlu0 %2479
        %2482 = vst.msk [vmem:[#allocation3] sm:$0xff] %vm1347, %v2480
        %2483 = vrot.lane.b32.xlu0 %v2145, 104
        %v2484 = vpop.permute.xlu0 %2483
        %2485 = vrot.lane.b32.xlu0 %v2146, 72
        %v2486 = vpop.permute.xlu0 %2485
        %v2488 = vsel %vm1015, %v2484, 0
        %v2491 = vsel %vm1015, %v2486, 0
        %2493 = vmatprep.subr.bf16.mxu0 0
        %2494 = vmatpush1.bf16.xpose.msra.mxu0 0
        %2495 = vmatprep.subr.bf16.mxu0 0
        %2496 = vmatpush1.bf16.xpose.msra.mxu0 0
        %2497 = vmatprep.subr.bf16.mxu0 0
        %2498 = vmatpush1.bf16.xpose.msra.mxu0 0
        %2499 = vmatprep.subr.bf16.mxu0 0
        %2500 = vmatpush1.bf16.xpose.msra.mxu0 0
        %2501 = vmatprep.subr.bf16.mxu0 0
        %2502 = vmatpush1.bf16.xpose.msra.mxu0 0
        %2503 = vmatprep.subr.bf16.mxu0 0
        %2504 = vmatpush1.bf16.xpose.msra.mxu0 0
        %2505 = vmatprep.subr.bf16.mxu0 0
        %2506 = vmatpush1.bf16.xpose.msra.mxu0 0
        %2507 = vmatprep.subr.bf16.mxu0 0
        %2508 = vmatpush1.bf16.xpose.msra.mxu0 %v2491
        %2509 = vmatprep.subr.bf16.mxu0 0
        %2510 = vmatpush2.bf16.xpose.msra.mxu0 0
        %2511 = vmatprep.subr.bf16.mxu0 0
        %2512 = vmatpush2.bf16.xpose.msra.mxu0 0
        %2513 = vmatprep.subr.bf16.mxu0 0
        %2514 = vmatpush2.bf16.xpose.msra.mxu0 0
        %2515 = vmatprep.subr.bf16.mxu0 0
        %2516 = vmatpush2.bf16.xpose.msra.mxu0 0
        %2517 = vmatprep.subr.bf16.mxu0 0
        %2518 = vmatpush2.bf16.xpose.msra.mxu0 0
        %2519 = vmatprep.subr.bf16.mxu0 0
        %2520 = vmatpush2.bf16.xpose.msra.mxu0 0
        %2521 = vmatprep.subr.bf16.mxu0 0
        %2522 = vmatpush2.bf16.xpose.msra.mxu0 0
        %2523 = vmatprep.subr.bf16.mxu0 0
        %2524 = vmatpush2.bf16.xpose.msra.mxu0 0
        %2525 = vmatprep.mubr.bf16.mxu0 0
        %2526 = vmatmul.mubr.bf16.gmra.mxu0 %v2488
        %v2527 = vpop.f32.mrf.mxu0
        %v2528 = vadd.f32 0.0, %v2527
        %v2529 = vpop.f32.mrf.mxu0
        %v2530 = vpop.f32.mrf.mxu0
        %v2531 = vpop.f32.mrf.mxu0
        %2532 = vdwg.mxu0
        %2533 = vrot.lane.b32.xlu0 %v2145, 120
        %v2534 = vpop.permute.xlu0 %2533
        %2535 = vrot.lane.b32.xlu0 %v2146, 88
        %v2536 = vpop.permute.xlu0 %2535
        %v2538 = vsel %vm1015, %v2534, 0
        %v2541 = vsel %vm1015, %v2536, 0
        %2543 = vmatprep.subr.bf16.mxu0 0
        %2544 = vmatpush1.bf16.xpose.msra.mxu0 0
        %2545 = vmatprep.subr.bf16.mxu0 0
        %2546 = vmatpush1.bf16.xpose.msra.mxu0 0
        %2547 = vmatprep.subr.bf16.mxu0 0
        %2548 = vmatpush1.bf16.xpose.msra.mxu0 0
        %2549 = vmatprep.subr.bf16.mxu0 0
        %2550 = vmatpush1.bf16.xpose.msra.mxu0 0
        %2551 = vmatprep.subr.bf16.mxu0 0
        %2552 = vmatpush1.bf16.xpose.msra.mxu0 0
        %2553 = vmatprep.subr.bf16.mxu0 0
        %2554 = vmatpush1.bf16.xpose.msra.mxu0 0
        %2555 = vmatprep.subr.bf16.mxu0 0
        %2556 = vmatpush1.bf16.xpose.msra.mxu0 0
        %2557 = vmatprep.subr.bf16.mxu0 0
        %2558 = vmatpush1.bf16.xpose.msra.mxu0 %v2541
        %2559 = vmatprep.subr.bf16.mxu0 0
        %2560 = vmatpush2.bf16.xpose.msra.mxu0 0
        %2561 = vmatprep.subr.bf16.mxu0 0
        %2562 = vmatpush2.bf16.xpose.msra.mxu0 0
        %2563 = vmatprep.subr.bf16.mxu0 0
        %2564 = vmatpush2.bf16.xpose.msra.mxu0 0
        %2565 = vmatprep.subr.bf16.mxu0 0
        %2566 = vmatpush2.bf16.xpose.msra.mxu0 0
        %2567 = vmatprep.subr.bf16.mxu0 0
        %2568 = vmatpush2.bf16.xpose.msra.mxu0 0
        %2569 = vmatprep.subr.bf16.mxu0 0
        %2570 = vmatpush2.bf16.xpose.msra.mxu0 0
        %2571 = vmatprep.subr.bf16.mxu0 0
        %2572 = vmatpush2.bf16.xpose.msra.mxu0 0
        %2573 = vmatprep.subr.bf16.mxu0 0
        %2574 = vmatpush2.bf16.xpose.msra.mxu0 0
        %2575 = vmatprep.mubr.bf16.mxu0 0
        %2576 = vmatmul.mubr.bf16.gmra.mxu0 %v2538
        %v2577 = vpop.f32.mrf.mxu0
        %v2578 = vadd.f32 %v2528, %v2577
        %v2579 = vpop.f32.mrf.mxu0
        %v2580 = vpop.f32.mrf.mxu0
        %v2581 = vpop.f32.mrf.mxu0
        %2582 = vdwg.mxu0
        %v2583 = vadd.f32 %v2578, %v2251
        %v2584 = vsel %vm1117, %v2583, -inf
        %2585 = vmax.xlane.f32.xlu0 %v2584
        %v2586 = vpop.xlane.xlu0 %2585
        %v2587 = vsub.f32 %v2583, %v2586
        %v2588 = vmul.f32 %v2587, 1.442695
        %v2589 = vpow.pop %v2588
        %v2590 = vsel %vm1117, %v2589, 0.0
        %2591 = vadd.xlane.f32.xlu0 %v2590
        %v2592 = vpop.xlane.xlu0 %2591
        %v2593 = vrcp.pop %v2592
        %v2594 = vpack.c.bf16 %v2589, %v2589
        %2595 = vrot.lane.b32.xlu0 %v2264, 48
        %v2596 = vpop.permute.xlu0 %2595
        %v2598 = vsel %vm1117, %v2594, 0
        %v2601 = vsel %vm1136, %v2596, 0
        %2603 = vmatprep.subr.bf16.mxu0 0
        %2604 = vmatpush1.bf16.msra.mxu0 0
        %2605 = vmatprep.subr.bf16.mxu0 0
        %2606 = vmatpush1.bf16.msra.mxu0 0
        %2607 = vmatprep.subr.bf16.mxu0 0
        %2608 = vmatpush1.bf16.msra.mxu0 0
        %2609 = vmatprep.subr.bf16.mxu0 0
        %2610 = vmatpush1.bf16.msra.mxu0 0
        %2611 = vmatprep.subr.bf16.mxu0 0
        %2612 = vmatpush1.bf16.msra.mxu0 0
        %2613 = vmatprep.subr.bf16.mxu0 0
        %2614 = vmatpush1.bf16.msra.mxu0 0
        %2615 = vmatprep.subr.bf16.mxu0 0
        %2616 = vmatpush1.bf16.msra.mxu0 0
        %2617 = vmatprep.subr.bf16.mxu0 0
        %2618 = vmatpush1.bf16.msra.mxu0 %v2601
        %2619 = vmatprep.subr.bf16.mxu0 0
        %2620 = vmatpush2.bf16.msra.mxu0 0
        %2621 = vmatprep.subr.bf16.mxu0 0
        %2622 = vmatpush2.bf16.msra.mxu0 0
        %2623 = vmatprep.subr.bf16.mxu0 0
        %2624 = vmatpush2.bf16.msra.mxu0 0
        %2625 = vmatprep.subr.bf16.mxu0 0
        %2626 = vmatpush2.bf16.msra.mxu0 0
        %2627 = vmatprep.subr.bf16.mxu0 0
        %2628 = vmatpush2.bf16.msra.mxu0 0
        %2629 = vmatprep.subr.bf16.mxu0 0
        %2630 = vmatpush2.bf16.msra.mxu0 0
        %2631 = vmatprep.subr.bf16.mxu0 0
        %2632 = vmatpush2.bf16.msra.mxu0 0
        %2633 = vmatprep.subr.bf16.mxu0 0
        %2634 = vmatpush2.bf16.msra.mxu0 0
        %2635 = vmatprep.mubr.bf16.mxu0 0
        %2636 = vmatmul.mubr.bf16.gmra.mxu0 %v2598
        %v2637 = vpop.f32.mrf.mxu0
        %v2638 = vadd.f32 0.0, %v2637
        %v2639 = vpop.f32.mrf.mxu0
        %v2640 = vpop.f32.mrf.mxu0
        %v2641 = vpop.f32.mrf.mxu0
        %2642 = vdwg.mxu0
        %v2643 = vmul.f32 %v2638, %v2593
        %2645 = vrot.lane.b32.xlu0 %v2643, 16
        %v2646 = vpop.permute.xlu0 %2645
        %2648 = vst.msk [vmem:[#allocation3] sm:$0xff] %vm1514, %v2646
        %2649 = vrot.lane.b32.xlu0 %v2145, 100
        %v2650 = vpop.permute.xlu0 %2649
        %2651 = vrot.lane.b32.xlu0 %v2146, 68
        %v2652 = vpop.permute.xlu0 %2651
        %v2654 = vsel %vm1015, %v2650, 0
        %v2657 = vsel %vm1015, %v2652, 0
        %2659 = vmatprep.subr.bf16.mxu0 0
        %2660 = vmatpush1.bf16.xpose.msra.mxu0 0
        %2661 = vmatprep.subr.bf16.mxu0 0
        %2662 = vmatpush1.bf16.xpose.msra.mxu0 0
        %2663 = vmatprep.subr.bf16.mxu0 0
        %2664 = vmatpush1.bf16.xpose.msra.mxu0 0
        %2665 = vmatprep.subr.bf16.mxu0 0
        %2666 = vmatpush1.bf16.xpose.msra.mxu0 0
        %2667 = vmatprep.subr.bf16.mxu0 0
        %2668 = vmatpush1.bf16.xpose.msra.mxu0 0
        %2669 = vmatprep.subr.bf16.mxu0 0
        %2670 = vmatpush1.bf16.xpose.msra.mxu0 0
        %2671 = vmatprep.subr.bf16.mxu0 0
        %2672 = vmatpush1.bf16.xpose.msra.mxu0 0
        %2673 = vmatprep.subr.bf16.mxu0 0
        %2674 = vmatpush1.bf16.xpose.msra.mxu0 %v2657
        %2675 = vmatprep.subr.bf16.mxu0 0
        %2676 = vmatpush2.bf16.xpose.msra.mxu0 0
        %2677 = vmatprep.subr.bf16.mxu0 0
        %2678 = vmatpush2.bf16.xpose.msra.mxu0 0
        %2679 = vmatprep.subr.bf16.mxu0 0
        %2680 = vmatpush2.bf16.xpose.msra.mxu0 0
        %2681 = vmatprep.subr.bf16.mxu0 0
        %2682 = vmatpush2.bf16.xpose.msra.mxu0 0
        %2683 = vmatprep.subr.bf16.mxu0 0
        %2684 = vmatpush2.bf16.xpose.msra.mxu0 0
        %2685 = vmatprep.subr.bf16.mxu0 0
        %2686 = vmatpush2.bf16.xpose.msra.mxu0 0
        %2687 = vmatprep.subr.bf16.mxu0 0
        %2688 = vmatpush2.bf16.xpose.msra.mxu0 0
        %2689 = vmatprep.subr.bf16.mxu0 0
        %2690 = vmatpush2.bf16.xpose.msra.mxu0 0
        %2691 = vmatprep.mubr.bf16.mxu0 0
        %2692 = vmatmul.mubr.bf16.gmra.mxu0 %v2654
        %v2693 = vpop.f32.mrf.mxu0
        %v2694 = vadd.f32 0.0, %v2693
        %v2695 = vpop.f32.mrf.mxu0
        %v2696 = vpop.f32.mrf.mxu0
        %v2697 = vpop.f32.mrf.mxu0
        %2698 = vdwg.mxu0
        %2699 = vrot.lane.b32.xlu0 %v2145, 116
        %v2700 = vpop.permute.xlu0 %2699
        %2701 = vrot.lane.b32.xlu0 %v2146, 84
        %v2702 = vpop.permute.xlu0 %2701
        %v2704 = vsel %vm1015, %v2700, 0
        %v2707 = vsel %vm1015, %v2702, 0
        %2709 = vmatprep.subr.bf16.mxu0 0
        %2710 = vmatpush1.bf16.xpose.msra.mxu0 0
        %2711 = vmatprep.subr.bf16.mxu0 0
        %2712 = vmatpush1.bf16.xpose.msra.mxu0 0
        %2713 = vmatprep.subr.bf16.mxu0 0
        %2714 = vmatpush1.bf16.xpose.msra.mxu0 0
        %2715 = vmatprep.subr.bf16.mxu0 0
        %2716 = vmatpush1.bf16.xpose.msra.mxu0 0
        %2717 = vmatprep.subr.bf16.mxu0 0
        %2718 = vmatpush1.bf16.xpose.msra.mxu0 0
        %2719 = vmatprep.subr.bf16.mxu0 0
        %2720 = vmatpush1.bf16.xpose.msra.mxu0 0
        %2721 = vmatprep.subr.bf16.mxu0 0
        %2722 = vmatpush1.bf16.xpose.msra.mxu0 0
        %2723 = vmatprep.subr.bf16.mxu0 0
        %2724 = vmatpush1.bf16.xpose.msra.mxu0 %v2707
        %2725 = vmatprep.subr.bf16.mxu0 0
        %2726 = vmatpush2.bf16.xpose.msra.mxu0 0
        %2727 = vmatprep.subr.bf16.mxu0 0
        %2728 = vmatpush2.bf16.xpose.msra.mxu0 0
        %2729 = vmatprep.subr.bf16.mxu0 0
        %2730 = vmatpush2.bf16.xpose.msra.mxu0 0
        %2731 = vmatprep.subr.bf16.mxu0 0
        %2732 = vmatpush2.bf16.xpose.msra.mxu0 0
        %2733 = vmatprep.subr.bf16.mxu0 0
        %2734 = vmatpush2.bf16.xpose.msra.mxu0 0
        %2735 = vmatprep.subr.bf16.mxu0 0
        %2736 = vmatpush2.bf16.xpose.msra.mxu0 0
        %2737 = vmatprep.subr.bf16.mxu0 0
        %2738 = vmatpush2.bf16.xpose.msra.mxu0 0
        %2739 = vmatprep.subr.bf16.mxu0 0
        %2740 = vmatpush2.bf16.xpose.msra.mxu0 0
        %2741 = vmatprep.mubr.bf16.mxu0 0
        %2742 = vmatmul.mubr.bf16.gmra.mxu0 %v2704
        %v2743 = vpop.f32.mrf.mxu0
        %v2744 = vadd.f32 %v2694, %v2743
        %v2745 = vpop.f32.mrf.mxu0
        %v2746 = vpop.f32.mrf.mxu0
        %v2747 = vpop.f32.mrf.mxu0
        %2748 = vdwg.mxu0
        %v2749 = vadd.f32 %v2744, %v2251
        %v2750 = vsel %vm1117, %v2749, -inf
        %2751 = vmax.xlane.f32.xlu0 %v2750
        %v2752 = vpop.xlane.xlu0 %2751
        %v2753 = vsub.f32 %v2749, %v2752
        %v2754 = vmul.f32 %v2753, 1.442695
        %v2755 = vpow.pop %v2754
        %v2756 = vsel %vm1117, %v2755, 0.0
        %2757 = vadd.xlane.f32.xlu0 %v2756
        %v2758 = vpop.xlane.xlu0 %2757
        %v2759 = vrcp.pop %v2758
        %v2760 = vpack.c.bf16 %v2755, %v2755
        %2761 = vrot.lane.b32.xlu0 %v2264, 40
        %v2762 = vpop.permute.xlu0 %2761
        %v2764 = vsel %vm1117, %v2760, 0
        %v2767 = vsel %vm1136, %v2762, 0
        %2769 = vmatprep.subr.bf16.mxu0 0
        %2770 = vmatpush1.bf16.msra.mxu0 0
        %2771 = vmatprep.subr.bf16.mxu0 0
        %2772 = vmatpush1.bf16.msra.mxu0 0
        %2773 = vmatprep.subr.bf16.mxu0 0
        %2774 = vmatpush1.bf16.msra.mxu0 0
        %2775 = vmatprep.subr.bf16.mxu0 0
        %2776 = vmatpush1.bf16.msra.mxu0 0
        %2777 = vmatprep.subr.bf16.mxu0 0
        %2778 = vmatpush1.bf16.msra.mxu0 0
        %2779 = vmatprep.subr.bf16.mxu0 0
        %2780 = vmatpush1.bf16.msra.mxu0 0
        %2781 = vmatprep.subr.bf16.mxu0 0
        %2782 = vmatpush1.bf16.msra.mxu0 0
        %2783 = vmatprep.subr.bf16.mxu0 0
        %2784 = vmatpush1.bf16.msra.mxu0 %v2767
        %2785 = vmatprep.subr.bf16.mxu0 0
        %2786 = vmatpush2.bf16.msra.mxu0 0
        %2787 = vmatprep.subr.bf16.mxu0 0
        %2788 = vmatpush2.bf16.msra.mxu0 0
        %2789 = vmatprep.subr.bf16.mxu0 0
        %2790 = vmatpush2.bf16.msra.mxu0 0
        %2791 = vmatprep.subr.bf16.mxu0 0
        %2792 = vmatpush2.bf16.msra.mxu0 0
        %2793 = vmatprep.subr.bf16.mxu0 0
        %2794 = vmatpush2.bf16.msra.mxu0 0
        %2795 = vmatprep.subr.bf16.mxu0 0
        %2796 = vmatpush2.bf16.msra.mxu0 0
        %2797 = vmatprep.subr.bf16.mxu0 0
        %2798 = vmatpush2.bf16.msra.mxu0 0
        %2799 = vmatprep.subr.bf16.mxu0 0
        %2800 = vmatpush2.bf16.msra.mxu0 0
        %2801 = vmatprep.mubr.bf16.mxu0 0
        %2802 = vmatmul.mubr.bf16.gmra.mxu0 %v2764
        %v2803 = vpop.f32.mrf.mxu0
        %v2804 = vadd.f32 0.0, %v2803
        %v2805 = vpop.f32.mrf.mxu0
        %v2806 = vpop.f32.mrf.mxu0
        %v2807 = vpop.f32.mrf.mxu0
        %2808 = vdwg.mxu0
        %v2809 = vmul.f32 %v2804, %v2759
        %2811 = vrot.lane.b32.xlu0 %v2809, 24
        %v2812 = vpop.permute.xlu0 %2811
        %2814 = vst.msk [vmem:[#allocation3] sm:$0xff] %vm1681, %v2812
        %v2815 = vld [vmem:[#allocation3] sm:$0xff]
        %v2816 = vpack.c.bf16 %v2815, %v2815
        %v2818 = vsel %vm889, %v2816, 0
        %2820 = vmatprep.subr.bf16.mxu0 0
        %2821 = vmatpush1.bf16.msra.mxu0 0
        %2822 = vmatprep.subr.bf16.mxu0 0
        %2823 = vmatpush1.bf16.msra.mxu0 0
        %2824 = vmatprep.subr.bf16.mxu0 0
        %2825 = vmatpush1.bf16.msra.mxu0 0
        %2826 = vmatprep.subr.bf16.mxu0 0
        %2827 = vmatpush1.bf16.msra.mxu0 0
        %2828 = vmatprep.subr.bf16.mxu0 0
        %2829 = vmatpush1.bf16.msra.mxu0 0
        %2830 = vmatprep.subr.bf16.mxu0 0
        %2831 = vmatpush1.bf16.msra.mxu0 0
        %2832 = vmatprep.subr.bf16.mxu0 0
        %2833 = vmatpush1.bf16.msra.mxu0 %v1694
        %2834 = vmatprep.subr.bf16.mxu0 0
        %2835 = vmatpush1.bf16.msra.mxu0 %v1693
        %2836 = vmatprep.subr.bf16.mxu0 0
        %2837 = vmatpush2.bf16.msra.mxu0 0
        %2838 = vmatprep.subr.bf16.mxu0 0
        %2839 = vmatpush2.bf16.msra.mxu0 0
        %2840 = vmatprep.subr.bf16.mxu0 0
        %2841 = vmatpush2.bf16.msra.mxu0 0
        %2842 = vmatprep.subr.bf16.mxu0 0
        %2843 = vmatpush2.bf16.msra.mxu0 0
        %2844 = vmatprep.subr.bf16.mxu0 0
        %2845 = vmatpush2.bf16.msra.mxu0 0
        %2846 = vmatprep.subr.bf16.mxu0 0
        %2847 = vmatpush2.bf16.msra.mxu0 0
        %2848 = vmatprep.subr.bf16.mxu0 0
        %2849 = vmatpush2.bf16.msra.mxu0 0
        %2850 = vmatprep.subr.bf16.mxu0 0
        %2851 = vmatpush2.bf16.msra.mxu0 0
        %2852 = vmatprep.mubr.bf16.mxu0 0
        %2853 = vmatmul.mubr.bf16.gmra.mxu0 %v2818
        %v2854 = vpop.f32.mrf.mxu0
        %v2855 = vadd.f32 0.0, %v2854
        %v2856 = vpop.f32.mrf.mxu0
        %v2857 = vpop.f32.mrf.mxu0
        %v2858 = vpop.f32.mrf.mxu0
        %2859 = vdwg.mxu0
        %v2860 = vadd.f32 %v2061, %v2855
        %v2861 = vadd.f32 %v2860, %v1745
        %v2862 = vsel %vm889, %v2861, 0.0
        %2863 = vadd.xlane.f32.xlu0 %v2862
        %v2864 = vpop.xlane.xlu0 %2863
        %v2865 = vmul.f32 %v2864, %v893
        %v2866 = vsub.f32 %v2861, %v2865
        %v2867 = vmul.f32 %v2866, %v2866
        %v2868 = vsel %vm889, %v2867, 0.0
        %2869 = vadd.xlane.f32.xlu0 %v2868
        %v2870 = vpop.xlane.xlu0 %2869
        %v2871 = vmul.f32 %v2870, %v893
        %v2872 = vadd.f32 %v2871, 1e-05
        %v2873 = vrsqrt.pop %v2872
        %v2874 = vmul.f32 %v2866, %v2873
        %v2875 = vmul.f32 %v2874, %v1765
        %v2876 = vadd.f32 %v2875, %v1772
        %v2877 = vpack.c.bf16 %v2876, %v2876
        %v2879 = vsel %vm889, %v2877, 0
        %2881 = vmatprep.subr.bf16.mxu0 0
        %2882 = vmatpush1.bf16.msra.mxu0 0
        %2883 = vmatprep.subr.bf16.mxu0 0
        %2884 = vmatpush1.bf16.msra.mxu0 0
        %2885 = vmatprep.subr.bf16.mxu0 0
        %2886 = vmatpush1.bf16.msra.mxu0 0
        %2887 = vmatprep.subr.bf16.mxu0 0
        %2888 = vmatpush1.bf16.msra.mxu0 0
        %2889 = vmatprep.subr.bf16.mxu0 0
        %2890 = vmatpush1.bf16.msra.mxu0 0
        %2891 = vmatprep.subr.bf16.mxu0 0
        %2892 = vmatpush1.bf16.msra.mxu0 0
        %2893 = vmatprep.subr.bf16.mxu0 0
        %2894 = vmatpush1.bf16.msra.mxu0 %v1791
        %2895 = vmatprep.subr.bf16.mxu0 0
        %2896 = vmatpush1.bf16.msra.mxu0 %v1790
        %2897 = vmatprep.subr.bf16.mxu0 0
        %2898 = vmatpush2.bf16.msra.mxu0 0
        %2899 = vmatprep.subr.bf16.mxu0 0
        %2900 = vmatpush2.bf16.msra.mxu0 0
        %2901 = vmatprep.subr.bf16.mxu0 0
        %2902 = vmatpush2.bf16.msra.mxu0 0
        %2903 = vmatprep.subr.bf16.mxu0 0
        %2904 = vmatpush2.bf16.msra.mxu0 0
        %2905 = vmatprep.subr.bf16.mxu0 0
        %2906 = vmatpush2.bf16.msra.mxu0 0
        %2907 = vmatprep.subr.bf16.mxu0 0
        %2908 = vmatpush2.bf16.msra.mxu0 0
        %2909 = vmatprep.subr.bf16.mxu0 0
        %2910 = vmatpush2.bf16.msra.mxu0 0
        %2911 = vmatprep.subr.bf16.mxu0 0
        %2912 = vmatpush2.bf16.msra.mxu0 0
        %2913 = vmatprep.mubr.bf16.mxu0 0
        %2914 = vmatmul.mubr.bf16.gmra.mxu0 %v2879
        %v2915 = vpop.f32.mrf.mxu0
        %v2916 = vadd.f32 %v1780, %v2915
        %v2917 = vpop.f32.mrf.mxu0
        %v2918 = vpop.f32.mrf.mxu0
        %v2919 = vpop.f32.mrf.mxu0
        %2920 = vdwg.mxu0
        %v2921 = vmul.f32 %v2916, %v2916
        %v2922 = vmul.f32 %v2916, %v2921
        %v2923 = vmul.f32 %v2922, 0.044715
        %v2924 = vadd.f32 %v2916, %v2923
        %v2925 = vmul.f32 %v2924, 0.7978846
        %v2926 = vtanh.pop %v2925
        %v2927 = vadd.f32 %v2926, 1.0
        %v2928 = vmul.f32 %v2927, 0.5
        %v2929 = vmul.f32 %v2916, %v2928
        %v2930 = vpack.c.bf16 %v2929, %v2929
        %2931 = vmatprep.subr.bf16.mxu0 0
        %2932 = vmatpush1.bf16.msra.mxu0 %v1886
        %2933 = vmatprep.subr.bf16.mxu0 0
        %2934 = vmatpush1.bf16.msra.mxu0 %v1885
        %2935 = vmatprep.subr.bf16.mxu0 0
        %2936 = vmatpush1.bf16.msra.mxu0 %v1884
        %2937 = vmatprep.subr.bf16.mxu0 0
        %2938 = vmatpush1.bf16.msra.mxu0 %v1883
        %2939 = vmatprep.subr.bf16.mxu0 0
        %2940 = vmatpush1.bf16.msra.mxu0 %v1882
        %2941 = vmatprep.subr.bf16.mxu0 0
        %2942 = vmatpush1.bf16.msra.mxu0 %v1881
        %2943 = vmatprep.subr.bf16.mxu0 0
        %2944 = vmatpush1.bf16.msra.mxu0 %v1880
        %2945 = vmatprep.subr.bf16.mxu0 0
        %2946 = vmatpush1.bf16.msra.mxu0 %v1879
        %2947 = vmatprep.subr.bf16.mxu0 0
        %2948 = vmatpush2.bf16.msra.mxu0 0
        %2949 = vmatprep.subr.bf16.mxu0 0
        %2950 = vmatpush2.bf16.msra.mxu0 0
        %2951 = vmatprep.subr.bf16.mxu0 0
        %2952 = vmatpush2.bf16.msra.mxu0 0
        %2953 = vmatprep.subr.bf16.mxu0 0
        %2954 = vmatpush2.bf16.msra.mxu0 0
        %2955 = vmatprep.subr.bf16.mxu0 0
        %2956 = vmatpush2.bf16.msra.mxu0 0
        %2957 = vmatprep.subr.bf16.mxu0 0
        %2958 = vmatpush2.bf16.msra.mxu0 0
        %2959 = vmatprep.subr.bf16.mxu0 0
        %2960 = vmatpush2.bf16.msra.mxu0 0
        %2961 = vmatprep.subr.bf16.mxu0 0
        %2962 = vmatpush2.bf16.msra.mxu0 0
        %2963 = vmatprep.mubr.bf16.mxu0 0
        %2964 = vmatmul.mubr.bf16.gmra.mxu0 %v2930
        %v2965 = vpop.f32.mrf.mxu0
        %v2966 = vadd.f32 0.0, %v2965
        %v2967 = vpop.f32.mrf.mxu0
        %v2968 = vpop.f32.mrf.mxu0
        %v2969 = vpop.f32.mrf.mxu0
        %2970 = vdwg.mxu0
        %v2971 = vadd.f32 %v2861, %v2966
        %v2972 = vadd.f32 %v2971, %v1940
        %2973 = vst.msk [vmem:[%s2060] sm:$0xff] %vm889, %v2972
        // Predicated region
        $region105: #{tpu_custom_call.1} parent=95 // pred_check
          %p2974 = pneg %p1944
        $region106: #{tpu_custom_call.1} parent=95 // pred_check_branch
          %2976 = sbr.rel (%p2974) target = $region108
        $region107: #{tpu_custom_call.1} parent=95 // pred_region
          %v2977 = vld [vmem:[%s5] sm:$0x1]
          %v2978 = vld [vmem:[%s6] sm:$0x1]
          %v2979 = vsel %vm889, %v2972, 0.0
          %2980 = vadd.xlane.f32.xlu0 %v2979
          %v2981 = vpop.xlane.xlu0 %2980
          %v2982 = vmul.f32 %v2981, %v893
          %v2983 = vsub.f32 %v2972, %v2982
          %v2984 = vmul.f32 %v2983, %v2983
          %v2985 = vsel %vm889, %v2984, 0.0
          %2986 = vadd.xlane.f32.xlu0 %v2985
          %v2987 = vpop.xlane.xlu0 %2986
          %v2988 = vmul.f32 %v2987, %v893
          %v2989 = vadd.f32 %v2988, 1e-05
          %v2990 = vrsqrt.pop %v2989
          %v2991 = vmul.f32 %v2983, %v2990
          %v2993 = vlaneseq
          %v2994 = vshrl.u32 %v2993, 7
          %v2995 = vsub.s32 0, %v2994
          %v2996 = vrot.slane %v2977, %v2995
          %v2998 = vmul.f32 %v2991, %v2996
          %v3000 = vlaneseq
          %v3001 = vshrl.u32 %v3000, 7
          %v3002 = vsub.s32 0, %v3001
          %v3003 = vrot.slane %v2978, %v3002
          %v3005 = vadd.f32 %v2998, %v3003
          %s3006 = scalar_lea.vmem %s792, 1
          %v3007 = vld [vmem:[%s3006] sm:$0x1]
          %v3009 = vsel %vm1117, %v3007, 0
          %3011 = vmatprep.subr.mxu0 0.0
          %3012 = vmatpush1.msra.mxu0 0.0
          %3013 = vmatprep.subr.mxu0 0.0
          %3014 = vmatpush1.msra.mxu0 0.0
          %3015 = vmatprep.subr.mxu0 0.0
          %3016 = vmatpush1.msra.mxu0 0.0
          %3017 = vmatprep.subr.mxu0 0.0
          %3018 = vmatpush1.msra.mxu0 0.0
          %3019 = vmatprep.subr.mxu0 0.0
          %3020 = vmatpush1.msra.mxu0 0.0
          %3021 = vmatprep.subr.mxu0 0.0
          %3022 = vmatpush1.msra.mxu0 0.0
          %3023 = vmatprep.subr.mxu0 0.0
          %3024 = vmatpush1.msra.mxu0 0.0
          %3025 = vmatprep.subr.mxu0 0.0
          %3026 = vmatpush1.msra.mxu0 0.0
          %3027 = vmatprep.subr.mxu0 0.0
          %3028 = vmatpush1.msra.mxu0 0.0
          %3029 = vmatprep.subr.mxu0 0.0
          %3030 = vmatpush1.msra.mxu0 0.0
          %3031 = vmatprep.subr.mxu0 0.0
          %3032 = vmatpush1.msra.mxu0 0.0
          %3033 = vmatprep.subr.mxu0 0.0
          %3034 = vmatpush1.msra.mxu0 0.0
          %3035 = vmatprep.subr.mxu0 0.0
          %3036 = vmatpush1.msra.mxu0 0.0
          %3037 = vmatprep.subr.mxu0 0.0
          %3038 = vmatpush1.msra.mxu0 0.0
          %3039 = vmatprep.subr.mxu0 0.0
          %3040 = vmatpush1.msra.mxu0 0.0
          %3041 = vmatprep.subr.mxu0 0.0
          %3042 = vmatpush1.msra.mxu0 %v3005
          %3043 = vmatprep.subr.mxu0 0.0
          %3044 = vmatpush2.msra.mxu0 0.0
          %3045 = vmatprep.subr.mxu0 0.0
          %3046 = vmatpush2.msra.mxu0 0.0
          %3047 = vmatprep.subr.mxu0 0.0
          %3048 = vmatpush2.msra.mxu0 0.0
          %3049 = vmatprep.subr.mxu0 0.0
          %3050 = vmatpush2.msra.mxu0 0.0
          %3051 = vmatprep.subr.mxu0 0.0
          %3052 = vmatpush2.msra.mxu0 0.0
          %3053 = vmatprep.subr.mxu0 0.0
          %3054 = vmatpush2.msra.mxu0 0.0
          %3055 = vmatprep.subr.mxu0 0.0
          %3056 = vmatpush2.msra.mxu0 0.0
          %3057 = vmatprep.subr.mxu0 0.0
          %3058 = vmatpush2.msra.mxu0 0.0
          %3059 = vmatprep.subr.mxu0 0.0
          %3060 = vmatpush2.msra.mxu0 0.0
          %3061 = vmatprep.subr.mxu0 0.0
          %3062 = vmatpush2.msra.mxu0 0.0
          %3063 = vmatprep.subr.mxu0 0.0
          %3064 = vmatpush2.msra.mxu0 0.0
          %3065 = vmatprep.subr.mxu0 0.0
          %3066 = vmatpush2.msra.mxu0 0.0
          %3067 = vmatprep.subr.mxu0 0.0
          %3068 = vmatpush2.msra.mxu0 0.0
          %3069 = vmatprep.subr.mxu0 0.0
          %3070 = vmatpush2.msra.mxu0 0.0
          %3071 = vmatprep.subr.mxu0 0.0
          %3072 = vmatpush2.msra.mxu0 0.0
          %3073 = vmatprep.subr.mxu0 0.0
          %3074 = vmatpush2.msra.mxu0 0.0
          %3075 = vmatprep.mubr.f32.mxu0 0.0
          %3076 = vmatmul.mubr.f32.gmra.mxu0 %v3009
          %v3077 = vpop.f32.mrf.mxu0
          %v3078 = vadd.f32 0.0, %v3077
          %v3079 = vpop.f32.mrf.mxu0
          %3080 = vdwg.mxu0
          %vm3081 = vcmask 57344
          %v3082 = vsel %vm3081, %v3007, 0.0
          %3083 = vadd.xlane.f32.xlu0 %v3082
          %v3084 = vpop.xlane.xlu0 %3083
          %v3085 = vmax.f32 %v3084, 1.0
          %v3086 = vrcp.pop %v3085
          %v3087 = vmul.f32 %v3078, %v3086
          %s3088 = scalar_lea.vmem [#allocation4], 1
          %vm3089 = vcmask 253952
          %3090 = vst.msk [vmem:[%s3088] sm:$0x1] %vm3089, %v3087
        $region108: #{tpu_custom_call.1} parent=95 // pred_fallthru
          _
        // Predicated region
        $region109: #{tpu_custom_call.1} parent=95 // pred_check
          %p3091 = pneg %p535
        $region110: #{tpu_custom_call.1} parent=95 // pred_check_branch
          %3093 = sbr.rel (%p3091) target = $region112
        $region111: #{tpu_custom_call.1} parent=95 // pred_region
          %s3094 = smul.u32 2, %s35
          %s3096 = ssub.s32 32, 32
          %3097 = vsyncadd [#allocation5], %s3096
          %s3098 = smul.addr %s3094, 16
          %s3099 = scalar_lea.hbm %s19, %s3098
          %s3100 = sshll.u32 [#allocation4], 4
          %s3101 = int_to_ptr.vmem [resolvable:$true] %s3100
          %3106 = dma.vmem_to_hbm [thread:$0]  %s3101, 32, %s3099, [#allocation5], 16, 16, 1
        $region112: #{tpu_custom_call.1} parent=95 // pred_fallthru
          _
        // Predicated region
        $region113: #{tpu_custom_call.1} parent=95 // pred_check
          %p3107 = pneg %p535
        $region114: #{tpu_custom_call.1} parent=95 // pred_check_branch
          %3109 = sbr.rel (%p3107) target = $region116
        $region115: #{tpu_custom_call.1} parent=95 // pred_region
          %3110 = dma.done [#allocation5], 32
        $region116: #{tpu_custom_call.1} parent=95 // pred_fallthru
          _
      $region96: #{tpu_custom_call.1} parent=5 // pred_fallthru
        _
      %p3111 = scmp.le.s32.totalorder 2, %s26
      // Predicated region
      $region117: #{tpu_custom_call.1} parent=5 // pred_check
        %p3112 = pneg %p3111
      $region118: #{tpu_custom_call.1} parent=5 // pred_check_branch
        %3114 = sbr.rel (%p3112) target = $region120
      $region119: #{tpu_custom_call.1} parent=5 // pred_region
        %s3115 = ssub.s32 %s26, 2
      $region120: #{tpu_custom_call.1} parent=5 // pred_fallthru
        _
    $region6: #{tpu_custom_call.1} parent=1 // loop_footer
      %s30 = sadd.s32 1, %s26
    $region7: #{tpu_custom_call.1} parent=1 // loop_footer_branch
      %25 = sbr.rel target = $region3
    $region8: #{tpu_custom_call.1} parent=1 // loop_exit
      _
    %3116 = vsyncpa [#allocation5], 1
    %s3117 = scalar_lea.sflag [#allocation5], 1
    %3118 = vsyncpa %s3117, 1

</llo_original>
